<compile_context>
chip_gen: v7x
topology: tpu7x:2x2x1
jax: 0.10.0
libtpu: 0.0.40
codegen_flags: <defaults>
</compile_context>

<pallas_src>
import functools

import jax
import jax.numpy as jnp
from jax import lax
from jax.experimental import pallas as pl
from jax.experimental.pallas import tpu as pltpu


# ----------------------------- Pallas kernel -------------------------------

def _group_kernel(x_ref, m_ref,
                  c1w_ref, c1b_ref, c2w_ref, c2b_ref,
                  caw1_ref, cab1_ref, caw2_ref, cab2_ref,
                  paw1_ref, pab1_ref, paw2_ref, pab2_ref,
                  gcw_ref, gcb_ref,
                  o_ref,
                  *, ksize, width):
    bt, C, HW = x_ref.shape
    K, P, W = ksize, ksize // 2, width
    nb = c1w_ref.shape[0]

    # Static tap offsets in the flattened row-major spatial index.
    offsets = [(kh - P) * W + (kw - P) for kh in range(K) for kw in range(K)]

    def lane_roll(v, off):
        # t[:, j] = v[:, (j + off) % HW].  Static rotate along lanes; Mosaic
        # lowers the unaligned slice + 2-piece concat to XLU lane shifts
        # (the XLU slot is otherwise idle here).
        o = off % HW
        if o == 0:
            return v
        return jnp.concatenate([v[:, o:], v[:, :o]], axis=1)

    def conv_same(v, w2d, b):
        # KxK "same" conv as ONE deep matmul, channels-first orientation:
        #   out(Cout, HW) = W(Cout, K*K*C) @ patches(K*K*C, HW)
        # N (lanes) = HW = 256, contraction = K*K*C = 144.  Taps are stacked
        # along sublanes (aligned -> free); wrapped / out-of-image pixels are
        # zeroed with precomputed border masks.
        taps = []
        for t, off in enumerate(offsets):
            tap = lane_roll(v, off)
            if off != 0:
                tap = tap * m_ref[t]                  # (1, HW) border mask, f32
            taps.append(tap.astype(jnp.bfloat16))     # bf16 MXU operand
        patches = jnp.concatenate(taps, axis=0)       # (K*K*C, HW) bf16
        out = jnp.dot(w2d, patches, preferred_element_type=jnp.float32)
        return out + b                                 # b: (Cout, 1) f32

    # TODO(synk): for batch_tile > 1, fold the per-image loop into the matmul N
    # axis (lane-aligned concat of per-image patch slabs) instead of looping.
    for bi in range(bt):
        x2d = x_ref[bi]                                # (C, HW) f32, lane-dense
        cur = x2d

        # nb is small (2-3) -> static unroll.
        # TODO(synk): for production block counts switch to lax.fori_loop over
        # the stacked weights to bound vreg live ranges and compile time.
        for blk in range(nb):
            # ---- Block ----
            res = jnp.maximum(conv_same(cur, c1w_ref[blk], c1b_ref[blk]), 0.0)
            res = res + cur                            # identity shortcut
            res = conv_same(res, c2w_ref[blk], c2b_ref[blk])

            # CALayer: global avg pool -> 1x1 -> ReLU -> 1x1 -> sigmoid -> scale.
            # TODO(synk): on v5e move these two tiny N=1 dots to the VPU
            # (broadcast-mul + reduce) to skip the MXU FIFO round trip.
            mean = jnp.mean(res, axis=1, keepdims=True)                  # (C, 1)
            y = jnp.maximum(
                jnp.dot(caw1_ref[blk], mean,
                        preferred_element_type=jnp.float32) + cab1_ref[blk], 0.0)
            y = jax.nn.sigmoid(
                jnp.dot(caw2_ref[blk], y,
                        preferred_element_type=jnp.float32) + cab2_ref[blk])
            res = res * y                              # per-channel scale (C,1)

            # PALayer (seg is None -> attention from res itself).
            z = jnp.maximum(
                jnp.dot(paw1_ref[blk], res,
                        preferred_element_type=jnp.float32) + pab1_ref[blk], 0.0)
            # Second projection has output width 1 -> keep it off the MXU:
            # VPU broadcast-multiply + sublane reduce over Cr.
            z = jax.nn.sigmoid(
                jnp.sum(z * paw2_ref[blk], axis=0, keepdims=True) + pab2_ref[blk])
            res = res * z                              # per-pixel scale (1,HW)

            res = res + cur                            # identity shortcut
            cur = res

        # ---- Group tail: conv + residual with the Group input ----
        out = conv_same(cur, gcw_ref[...], gcb_ref[...]) + x2d
        o_ref[bi] = out.astype(o_ref.dtype)


# ------------------------------- wrapper ------------------------------------

def _tap_masks(H, W, K):
    # (K*K, 1, H*W) f32 masks: 1 where the shifted pixel is inside the image.
    P = K // 2
    hh, ww = jnp.meshgrid(jnp.arange(H), jnp.arange(W), indexing='ij')
    masks = []
    for kh in range(K):
        for kw in range(K):
            dh, dw = kh - P, kw - P
            ok = ((hh + dh >= 0) & (hh + dh < H) &
                  (ww + dw >= 0) & (ww + dw < W))
            masks.append(ok.reshape(1, H * W).astype(jnp.float32))
    return jnp.stack(masks, axis=0)


def group_forward(x, kernel_params, *, ksize, height, width, batch_tile=1):
    """x: (B, C, H*W) float32 — a free contiguous reshape of the NCHW tensor."""
    B, C, HW = x.shape
    assert HW == height * width and B % batch_tile == 0

    masks = _tap_masks(height, width, ksize)

    def full_spec(a):
        # Constant index_map: the block never changes across the grid, so its
        # DMA is not re-issued per batch step.
        # TODO(synk): add pipeline_mode=pl.Buffered(1) to drop the dead second
        # buffer of these constant blocks at production channel counts (v7x).
        return pl.BlockSpec(a.shape, lambda b, nd=a.ndim: (0,) * nd)

    in_specs = [pl.BlockSpec((batch_tile, C, HW), lambda b: (b, 0, 0)),
                full_spec(masks)]
    in_specs += [full_spec(w) for w in kernel_params]

    return pl.pallas_call(
        functools.partial(_group_kernel, ksize=ksize, width=width),
        out_shape=jax.ShapeDtypeStruct((B, C, HW), jnp.float32),
        grid=(B // batch_tile,),
        in_specs=in_specs,
        out_specs=pl.BlockSpec((batch_tile, C, HW), lambda b: (b, 0, 0)),
        compiler_params=pltpu.CompilerParams(
            dimension_semantics=("parallel",)),
        # TODO(synk): at production H/W/C set vmem_limit_bytes explicitly and
        # re-derive batch_tile / spatial tiling against v7x's 64 MiB VMEM.
    )(x, masks, *kernel_params)


# ---------------------- deterministic parameter setup -----------------------

def init_params(key, C, K, NB):
    Cr = max(C // 8, 1)

    def nxt(shape, scale=0.1):
        nonlocal key
        key, sub = jax.random.split(key)
        return jax.random.normal(sub, shape, jnp.float32) * scale

    blocks = []
    for _ in range(NB):
        blocks.append(dict(
            c1w=nxt((C, C, K, K)), c1b=nxt((C,)),
            c2w=nxt((C, C, K, K)), c2b=nxt((C,)),
            caw1=nxt((Cr, C, 1, 1)), cab1=nxt((Cr,)),
            caw2=nxt((C, Cr, 1, 1)), cab2=nxt((C,)),
            paw1=nxt((Cr, C, 1, 1)), pab1=nxt((Cr,)),
            paw2=nxt((1, Cr, 1, 1)), pab2=nxt((1,)),
        ))
    gcw = nxt((C, C, K, K))
    gcb = nxt((C,))
    return dict(blocks=blocks, gcw=gcw, gcb=gcb)


def to_kernel_params(p, K):
    # PyTorch conv weight (Cout, Cin, Kh, Kw) -> kernel layouts.
    def kxk(w):
        # -> (Cout, K*K*Cin) bf16, columns ordered (kh, kw, cin) to match the
        # sublane-stacked im2col patches; bf16 for native MXU throughput.
        cout = w.shape[0]
        return jnp.transpose(w, (0, 2, 3, 1)).reshape(cout, -1).astype(jnp.bfloat16)

    def one(w):       # 1x1 conv -> (Cout, Cin) f32 (left operand of the dot)
        return w[:, :, 0, 0]

    def one_col(w):   # 1x1 conv with Cout == 1 -> (Cin, 1) column (VPU reduce)
        return w[:, :, 0, 0].T

    def col(b):       # bias -> (Cout, 1) column so it broadcasts over lanes
        return b.reshape(-1, 1)

    bl = p['blocks']
    stk = lambda f, name: jnp.stack([f(b[name]) for b in bl])
    return [
        stk(kxk, 'c1w'), stk(col, 'c1b'),
        stk(kxk, 'c2w'), stk(col, 'c2b'),
        stk(one, 'caw1'), stk(col, 'cab1'),
        stk(one, 'caw2'), stk(col, 'cab2'),
        stk(one, 'paw1'), stk(col, 'pab1'),
        stk(one_col, 'paw2'), stk(col, 'pab2'),
        kxk(p['gcw']), col(p['gcb']),
    ]


# -------------------------- pure-JAX reference ------------------------------

def _conv_ref(x, w, b, pad):
    y = lax.conv_general_dilated(x, w, (1, 1), [(pad, pad), (pad, pad)],
                                 dimension_numbers=('NCHW', 'OIHW', 'NCHW'))
    return y + b[None, :, None, None]


def ref_group(x, p, K):
    pad = K // 2
    cur = x
    for b in p['blocks']:
        res = jax.nn.relu(_conv_ref(cur, b['c1w'], b['c1b'], pad))
        res = res + cur
        res = _conv_ref(res, b['c2w'], b['c2b'], pad)
        y = jnp.mean(res, axis=(2, 3), keepdims=True)
        y = jax.nn.relu(_conv_ref(y, b['caw1'], b['cab1'], 0))
        y = jax.nn.sigmoid(_conv_ref(y, b['caw2'], b['cab2'], 0))
        res = res * y
        z = jax.nn.relu(_conv_ref(res, b['paw1'], b['pab1'], 0))
        z = jax.nn.sigmoid(_conv_ref(z, b['paw2'], b['pab2'], 0))
        res = res * z
        res = res + cur
        cur = res
    out = _conv_ref(cur, p['gcw'], p['gcb'], pad)
    return out + x


# --------------------------------- main --------------------------------------

if __name__ == "__main__":
    B, C, H, W = 2, 16, 16, 16        # C divisible by 8 (channel // 8 reduction)
    K, BLOCKS = 3, 2

    key = jax.random.PRNGKey(0)
    key, xk = jax.random.split(key)
    x_nchw = jax.random.normal(xk, (B, C, H, W), jnp.float32)   # PyTorch NCHW

    params = init_params(key, C, K, BLOCKS)
    kernel_params = to_kernel_params(params, K)

    # Lane-dense kernel I/O: (B, C, H*W) is a free contiguous reshape of NCHW.
    x_flat = x_nchw.reshape(B, C, H * W)
    out = group_forward(x_flat, kernel_params, ksize=K, height=H, width=W,
                        batch_tile=1)   # grid = B = 2 -> keeps both v7x cores busy
    out = jax.block_until_ready(out)
    out_nchw = out.reshape(B, C, H, W)

    ref = ref_group(x_nchw, params, K)
    assert out_nchw.shape == (B, C, H, W)

    # bf16 MXU operands (f32 accumulation) -> looser pointwise tolerance than the
    # old all-f32 version; the aggregate relative error stays small.
    rel_l2 = jnp.linalg.norm(out_nchw - ref) / jnp.linalg.norm(ref)
    assert float(rel_l2) < 2e-2, float(rel_l2)
    assert jnp.allclose(out_nchw, ref, rtol=1e-1, atol=1e-1), float(
        jnp.max(jnp.abs(out_nchw - ref)))

    print("KERNEL_OK")
</pallas_src>

<mosaic_0001>
module attributes {stable_mosaic.version = 11 : i64} {
  func.func @_group_kernel(%arg0: i32, %arg1: memref<1x16x256xf32, #tpu.memory_space<vmem>>, %arg2: memref<9x1x256xf32, #tpu.memory_space<vmem>>, %arg3: memref<2x16x144xbf16, #tpu.memory_space<vmem>>, %arg4: memref<2x16x1xf32, #tpu.memory_space<vmem>>, %arg5: memref<2x16x144xbf16, #tpu.memory_space<vmem>>, %arg6: memref<2x16x1xf32, #tpu.memory_space<vmem>>, %arg7: memref<2x2x16xf32, #tpu.memory_space<vmem>>, %arg8: memref<2x2x1xf32, #tpu.memory_space<vmem>>, %arg9: memref<2x16x2xf32, #tpu.memory_space<vmem>>, %arg10: memref<2x16x1xf32, #tpu.memory_space<vmem>>, %arg11: memref<2x2x16xf32, #tpu.memory_space<vmem>>, %arg12: memref<2x2x1xf32, #tpu.memory_space<vmem>>, %arg13: memref<2x2x1xf32, #tpu.memory_space<vmem>>, %arg14: memref<2x1x1xf32, #tpu.memory_space<vmem>>, %arg15: memref<16x144xbf16, #tpu.memory_space<vmem>>, %arg16: memref<16x1xf32, #tpu.memory_space<vmem>>, %arg17: memref<1x16x256xf32, #tpu.memory_space<vmem>>) attributes {dimension_semantics = [#tpu.dimension_semantics<parallel>], iteration_bounds = array<i64: 2>, scalar_prefetch = 0 : i64, scratch_operands = 0 : i64, tpu.core_type = #tpu.core_type<tc>, window_params = [{transform_indices = @transform_0, window_bounds = array<i64: 1, 16, 256>}, {pipeline_mode = #tpu.pipeline_mode<synchronous>, transform_indices = @transform_1, window_bounds = array<i64: 9, 1, 256>}, {pipeline_mode = #tpu.pipeline_mode<synchronous>, transform_indices = @transform_2, window_bounds = array<i64: 2, 16, 144>}, {pipeline_mode = #tpu.pipeline_mode<synchronous>, transform_indices = @transform_3, window_bounds = array<i64: 2, 16, 1>}, {pipeline_mode = #tpu.pipeline_mode<synchronous>, transform_indices = @transform_4, window_bounds = array<i64: 2, 16, 144>}, {pipeline_mode = #tpu.pipeline_mode<synchronous>, transform_indices = @transform_5, window_bounds = array<i64: 2, 16, 1>}, {pipeline_mode = #tpu.pipeline_mode<synchronous>, transform_indices = @transform_6, window_bounds = array<i64: 2, 2, 16>}, {pipeline_mode = #tpu.pipeline_mode<synchronous>, transform_indices = @transform_7, window_bounds = array<i64: 2, 2, 1>}, {pipeline_mode = #tpu.pipeline_mode<synchronous>, transform_indices = @transform_8, window_bounds = array<i64: 2, 16, 2>}, {pipeline_mode = #tpu.pipeline_mode<synchronous>, transform_indices = @transform_9, window_bounds = array<i64: 2, 16, 1>}, {pipeline_mode = #tpu.pipeline_mode<synchronous>, transform_indices = @transform_10, window_bounds = array<i64: 2, 2, 16>}, {pipeline_mode = #tpu.pipeline_mode<synchronous>, transform_indices = @transform_11, window_bounds = array<i64: 2, 2, 1>}, {pipeline_mode = #tpu.pipeline_mode<synchronous>, transform_indices = @transform_12, window_bounds = array<i64: 2, 2, 1>}, {pipeline_mode = #tpu.pipeline_mode<synchronous>, transform_indices = @transform_13, window_bounds = array<i64: 2, 1, 1>}, {pipeline_mode = #tpu.pipeline_mode<synchronous>, transform_indices = @transform_14, window_bounds = array<i64: 16, 144>}, {pipeline_mode = #tpu.pipeline_mode<synchronous>, transform_indices = @transform_15, window_bounds = array<i64: 16, 1>}, {transform_indices = @transform_16, window_bounds = array<i64: 1, 16, 256>}]} {
    %c0 = arith.constant 0 : index
    %c0_0 = arith.constant 0 : index
    %c0_1 = arith.constant 0 : index
    %0 = vector.load %arg1[%c0, %c0_0, %c0_1] : memref<1x16x256xf32, #tpu.memory_space<vmem>>, vector<1x16x256xf32>
    %1 = vector.shape_cast %0 : vector<1x16x256xf32> to vector<16x256xf32>
    %c0_2 = arith.constant 0 : index
    %c0_3 = arith.constant 0 : index
    %c0_4 = arith.constant 0 : index
    %2 = vector.load %arg3[%c0_2, %c0_3, %c0_4] : memref<2x16x144xbf16, #tpu.memory_space<vmem>>, vector<1x16x144xbf16>
    %3 = vector.shape_cast %2 : vector<1x16x144xbf16> to vector<16x144xbf16>
    %c0_5 = arith.constant 0 : index
    %c0_6 = arith.constant 0 : index
    %c0_7 = arith.constant 0 : index
    %4 = vector.load %arg4[%c0_5, %c0_6, %c0_7] : memref<2x16x1xf32, #tpu.memory_space<vmem>>, vector<1x16x1xf32>
    %5 = vector.shape_cast %4 : vector<1x16x1xf32> to vector<16x1xf32>
    %6 = vector.extract_strided_slice %1 {offsets = [0, 239], sizes = [16, 17], strides = [1, 1]} : vector<16x256xf32> to vector<16x17xf32>
    %7 = vector.extract_strided_slice %1 {offsets = [0, 0], sizes = [16, 239], strides = [1, 1]} : vector<16x256xf32> to vector<16x239xf32>
    %8 = tpu.concatenate %6, %7 in 1 : vector<16x17xf32>, vector<16x239xf32> -> vector<16x256xf32>
    %c0_8 = arith.constant 0 : index
    %c0_9 = arith.constant 0 : index
    %c0_10 = arith.constant 0 : index
    %9 = vector.load %arg2[%c0_8, %c0_9, %c0_10] : memref<9x1x256xf32, #tpu.memory_space<vmem>>, vector<1x1x256xf32>
    %10 = vector.shape_cast %9 : vector<1x1x256xf32> to vector<1x256xf32>
    %11 = vector.broadcast %10 : vector<1x256xf32> to vector<16x256xf32>
    %12 = arith.mulf %8, %11 : vector<16x256xf32>
    %13 = arith.truncf %12 : vector<16x256xf32> to vector<16x256xbf16>
    %14 = vector.extract_strided_slice %1 {offsets = [0, 240], sizes = [16, 16], strides = [1, 1]} : vector<16x256xf32> to vector<16x16xf32>
    %15 = vector.extract_strided_slice %1 {offsets = [0, 0], sizes = [16, 240], strides = [1, 1]} : vector<16x256xf32> to vector<16x240xf32>
    %16 = tpu.concatenate %14, %15 in 1 : vector<16x16xf32>, vector<16x240xf32> -> vector<16x256xf32>
    %c1 = arith.constant 1 : index
    %c0_11 = arith.constant 0 : index
    %c0_12 = arith.constant 0 : index
    %17 = vector.load %arg2[%c1, %c0_11, %c0_12] : memref<9x1x256xf32, #tpu.memory_space<vmem>>, vector<1x1x256xf32>
    %18 = vector.shape_cast %17 : vector<1x1x256xf32> to vector<1x256xf32>
    %19 = vector.broadcast %18 : vector<1x256xf32> to vector<16x256xf32>
    %20 = arith.mulf %16, %19 : vector<16x256xf32>
    %21 = arith.truncf %20 : vector<16x256xf32> to vector<16x256xbf16>
    %22 = vector.extract_strided_slice %1 {offsets = [0, 241], sizes = [16, 15], strides = [1, 1]} : vector<16x256xf32> to vector<16x15xf32>
    %23 = vector.extract_strided_slice %1 {offsets = [0, 0], sizes = [16, 241], strides = [1, 1]} : vector<16x256xf32> to vector<16x241xf32>
    %24 = tpu.concatenate %22, %23 in 1 : vector<16x15xf32>, vector<16x241xf32> -> vector<16x256xf32>
    %c2 = arith.constant 2 : index
    %c0_13 = arith.constant 0 : index
    %c0_14 = arith.constant 0 : index
    %25 = vector.load %arg2[%c2, %c0_13, %c0_14] : memref<9x1x256xf32, #tpu.memory_space<vmem>>, vector<1x1x256xf32>
    %26 = vector.shape_cast %25 : vector<1x1x256xf32> to vector<1x256xf32>
    %27 = vector.broadcast %26 : vector<1x256xf32> to vector<16x256xf32>
    %28 = arith.mulf %24, %27 : vector<16x256xf32>
    %29 = arith.truncf %28 : vector<16x256xf32> to vector<16x256xbf16>
    %30 = vector.extract_strided_slice %1 {offsets = [0, 255], sizes = [16, 1], strides = [1, 1]} : vector<16x256xf32> to vector<16x1xf32>
    %31 = vector.extract_strided_slice %1 {offsets = [0, 0], sizes = [16, 255], strides = [1, 1]} : vector<16x256xf32> to vector<16x255xf32>
    %32 = tpu.concatenate %30, %31 in 1 : vector<16x1xf32>, vector<16x255xf32> -> vector<16x256xf32>
    %c3 = arith.constant 3 : index
    %c0_15 = arith.constant 0 : index
    %c0_16 = arith.constant 0 : index
    %33 = vector.load %arg2[%c3, %c0_15, %c0_16] : memref<9x1x256xf32, #tpu.memory_space<vmem>>, vector<1x1x256xf32>
    %34 = vector.shape_cast %33 : vector<1x1x256xf32> to vector<1x256xf32>
    %35 = vector.broadcast %34 : vector<1x256xf32> to vector<16x256xf32>
    %36 = arith.mulf %32, %35 : vector<16x256xf32>
    %37 = arith.truncf %36 : vector<16x256xf32> to vector<16x256xbf16>
    %38 = arith.truncf %1 : vector<16x256xf32> to vector<16x256xbf16>
    %39 = vector.extract_strided_slice %1 {offsets = [0, 1], sizes = [16, 255], strides = [1, 1]} : vector<16x256xf32> to vector<16x255xf32>
    %40 = vector.extract_strided_slice %1 {offsets = [0, 0], sizes = [16, 1], strides = [1, 1]} : vector<16x256xf32> to vector<16x1xf32>
    %41 = tpu.concatenate %39, %40 in 1 : vector<16x255xf32>, vector<16x1xf32> -> vector<16x256xf32>
    %c5 = arith.constant 5 : index
    %c0_17 = arith.constant 0 : index
    %c0_18 = arith.constant 0 : index
    %42 = vector.load %arg2[%c5, %c0_17, %c0_18] : memref<9x1x256xf32, #tpu.memory_space<vmem>>, vector<1x1x256xf32>
    %43 = vector.shape_cast %42 : vector<1x1x256xf32> to vector<1x256xf32>
    %44 = vector.broadcast %43 : vector<1x256xf32> to vector<16x256xf32>
    %45 = arith.mulf %41, %44 : vector<16x256xf32>
    %46 = arith.truncf %45 : vector<16x256xf32> to vector<16x256xbf16>
    %47 = vector.extract_strided_slice %1 {offsets = [0, 15], sizes = [16, 241], strides = [1, 1]} : vector<16x256xf32> to vector<16x241xf32>
    %48 = vector.extract_strided_slice %1 {offsets = [0, 0], sizes = [16, 15], strides = [1, 1]} : vector<16x256xf32> to vector<16x15xf32>
    %49 = tpu.concatenate %47, %48 in 1 : vector<16x241xf32>, vector<16x15xf32> -> vector<16x256xf32>
    %c6 = arith.constant 6 : index
    %c0_19 = arith.constant 0 : index
    %c0_20 = arith.constant 0 : index
    %50 = vector.load %arg2[%c6, %c0_19, %c0_20] : memref<9x1x256xf32, #tpu.memory_space<vmem>>, vector<1x1x256xf32>
    %51 = vector.shape_cast %50 : vector<1x1x256xf32> to vector<1x256xf32>
    %52 = vector.broadcast %51 : vector<1x256xf32> to vector<16x256xf32>
    %53 = arith.mulf %49, %52 : vector<16x256xf32>
    %54 = arith.truncf %53 : vector<16x256xf32> to vector<16x256xbf16>
    %55 = vector.extract_strided_slice %1 {offsets = [0, 16], sizes = [16, 240], strides = [1, 1]} : vector<16x256xf32> to vector<16x240xf32>
    %56 = vector.extract_strided_slice %1 {offsets = [0, 0], sizes = [16, 16], strides = [1, 1]} : vector<16x256xf32> to vector<16x16xf32>
    %57 = tpu.concatenate %55, %56 in 1 : vector<16x240xf32>, vector<16x16xf32> -> vector<16x256xf32>
    %c7 = arith.constant 7 : index
    %c0_21 = arith.constant 0 : index
    %c0_22 = arith.constant 0 : index
    %58 = vector.load %arg2[%c7, %c0_21, %c0_22] : memref<9x1x256xf32, #tpu.memory_space<vmem>>, vector<1x1x256xf32>
    %59 = vector.shape_cast %58 : vector<1x1x256xf32> to vector<1x256xf32>
    %60 = vector.broadcast %59 : vector<1x256xf32> to vector<16x256xf32>
    %61 = arith.mulf %57, %60 : vector<16x256xf32>
    %62 = arith.truncf %61 : vector<16x256xf32> to vector<16x256xbf16>
    %63 = vector.extract_strided_slice %1 {offsets = [0, 17], sizes = [16, 239], strides = [1, 1]} : vector<16x256xf32> to vector<16x239xf32>
    %64 = vector.extract_strided_slice %1 {offsets = [0, 0], sizes = [16, 17], strides = [1, 1]} : vector<16x256xf32> to vector<16x17xf32>
    %65 = tpu.concatenate %63, %64 in 1 : vector<16x239xf32>, vector<16x17xf32> -> vector<16x256xf32>
    %c8 = arith.constant 8 : index
    %c0_23 = arith.constant 0 : index
    %c0_24 = arith.constant 0 : index
    %66 = vector.load %arg2[%c8, %c0_23, %c0_24] : memref<9x1x256xf32, #tpu.memory_space<vmem>>, vector<1x1x256xf32>
    %67 = vector.shape_cast %66 : vector<1x1x256xf32> to vector<1x256xf32>
    %68 = vector.broadcast %67 : vector<1x256xf32> to vector<16x256xf32>
    %69 = arith.mulf %65, %68 : vector<16x256xf32>
    %70 = arith.truncf %69 : vector<16x256xf32> to vector<16x256xbf16>
    %71 = tpu.concatenate %13, %21, %29, %37, %38, %46, %54, %62, %70 in 0 : vector<16x256xbf16>, vector<16x256xbf16>, vector<16x256xbf16>, vector<16x256xbf16>, vector<16x256xbf16>, vector<16x256xbf16>, vector<16x256xbf16>, vector<16x256xbf16>, vector<16x256xbf16> -> vector<144x256xbf16>
    %cst = arith.constant dense<0.000000e+00> : vector<16x256xf32>
    %72 = tpu.matmul %3, %71, %cst {dimension_numbers = #tpu.dot_dimension_numbers<[1], [0], [0], [1], [0, 0, 1, 1], [], []>} : vector<16x144xbf16>, vector<144x256xbf16>, vector<16x256xf32> -> vector<16x256xf32>
    %73 = vector.broadcast %5 : vector<16x1xf32> to vector<16x256xf32>
    %74 = arith.addf %72, %73 : vector<16x256xf32>
    %cst_25 = arith.constant 0.000000e+00 : f32
    %75 = vector.broadcast %cst_25 : f32 to vector<16x256xf32>
    %76 = arith.maximumf %74, %75 : vector<16x256xf32>
    %77 = arith.addf %76, %1 : vector<16x256xf32>
    %c0_26 = arith.constant 0 : index
    %c0_27 = arith.constant 0 : index
    %c0_28 = arith.constant 0 : index
    %78 = vector.load %arg5[%c0_26, %c0_27, %c0_28] : memref<2x16x144xbf16, #tpu.memory_space<vmem>>, vector<1x16x144xbf16>
    %79 = vector.shape_cast %78 : vector<1x16x144xbf16> to vector<16x144xbf16>
    %c0_29 = arith.constant 0 : index
    %c0_30 = arith.constant 0 : index
    %c0_31 = arith.constant 0 : index
    %80 = vector.load %arg6[%c0_29, %c0_30, %c0_31] : memref<2x16x1xf32, #tpu.memory_space<vmem>>, vector<1x16x1xf32>
    %81 = vector.shape_cast %80 : vector<1x16x1xf32> to vector<16x1xf32>
    %82 = vector.extract_strided_slice %77 {offsets = [0, 239], sizes = [16, 17], strides = [1, 1]} : vector<16x256xf32> to vector<16x17xf32>
    %83 = vector.extract_strided_slice %77 {offsets = [0, 0], sizes = [16, 239], strides = [1, 1]} : vector<16x256xf32> to vector<16x239xf32>
    %84 = tpu.concatenate %82, %83 in 1 : vector<16x17xf32>, vector<16x239xf32> -> vector<16x256xf32>
    %c0_32 = arith.constant 0 : index
    %c0_33 = arith.constant 0 : index
    %c0_34 = arith.constant 0 : index
    %85 = vector.load %arg2[%c0_32, %c0_33, %c0_34] : memref<9x1x256xf32, #tpu.memory_space<vmem>>, vector<1x1x256xf32>
    %86 = vector.shape_cast %85 : vector<1x1x256xf32> to vector<1x256xf32>
    %87 = vector.broadcast %86 : vector<1x256xf32> to vector<16x256xf32>
    %88 = arith.mulf %84, %87 : vector<16x256xf32>
    %89 = arith.truncf %88 : vector<16x256xf32> to vector<16x256xbf16>
    %90 = vector.extract_strided_slice %77 {offsets = [0, 240], sizes = [16, 16], strides = [1, 1]} : vector<16x256xf32> to vector<16x16xf32>
    %91 = vector.extract_strided_slice %77 {offsets = [0, 0], sizes = [16, 240], strides = [1, 1]} : vector<16x256xf32> to vector<16x240xf32>
    %92 = tpu.concatenate %90, %91 in 1 : vector<16x16xf32>, vector<16x240xf32> -> vector<16x256xf32>
    %c1_35 = arith.constant 1 : index
    %c0_36 = arith.constant 0 : index
    %c0_37 = arith.constant 0 : index
    %93 = vector.load %arg2[%c1_35, %c0_36, %c0_37] : memref<9x1x256xf32, #tpu.memory_space<vmem>>, vector<1x1x256xf32>
    %94 = vector.shape_cast %93 : vector<1x1x256xf32> to vector<1x256xf32>
    %95 = vector.broadcast %94 : vector<1x256xf32> to vector<16x256xf32>
    %96 = arith.mulf %92, %95 : vector<16x256xf32>
    %97 = arith.truncf %96 : vector<16x256xf32> to vector<16x256xbf16>
    %98 = vector.extract_strided_slice %77 {offsets = [0, 241], sizes = [16, 15], strides = [1, 1]} : vector<16x256xf32> to vector<16x15xf32>
    %99 = vector.extract_strided_slice %77 {offsets = [0, 0], sizes = [16, 241], strides = [1, 1]} : vector<16x256xf32> to vector<16x241xf32>
    %100 = tpu.concatenate %98, %99 in 1 : vector<16x15xf32>, vector<16x241xf32> -> vector<16x256xf32>
    %c2_38 = arith.constant 2 : index
    %c0_39 = arith.constant 0 : index
    %c0_40 = arith.constant 0 : index
    %101 = vector.load %arg2[%c2_38, %c0_39, %c0_40] : memref<9x1x256xf32, #tpu.memory_space<vmem>>, vector<1x1x256xf32>
    %102 = vector.shape_cast %101 : vector<1x1x256xf32> to vector<1x256xf32>
    %103 = vector.broadcast %102 : vector<1x256xf32> to vector<16x256xf32>
    %104 = arith.mulf %100, %103 : vector<16x256xf32>
    %105 = arith.truncf %104 : vector<16x256xf32> to vector<16x256xbf16>
    %106 = vector.extract_strided_slice %77 {offsets = [0, 255], sizes = [16, 1], strides = [1, 1]} : vector<16x256xf32> to vector<16x1xf32>
    %107 = vector.extract_strided_slice %77 {offsets = [0, 0], sizes = [16, 255], strides = [1, 1]} : vector<16x256xf32> to vector<16x255xf32>
    %108 = tpu.concatenate %106, %107 in 1 : vector<16x1xf32>, vector<16x255xf32> -> vector<16x256xf32>
    %c3_41 = arith.constant 3 : index
    %c0_42 = arith.constant 0 : index
    %c0_43 = arith.constant 0 : index
    %109 = vector.load %arg2[%c3_41, %c0_42, %c0_43] : memref<9x1x256xf32, #tpu.memory_space<vmem>>, vector<1x1x256xf32>
    %110 = vector.shape_cast %109 : vector<1x1x256xf32> to vector<1x256xf32>
    %111 = vector.broadcast %110 : vector<1x256xf32> to vector<16x256xf32>
    %112 = arith.mulf %108, %111 : vector<16x256xf32>
    %113 = arith.truncf %112 : vector<16x256xf32> to vector<16x256xbf16>
    %114 = arith.truncf %77 : vector<16x256xf32> to vector<16x256xbf16>
    %115 = vector.extract_strided_slice %77 {offsets = [0, 1], sizes = [16, 255], strides = [1, 1]} : vector<16x256xf32> to vector<16x255xf32>
    %116 = vector.extract_strided_slice %77 {offsets = [0, 0], sizes = [16, 1], strides = [1, 1]} : vector<16x256xf32> to vector<16x1xf32>
    %117 = tpu.concatenate %115, %116 in 1 : vector<16x255xf32>, vector<16x1xf32> -> vector<16x256xf32>
    %c5_44 = arith.constant 5 : index
    %c0_45 = arith.constant 0 : index
    %c0_46 = arith.constant 0 : index
    %118 = vector.load %arg2[%c5_44, %c0_45, %c0_46] : memref<9x1x256xf32, #tpu.memory_space<vmem>>, vector<1x1x256xf32>
    %119 = vector.shape_cast %118 : vector<1x1x256xf32> to vector<1x256xf32>
    %120 = vector.broadcast %119 : vector<1x256xf32> to vector<16x256xf32>
    %121 = arith.mulf %117, %120 : vector<16x256xf32>
    %122 = arith.truncf %121 : vector<16x256xf32> to vector<16x256xbf16>
    %123 = vector.extract_strided_slice %77 {offsets = [0, 15], sizes = [16, 241], strides = [1, 1]} : vector<16x256xf32> to vector<16x241xf32>
    %124 = vector.extract_strided_slice %77 {offsets = [0, 0], sizes = [16, 15], strides = [1, 1]} : vector<16x256xf32> to vector<16x15xf32>
    %125 = tpu.concatenate %123, %124 in 1 : vector<16x241xf32>, vector<16x15xf32> -> vector<16x256xf32>
    %c6_47 = arith.constant 6 : index
    %c0_48 = arith.constant 0 : index
    %c0_49 = arith.constant 0 : index
    %126 = vector.load %arg2[%c6_47, %c0_48, %c0_49] : memref<9x1x256xf32, #tpu.memory_space<vmem>>, vector<1x1x256xf32>
    %127 = vector.shape_cast %126 : vector<1x1x256xf32> to vector<1x256xf32>
    %128 = vector.broadcast %127 : vector<1x256xf32> to vector<16x256xf32>
    %129 = arith.mulf %125, %128 : vector<16x256xf32>
    %130 = arith.truncf %129 : vector<16x256xf32> to vector<16x256xbf16>
    %131 = vector.extract_strided_slice %77 {offsets = [0, 16], sizes = [16, 240], strides = [1, 1]} : vector<16x256xf32> to vector<16x240xf32>
    %132 = vector.extract_strided_slice %77 {offsets = [0, 0], sizes = [16, 16], strides = [1, 1]} : vector<16x256xf32> to vector<16x16xf32>
    %133 = tpu.concatenate %131, %132 in 1 : vector<16x240xf32>, vector<16x16xf32> -> vector<16x256xf32>
    %c7_50 = arith.constant 7 : index
    %c0_51 = arith.constant 0 : index
    %c0_52 = arith.constant 0 : index
    %134 = vector.load %arg2[%c7_50, %c0_51, %c0_52] : memref<9x1x256xf32, #tpu.memory_space<vmem>>, vector<1x1x256xf32>
    %135 = vector.shape_cast %134 : vector<1x1x256xf32> to vector<1x256xf32>
    %136 = vector.broadcast %135 : vector<1x256xf32> to vector<16x256xf32>
    %137 = arith.mulf %133, %136 : vector<16x256xf32>
    %138 = arith.truncf %137 : vector<16x256xf32> to vector<16x256xbf16>
    %139 = vector.extract_strided_slice %77 {offsets = [0, 17], sizes = [16, 239], strides = [1, 1]} : vector<16x256xf32> to vector<16x239xf32>
    %140 = vector.extract_strided_slice %77 {offsets = [0, 0], sizes = [16, 17], strides = [1, 1]} : vector<16x256xf32> to vector<16x17xf32>
    %141 = tpu.concatenate %139, %140 in 1 : vector<16x239xf32>, vector<16x17xf32> -> vector<16x256xf32>
    %c8_53 = arith.constant 8 : index
    %c0_54 = arith.constant 0 : index
    %c0_55 = arith.constant 0 : index
    %142 = vector.load %arg2[%c8_53, %c0_54, %c0_55] : memref<9x1x256xf32, #tpu.memory_space<vmem>>, vector<1x1x256xf32>
    %143 = vector.shape_cast %142 : vector<1x1x256xf32> to vector<1x256xf32>
    %144 = vector.broadcast %143 : vector<1x256xf32> to vector<16x256xf32>
    %145 = arith.mulf %141, %144 : vector<16x256xf32>
    %146 = arith.truncf %145 : vector<16x256xf32> to vector<16x256xbf16>
    %147 = tpu.concatenate %89, %97, %105, %113, %114, %122, %130, %138, %146 in 0 : vector<16x256xbf16>, vector<16x256xbf16>, vector<16x256xbf16>, vector<16x256xbf16>, vector<16x256xbf16>, vector<16x256xbf16>, vector<16x256xbf16>, vector<16x256xbf16>, vector<16x256xbf16> -> vector<144x256xbf16>
    %cst_56 = arith.constant dense<0.000000e+00> : vector<16x256xf32>
    %148 = tpu.matmul %79, %147, %cst_56 {dimension_numbers = #tpu.dot_dimension_numbers<[1], [0], [0], [1], [0, 0, 1, 1], [], []>} : vector<16x144xbf16>, vector<144x256xbf16>, vector<16x256xf32> -> vector<16x256xf32>
    %149 = vector.broadcast %81 : vector<16x1xf32> to vector<16x256xf32>
    %150 = arith.addf %148, %149 : vector<16x256xf32>
    %cst_57 = arith.constant dense<0.000000e+00> : vector<16xf32>
    %151 = vector.multi_reduction <add>, %150, %cst_57 [1] : vector<16x256xf32> to vector<16xf32>
    %152 = vector.shape_cast %151 : vector<16xf32> to vector<16x1xf32>
    %cst_58 = arith.constant 2.560000e+02 : f32
    %153 = vector.broadcast %cst_58 : f32 to vector<16x1xf32>
    %154 = arith.divf %152, %153 : vector<16x1xf32>
    %c0_59 = arith.constant 0 : index
    %c0_60 = arith.constant 0 : index
    %c0_61 = arith.constant 0 : index
    %155 = vector.load %arg7[%c0_59, %c0_60, %c0_61] : memref<2x2x16xf32, #tpu.memory_space<vmem>>, vector<1x2x16xf32>
    %156 = vector.shape_cast %155 : vector<1x2x16xf32> to vector<2x16xf32>
    %cst_62 = arith.constant dense<0.000000e+00> : vector<2x1xf32>
    %157 = tpu.matmul %156, %154, %cst_62 {dimension_numbers = #tpu.dot_dimension_numbers<[1], [0], [0], [1], [0, 0, 1, 1], [], []>} : vector<2x16xf32>, vector<16x1xf32>, vector<2x1xf32> -> vector<2x1xf32>
    %c0_63 = arith.constant 0 : index
    %c0_64 = arith.constant 0 : index
    %c0_65 = arith.constant 0 : index
    %158 = vector.load %arg8[%c0_63, %c0_64, %c0_65] : memref<2x2x1xf32, #tpu.memory_space<vmem>>, vector<1x2x1xf32>
    %159 = vector.shape_cast %158 : vector<1x2x1xf32> to vector<2x1xf32>
    %160 = arith.addf %157, %159 : vector<2x1xf32>
    %cst_66 = arith.constant 0.000000e+00 : f32
    %161 = vector.broadcast %cst_66 : f32 to vector<2x1xf32>
    %162 = arith.maximumf %160, %161 : vector<2x1xf32>
    %c0_67 = arith.constant 0 : index
    %c0_68 = arith.constant 0 : index
    %c0_69 = arith.constant 0 : index
    %163 = vector.load %arg9[%c0_67, %c0_68, %c0_69] : memref<2x16x2xf32, #tpu.memory_space<vmem>>, vector<1x16x2xf32>
    %164 = vector.shape_cast %163 : vector<1x16x2xf32> to vector<16x2xf32>
    %cst_70 = arith.constant dense<0.000000e+00> : vector<16x1xf32>
    %165 = tpu.matmul %164, %162, %cst_70 {dimension_numbers = #tpu.dot_dimension_numbers<[1], [0], [0], [1], [0, 0, 1, 1], [], []>} : vector<16x2xf32>, vector<2x1xf32>, vector<16x1xf32> -> vector<16x1xf32>
    %c0_71 = arith.constant 0 : index
    %c0_72 = arith.constant 0 : index
    %c0_73 = arith.constant 0 : index
    %166 = vector.load %arg10[%c0_71, %c0_72, %c0_73] : memref<2x16x1xf32, #tpu.memory_space<vmem>>, vector<1x16x1xf32>
    %167 = vector.shape_cast %166 : vector<1x16x1xf32> to vector<16x1xf32>
    %168 = arith.addf %165, %167 : vector<16x1xf32>
    %169 = arith.negf %168 : vector<16x1xf32>
    %170 = math.exp %169 : vector<16x1xf32>
    %cst_74 = arith.constant 1.000000e+00 : f32
    %171 = vector.broadcast %cst_74 : f32 to vector<16x1xf32>
    %172 = arith.addf %171, %170 : vector<16x1xf32>
    %173 = arith.divf %171, %172 : vector<16x1xf32>
    %174 = vector.broadcast %173 : vector<16x1xf32> to vector<16x256xf32>
    %175 = arith.mulf %150, %174 : vector<16x256xf32>
    %c0_75 = arith.constant 0 : index
    %c0_76 = arith.constant 0 : index
    %c0_77 = arith.constant 0 : index
    %176 = vector.load %arg11[%c0_75, %c0_76, %c0_77] : memref<2x2x16xf32, #tpu.memory_space<vmem>>, vector<1x2x16xf32>
    %177 = vector.shape_cast %176 : vector<1x2x16xf32> to vector<2x16xf32>
    %cst_78 = arith.constant dense<0.000000e+00> : vector<2x256xf32>
    %178 = tpu.matmul %177, %175, %cst_78 {dimension_numbers = #tpu.dot_dimension_numbers<[1], [0], [0], [1], [0, 0, 1, 1], [], []>} : vector<2x16xf32>, vector<16x256xf32>, vector<2x256xf32> -> vector<2x256xf32>
    %c0_79 = arith.constant 0 : index
    %c0_80 = arith.constant 0 : index
    %c0_81 = arith.constant 0 : index
    %179 = vector.load %arg12[%c0_79, %c0_80, %c0_81] : memref<2x2x1xf32, #tpu.memory_space<vmem>>, vector<1x2x1xf32>
    %180 = vector.shape_cast %179 : vector<1x2x1xf32> to vector<2x1xf32>
    %181 = vector.broadcast %180 : vector<2x1xf32> to vector<2x256xf32>
    %182 = arith.addf %178, %181 : vector<2x256xf32>
    %cst_82 = arith.constant 0.000000e+00 : f32
    %183 = vector.broadcast %cst_82 : f32 to vector<2x256xf32>
    %184 = arith.maximumf %182, %183 : vector<2x256xf32>
    %c0_83 = arith.constant 0 : index
    %c0_84 = arith.constant 0 : index
    %c0_85 = arith.constant 0 : index
    %185 = vector.load %arg13[%c0_83, %c0_84, %c0_85] : memref<2x2x1xf32, #tpu.memory_space<vmem>>, vector<1x2x1xf32>
    %186 = vector.shape_cast %185 : vector<1x2x1xf32> to vector<2x1xf32>
    %187 = vector.broadcast %186 : vector<2x1xf32> to vector<2x256xf32>
    %188 = arith.mulf %184, %187 : vector<2x256xf32>
    %cst_86 = arith.constant dense<0.000000e+00> : vector<256xf32>
    %189 = vector.multi_reduction <add>, %188, %cst_86 [0] : vector<2x256xf32> to vector<256xf32>
    %190 = vector.shape_cast %189 : vector<256xf32> to vector<1x256xf32>
    %c0_87 = arith.constant 0 : index
    %c0_88 = arith.constant 0 : index
    %c0_89 = arith.constant 0 : index
    %191 = vector.load %arg14[%c0_87, %c0_88, %c0_89] : memref<2x1x1xf32, #tpu.memory_space<vmem>>, vector<1x1x1xf32>
    %192 = vector.shape_cast %191 : vector<1x1x1xf32> to vector<1x1xf32>
    %193 = vector.broadcast %192 : vector<1x1xf32> to vector<1x256xf32>
    %194 = arith.addf %190, %193 : vector<1x256xf32>
    %195 = arith.negf %194 : vector<1x256xf32>
    %196 = math.exp %195 : vector<1x256xf32>
    %cst_90 = arith.constant 1.000000e+00 : f32
    %197 = vector.broadcast %cst_90 : f32 to vector<1x256xf32>
    %198 = arith.addf %197, %196 : vector<1x256xf32>
    %199 = arith.divf %197, %198 : vector<1x256xf32>
    %200 = vector.broadcast %199 : vector<1x256xf32> to vector<16x256xf32>
    %201 = arith.mulf %175, %200 : vector<16x256xf32>
    %202 = arith.addf %201, %1 : vector<16x256xf32>
    %c1_91 = arith.constant 1 : index
    %c0_92 = arith.constant 0 : index
    %c0_93 = arith.constant 0 : index
    %203 = vector.load %arg3[%c1_91, %c0_92, %c0_93] : memref<2x16x144xbf16, #tpu.memory_space<vmem>>, vector<1x16x144xbf16>
    %204 = vector.shape_cast %203 : vector<1x16x144xbf16> to vector<16x144xbf16>
    %c1_94 = arith.constant 1 : index
    %c0_95 = arith.constant 0 : index
    %c0_96 = arith.constant 0 : index
    %205 = vector.load %arg4[%c1_94, %c0_95, %c0_96] : memref<2x16x1xf32, #tpu.memory_space<vmem>>, vector<1x16x1xf32>
    %206 = vector.shape_cast %205 : vector<1x16x1xf32> to vector<16x1xf32>
    %207 = vector.extract_strided_slice %202 {offsets = [0, 239], sizes = [16, 17], strides = [1, 1]} : vector<16x256xf32> to vector<16x17xf32>
    %208 = vector.extract_strided_slice %202 {offsets = [0, 0], sizes = [16, 239], strides = [1, 1]} : vector<16x256xf32> to vector<16x239xf32>
    %209 = tpu.concatenate %207, %208 in 1 : vector<16x17xf32>, vector<16x239xf32> -> vector<16x256xf32>
    %c0_97 = arith.constant 0 : index
    %c0_98 = arith.constant 0 : index
    %c0_99 = arith.constant 0 : index
    %210 = vector.load %arg2[%c0_97, %c0_98, %c0_99] : memref<9x1x256xf32, #tpu.memory_space<vmem>>, vector<1x1x256xf32>
    %211 = vector.shape_cast %210 : vector<1x1x256xf32> to vector<1x256xf32>
    %212 = vector.broadcast %211 : vector<1x256xf32> to vector<16x256xf32>
    %213 = arith.mulf %209, %212 : vector<16x256xf32>
    %214 = arith.truncf %213 : vector<16x256xf32> to vector<16x256xbf16>
    %215 = vector.extract_strided_slice %202 {offsets = [0, 240], sizes = [16, 16], strides = [1, 1]} : vector<16x256xf32> to vector<16x16xf32>
    %216 = vector.extract_strided_slice %202 {offsets = [0, 0], sizes = [16, 240], strides = [1, 1]} : vector<16x256xf32> to vector<16x240xf32>
    %217 = tpu.concatenate %215, %216 in 1 : vector<16x16xf32>, vector<16x240xf32> -> vector<16x256xf32>
    %c1_100 = arith.constant 1 : index
    %c0_101 = arith.constant 0 : index
    %c0_102 = arith.constant 0 : index
    %218 = vector.load %arg2[%c1_100, %c0_101, %c0_102] : memref<9x1x256xf32, #tpu.memory_space<vmem>>, vector<1x1x256xf32>
    %219 = vector.shape_cast %218 : vector<1x1x256xf32> to vector<1x256xf32>
    %220 = vector.broadcast %219 : vector<1x256xf32> to vector<16x256xf32>
    %221 = arith.mulf %217, %220 : vector<16x256xf32>
    %222 = arith.truncf %221 : vector<16x256xf32> to vector<16x256xbf16>
    %223 = vector.extract_strided_slice %202 {offsets = [0, 241], sizes = [16, 15], strides = [1, 1]} : vector<16x256xf32> to vector<16x15xf32>
    %224 = vector.extract_strided_slice %202 {offsets = [0, 0], sizes = [16, 241], strides = [1, 1]} : vector<16x256xf32> to vector<16x241xf32>
    %225 = tpu.concatenate %223, %224 in 1 : vector<16x15xf32>, vector<16x241xf32> -> vector<16x256xf32>
    %c2_103 = arith.constant 2 : index
    %c0_104 = arith.constant 0 : index
    %c0_105 = arith.constant 0 : index
    %226 = vector.load %arg2[%c2_103, %c0_104, %c0_105] : memref<9x1x256xf32, #tpu.memory_space<vmem>>, vector<1x1x256xf32>
    %227 = vector.shape_cast %226 : vector<1x1x256xf32> to vector<1x256xf32>
    %228 = vector.broadcast %227 : vector<1x256xf32> to vector<16x256xf32>
    %229 = arith.mulf %225, %228 : vector<16x256xf32>
    %230 = arith.truncf %229 : vector<16x256xf32> to vector<16x256xbf16>
    %231 = vector.extract_strided_slice %202 {offsets = [0, 255], sizes = [16, 1], strides = [1, 1]} : vector<16x256xf32> to vector<16x1xf32>
    %232 = vector.extract_strided_slice %202 {offsets = [0, 0], sizes = [16, 255], strides = [1, 1]} : vector<16x256xf32> to vector<16x255xf32>
    %233 = tpu.concatenate %231, %232 in 1 : vector<16x1xf32>, vector<16x255xf32> -> vector<16x256xf32>
    %c3_106 = arith.constant 3 : index
    %c0_107 = arith.constant 0 : index
    %c0_108 = arith.constant 0 : index
    %234 = vector.load %arg2[%c3_106, %c0_107, %c0_108] : memref<9x1x256xf32, #tpu.memory_space<vmem>>, vector<1x1x256xf32>
    %235 = vector.shape_cast %234 : vector<1x1x256xf32> to vector<1x256xf32>
    %236 = vector.broadcast %235 : vector<1x256xf32> to vector<16x256xf32>
    %237 = arith.mulf %233, %236 : vector<16x256xf32>
    %238 = arith.truncf %237 : vector<16x256xf32> to vector<16x256xbf16>
    %239 = arith.truncf %202 : vector<16x256xf32> to vector<16x256xbf16>
    %240 = vector.extract_strided_slice %202 {offsets = [0, 1], sizes = [16, 255], strides = [1, 1]} : vector<16x256xf32> to vector<16x255xf32>
    %241 = vector.extract_strided_slice %202 {offsets = [0, 0], sizes = [16, 1], strides = [1, 1]} : vector<16x256xf32> to vector<16x1xf32>
    %242 = tpu.concatenate %240, %241 in 1 : vector<16x255xf32>, vector<16x1xf32> -> vector<16x256xf32>
    %c5_109 = arith.constant 5 : index
    %c0_110 = arith.constant 0 : index
    %c0_111 = arith.constant 0 : index
    %243 = vector.load %arg2[%c5_109, %c0_110, %c0_111] : memref<9x1x256xf32, #tpu.memory_space<vmem>>, vector<1x1x256xf32>
    %244 = vector.shape_cast %243 : vector<1x1x256xf32> to vector<1x256xf32>
    %245 = vector.broadcast %244 : vector<1x256xf32> to vector<16x256xf32>
    %246 = arith.mulf %242, %245 : vector<16x256xf32>
    %247 = arith.truncf %246 : vector<16x256xf32> to vector<16x256xbf16>
    %248 = vector.extract_strided_slice %202 {offsets = [0, 15], sizes = [16, 241], strides = [1, 1]} : vector<16x256xf32> to vector<16x241xf32>
    %249 = vector.extract_strided_slice %202 {offsets = [0, 0], sizes = [16, 15], strides = [1, 1]} : vector<16x256xf32> to vector<16x15xf32>
    %250 = tpu.concatenate %248, %249 in 1 : vector<16x241xf32>, vector<16x15xf32> -> vector<16x256xf32>
    %c6_112 = arith.constant 6 : index
    %c0_113 = arith.constant 0 : index
    %c0_114 = arith.constant 0 : index
    %251 = vector.load %arg2[%c6_112, %c0_113, %c0_114] : memref<9x1x256xf32, #tpu.memory_space<vmem>>, vector<1x1x256xf32>
    %252 = vector.shape_cast %251 : vector<1x1x256xf32> to vector<1x256xf32>
    %253 = vector.broadcast %252 : vector<1x256xf32> to vector<16x256xf32>
    %254 = arith.mulf %250, %253 : vector<16x256xf32>
    %255 = arith.truncf %254 : vector<16x256xf32> to vector<16x256xbf16>
    %256 = vector.extract_strided_slice %202 {offsets = [0, 16], sizes = [16, 240], strides = [1, 1]} : vector<16x256xf32> to vector<16x240xf32>
    %257 = vector.extract_strided_slice %202 {offsets = [0, 0], sizes = [16, 16], strides = [1, 1]} : vector<16x256xf32> to vector<16x16xf32>
    %258 = tpu.concatenate %256, %257 in 1 : vector<16x240xf32>, vector<16x16xf32> -> vector<16x256xf32>
    %c7_115 = arith.constant 7 : index
    %c0_116 = arith.constant 0 : index
    %c0_117 = arith.constant 0 : index
    %259 = vector.load %arg2[%c7_115, %c0_116, %c0_117] : memref<9x1x256xf32, #tpu.memory_space<vmem>>, vector<1x1x256xf32>
    %260 = vector.shape_cast %259 : vector<1x1x256xf32> to vector<1x256xf32>
    %261 = vector.broadcast %260 : vector<1x256xf32> to vector<16x256xf32>
    %262 = arith.mulf %258, %261 : vector<16x256xf32>
    %263 = arith.truncf %262 : vector<16x256xf32> to vector<16x256xbf16>
    %264 = vector.extract_strided_slice %202 {offsets = [0, 17], sizes = [16, 239], strides = [1, 1]} : vector<16x256xf32> to vector<16x239xf32>
    %265 = vector.extract_strided_slice %202 {offsets = [0, 0], sizes = [16, 17], strides = [1, 1]} : vector<16x256xf32> to vector<16x17xf32>
    %266 = tpu.concatenate %264, %265 in 1 : vector<16x239xf32>, vector<16x17xf32> -> vector<16x256xf32>
    %c8_118 = arith.constant 8 : index
    %c0_119 = arith.constant 0 : index
    %c0_120 = arith.constant 0 : index
    %267 = vector.load %arg2[%c8_118, %c0_119, %c0_120] : memref<9x1x256xf32, #tpu.memory_space<vmem>>, vector<1x1x256xf32>
    %268 = vector.shape_cast %267 : vector<1x1x256xf32> to vector<1x256xf32>
    %269 = vector.broadcast %268 : vector<1x256xf32> to vector<16x256xf32>
    %270 = arith.mulf %266, %269 : vector<16x256xf32>
    %271 = arith.truncf %270 : vector<16x256xf32> to vector<16x256xbf16>
    %272 = tpu.concatenate %214, %222, %230, %238, %239, %247, %255, %263, %271 in 0 : vector<16x256xbf16>, vector<16x256xbf16>, vector<16x256xbf16>, vector<16x256xbf16>, vector<16x256xbf16>, vector<16x256xbf16>, vector<16x256xbf16>, vector<16x256xbf16>, vector<16x256xbf16> -> vector<144x256xbf16>
    %cst_121 = arith.constant dense<0.000000e+00> : vector<16x256xf32>
    %273 = tpu.matmul %204, %272, %cst_121 {dimension_numbers = #tpu.dot_dimension_numbers<[1], [0], [0], [1], [0, 0, 1, 1], [], []>} : vector<16x144xbf16>, vector<144x256xbf16>, vector<16x256xf32> -> vector<16x256xf32>
    %274 = vector.broadcast %206 : vector<16x1xf32> to vector<16x256xf32>
    %275 = arith.addf %273, %274 : vector<16x256xf32>
    %cst_122 = arith.constant 0.000000e+00 : f32
    %276 = vector.broadcast %cst_122 : f32 to vector<16x256xf32>
    %277 = arith.maximumf %275, %276 : vector<16x256xf32>
    %278 = arith.addf %277, %202 : vector<16x256xf32>
    %c1_123 = arith.constant 1 : index
    %c0_124 = arith.constant 0 : index
    %c0_125 = arith.constant 0 : index
    %279 = vector.load %arg5[%c1_123, %c0_124, %c0_125] : memref<2x16x144xbf16, #tpu.memory_space<vmem>>, vector<1x16x144xbf16>
    %280 = vector.shape_cast %279 : vector<1x16x144xbf16> to vector<16x144xbf16>
    %c1_126 = arith.constant 1 : index
    %c0_127 = arith.constant 0 : index
    %c0_128 = arith.constant 0 : index
    %281 = vector.load %arg6[%c1_126, %c0_127, %c0_128] : memref<2x16x1xf32, #tpu.memory_space<vmem>>, vector<1x16x1xf32>
    %282 = vector.shape_cast %281 : vector<1x16x1xf32> to vector<16x1xf32>
    %283 = vector.extract_strided_slice %278 {offsets = [0, 239], sizes = [16, 17], strides = [1, 1]} : vector<16x256xf32> to vector<16x17xf32>
    %284 = vector.extract_strided_slice %278 {offsets = [0, 0], sizes = [16, 239], strides = [1, 1]} : vector<16x256xf32> to vector<16x239xf32>
    %285 = tpu.concatenate %283, %284 in 1 : vector<16x17xf32>, vector<16x239xf32> -> vector<16x256xf32>
    %c0_129 = arith.constant 0 : index
    %c0_130 = arith.constant 0 : index
    %c0_131 = arith.constant 0 : index
    %286 = vector.load %arg2[%c0_129, %c0_130, %c0_131] : memref<9x1x256xf32, #tpu.memory_space<vmem>>, vector<1x1x256xf32>
    %287 = vector.shape_cast %286 : vector<1x1x256xf32> to vector<1x256xf32>
    %288 = vector.broadcast %287 : vector<1x256xf32> to vector<16x256xf32>
    %289 = arith.mulf %285, %288 : vector<16x256xf32>
    %290 = arith.truncf %289 : vector<16x256xf32> to vector<16x256xbf16>
    %291 = vector.extract_strided_slice %278 {offsets = [0, 240], sizes = [16, 16], strides = [1, 1]} : vector<16x256xf32> to vector<16x16xf32>
    %292 = vector.extract_strided_slice %278 {offsets = [0, 0], sizes = [16, 240], strides = [1, 1]} : vector<16x256xf32> to vector<16x240xf32>
    %293 = tpu.concatenate %291, %292 in 1 : vector<16x16xf32>, vector<16x240xf32> -> vector<16x256xf32>
    %c1_132 = arith.constant 1 : index
    %c0_133 = arith.constant 0 : index
    %c0_134 = arith.constant 0 : index
    %294 = vector.load %arg2[%c1_132, %c0_133, %c0_134] : memref<9x1x256xf32, #tpu.memory_space<vmem>>, vector<1x1x256xf32>
    %295 = vector.shape_cast %294 : vector<1x1x256xf32> to vector<1x256xf32>
    %296 = vector.broadcast %295 : vector<1x256xf32> to vector<16x256xf32>
    %297 = arith.mulf %293, %296 : vector<16x256xf32>
    %298 = arith.truncf %297 : vector<16x256xf32> to vector<16x256xbf16>
    %299 = vector.extract_strided_slice %278 {offsets = [0, 241], sizes = [16, 15], strides = [1, 1]} : vector<16x256xf32> to vector<16x15xf32>
    %300 = vector.extract_strided_slice %278 {offsets = [0, 0], sizes = [16, 241], strides = [1, 1]} : vector<16x256xf32> to vector<16x241xf32>
    %301 = tpu.concatenate %299, %300 in 1 : vector<16x15xf32>, vector<16x241xf32> -> vector<16x256xf32>
    %c2_135 = arith.constant 2 : index
    %c0_136 = arith.constant 0 : index
    %c0_137 = arith.constant 0 : index
    %302 = vector.load %arg2[%c2_135, %c0_136, %c0_137] : memref<9x1x256xf32, #tpu.memory_space<vmem>>, vector<1x1x256xf32>
    %303 = vector.shape_cast %302 : vector<1x1x256xf32> to vector<1x256xf32>
    %304 = vector.broadcast %303 : vector<1x256xf32> to vector<16x256xf32>
    %305 = arith.mulf %301, %304 : vector<16x256xf32>
    %306 = arith.truncf %305 : vector<16x256xf32> to vector<16x256xbf16>
    %307 = vector.extract_strided_slice %278 {offsets = [0, 255], sizes = [16, 1], strides = [1, 1]} : vector<16x256xf32> to vector<16x1xf32>
    %308 = vector.extract_strided_slice %278 {offsets = [0, 0], sizes = [16, 255], strides = [1, 1]} : vector<16x256xf32> to vector<16x255xf32>
    %309 = tpu.concatenate %307, %308 in 1 : vector<16x1xf32>, vector<16x255xf32> -> vector<16x256xf32>
    %c3_138 = arith.constant 3 : index
    %c0_139 = arith.constant 0 : index
    %c0_140 = arith.constant 0 : index
    %310 = vector.load %arg2[%c3_138, %c0_139, %c0_140] : memref<9x1x256xf32, #tpu.memory_space<vmem>>, vector<1x1x256xf32>
    %311 = vector.shape_cast %310 : vector<1x1x256xf32> to vector<1x256xf32>
    %312 = vector.broadcast %311 : vector<1x256xf32> to vector<16x256xf32>
    %313 = arith.mulf %309, %312 : vector<16x256xf32>
    %314 = arith.truncf %313 : vector<16x256xf32> to vector<16x256xbf16>
    %315 = arith.truncf %278 : vector<16x256xf32> to vector<16x256xbf16>
    %316 = vector.extract_strided_slice %278 {offsets = [0, 1], sizes = [16, 255], strides = [1, 1]} : vector<16x256xf32> to vector<16x255xf32>
    %317 = vector.extract_strided_slice %278 {offsets = [0, 0], sizes = [16, 1], strides = [1, 1]} : vector<16x256xf32> to vector<16x1xf32>
    %318 = tpu.concatenate %316, %317 in 1 : vector<16x255xf32>, vector<16x1xf32> -> vector<16x256xf32>
    %c5_141 = arith.constant 5 : index
    %c0_142 = arith.constant 0 : index
    %c0_143 = arith.constant 0 : index
    %319 = vector.load %arg2[%c5_141, %c0_142, %c0_143] : memref<9x1x256xf32, #tpu.memory_space<vmem>>, vector<1x1x256xf32>
    %320 = vector.shape_cast %319 : vector<1x1x256xf32> to vector<1x256xf32>
    %321 = vector.broadcast %320 : vector<1x256xf32> to vector<16x256xf32>
    %322 = arith.mulf %318, %321 : vector<16x256xf32>
    %323 = arith.truncf %322 : vector<16x256xf32> to vector<16x256xbf16>
    %324 = vector.extract_strided_slice %278 {offsets = [0, 15], sizes = [16, 241], strides = [1, 1]} : vector<16x256xf32> to vector<16x241xf32>
    %325 = vector.extract_strided_slice %278 {offsets = [0, 0], sizes = [16, 15], strides = [1, 1]} : vector<16x256xf32> to vector<16x15xf32>
    %326 = tpu.concatenate %324, %325 in 1 : vector<16x241xf32>, vector<16x15xf32> -> vector<16x256xf32>
    %c6_144 = arith.constant 6 : index
    %c0_145 = arith.constant 0 : index
    %c0_146 = arith.constant 0 : index
    %327 = vector.load %arg2[%c6_144, %c0_145, %c0_146] : memref<9x1x256xf32, #tpu.memory_space<vmem>>, vector<1x1x256xf32>
    %328 = vector.shape_cast %327 : vector<1x1x256xf32> to vector<1x256xf32>
    %329 = vector.broadcast %328 : vector<1x256xf32> to vector<16x256xf32>
    %330 = arith.mulf %326, %329 : vector<16x256xf32>
    %331 = arith.truncf %330 : vector<16x256xf32> to vector<16x256xbf16>
    %332 = vector.extract_strided_slice %278 {offsets = [0, 16], sizes = [16, 240], strides = [1, 1]} : vector<16x256xf32> to vector<16x240xf32>
    %333 = vector.extract_strided_slice %278 {offsets = [0, 0], sizes = [16, 16], strides = [1, 1]} : vector<16x256xf32> to vector<16x16xf32>
    %334 = tpu.concatenate %332, %333 in 1 : vector<16x240xf32>, vector<16x16xf32> -> vector<16x256xf32>
    %c7_147 = arith.constant 7 : index
    %c0_148 = arith.constant 0 : index
    %c0_149 = arith.constant 0 : index
    %335 = vector.load %arg2[%c7_147, %c0_148, %c0_149] : memref<9x1x256xf32, #tpu.memory_space<vmem>>, vector<1x1x256xf32>
    %336 = vector.shape_cast %335 : vector<1x1x256xf32> to vector<1x256xf32>
    %337 = vector.broadcast %336 : vector<1x256xf32> to vector<16x256xf32>
    %338 = arith.mulf %334, %337 : vector<16x256xf32>
    %339 = arith.truncf %338 : vector<16x256xf32> to vector<16x256xbf16>
    %340 = vector.extract_strided_slice %278 {offsets = [0, 17], sizes = [16, 239], strides = [1, 1]} : vector<16x256xf32> to vector<16x239xf32>
    %341 = vector.extract_strided_slice %278 {offsets = [0, 0], sizes = [16, 17], strides = [1, 1]} : vector<16x256xf32> to vector<16x17xf32>
    %342 = tpu.concatenate %340, %341 in 1 : vector<16x239xf32>, vector<16x17xf32> -> vector<16x256xf32>
    %c8_150 = arith.constant 8 : index
    %c0_151 = arith.constant 0 : index
    %c0_152 = arith.constant 0 : index
    %343 = vector.load %arg2[%c8_150, %c0_151, %c0_152] : memref<9x1x256xf32, #tpu.memory_space<vmem>>, vector<1x1x256xf32>
    %344 = vector.shape_cast %343 : vector<1x1x256xf32> to vector<1x256xf32>
    %345 = vector.broadcast %344 : vector<1x256xf32> to vector<16x256xf32>
    %346 = arith.mulf %342, %345 : vector<16x256xf32>
    %347 = arith.truncf %346 : vector<16x256xf32> to vector<16x256xbf16>
    %348 = tpu.concatenate %290, %298, %306, %314, %315, %323, %331, %339, %347 in 0 : vector<16x256xbf16>, vector<16x256xbf16>, vector<16x256xbf16>, vector<16x256xbf16>, vector<16x256xbf16>, vector<16x256xbf16>, vector<16x256xbf16>, vector<16x256xbf16>, vector<16x256xbf16> -> vector<144x256xbf16>
    %cst_153 = arith.constant dense<0.000000e+00> : vector<16x256xf32>
    %349 = tpu.matmul %280, %348, %cst_153 {dimension_numbers = #tpu.dot_dimension_numbers<[1], [0], [0], [1], [0, 0, 1, 1], [], []>} : vector<16x144xbf16>, vector<144x256xbf16>, vector<16x256xf32> -> vector<16x256xf32>
    %350 = vector.broadcast %282 : vector<16x1xf32> to vector<16x256xf32>
    %351 = arith.addf %349, %350 : vector<16x256xf32>
    %cst_154 = arith.constant dense<0.000000e+00> : vector<16xf32>
    %352 = vector.multi_reduction <add>, %351, %cst_154 [1] : vector<16x256xf32> to vector<16xf32>
    %353 = vector.shape_cast %352 : vector<16xf32> to vector<16x1xf32>
    %cst_155 = arith.constant 2.560000e+02 : f32
    %354 = vector.broadcast %cst_155 : f32 to vector<16x1xf32>
    %355 = arith.divf %353, %354 : vector<16x1xf32>
    %c1_156 = arith.constant 1 : index
    %c0_157 = arith.constant 0 : index
    %c0_158 = arith.constant 0 : index
    %356 = vector.load %arg7[%c1_156, %c0_157, %c0_158] : memref<2x2x16xf32, #tpu.memory_space<vmem>>, vector<1x2x16xf32>
    %357 = vector.shape_cast %356 : vector<1x2x16xf32> to vector<2x16xf32>
    %cst_159 = arith.constant dense<0.000000e+00> : vector<2x1xf32>
    %358 = tpu.matmul %357, %355, %cst_159 {dimension_numbers = #tpu.dot_dimension_numbers<[1], [0], [0], [1], [0, 0, 1, 1], [], []>} : vector<2x16xf32>, vector<16x1xf32>, vector<2x1xf32> -> vector<2x1xf32>
    %c1_160 = arith.constant 1 : index
    %c0_161 = arith.constant 0 : index
    %c0_162 = arith.constant 0 : index
    %359 = vector.load %arg8[%c1_160, %c0_161, %c0_162] : memref<2x2x1xf32, #tpu.memory_space<vmem>>, vector<1x2x1xf32>
    %360 = vector.shape_cast %359 : vector<1x2x1xf32> to vector<2x1xf32>
    %361 = arith.addf %358, %360 : vector<2x1xf32>
    %cst_163 = arith.constant 0.000000e+00 : f32
    %362 = vector.broadcast %cst_163 : f32 to vector<2x1xf32>
    %363 = arith.maximumf %361, %362 : vector<2x1xf32>
    %c1_164 = arith.constant 1 : index
    %c0_165 = arith.constant 0 : index
    %c0_166 = arith.constant 0 : index
    %364 = vector.load %arg9[%c1_164, %c0_165, %c0_166] : memref<2x16x2xf32, #tpu.memory_space<vmem>>, vector<1x16x2xf32>
    %365 = vector.shape_cast %364 : vector<1x16x2xf32> to vector<16x2xf32>
    %cst_167 = arith.constant dense<0.000000e+00> : vector<16x1xf32>
    %366 = tpu.matmul %365, %363, %cst_167 {dimension_numbers = #tpu.dot_dimension_numbers<[1], [0], [0], [1], [0, 0, 1, 1], [], []>} : vector<16x2xf32>, vector<2x1xf32>, vector<16x1xf32> -> vector<16x1xf32>
    %c1_168 = arith.constant 1 : index
    %c0_169 = arith.constant 0 : index
    %c0_170 = arith.constant 0 : index
    %367 = vector.load %arg10[%c1_168, %c0_169, %c0_170] : memref<2x16x1xf32, #tpu.memory_space<vmem>>, vector<1x16x1xf32>
    %368 = vector.shape_cast %367 : vector<1x16x1xf32> to vector<16x1xf32>
    %369 = arith.addf %366, %368 : vector<16x1xf32>
    %370 = arith.negf %369 : vector<16x1xf32>
    %371 = math.exp %370 : vector<16x1xf32>
    %cst_171 = arith.constant 1.000000e+00 : f32
    %372 = vector.broadcast %cst_171 : f32 to vector<16x1xf32>
    %373 = arith.addf %372, %371 : vector<16x1xf32>
    %374 = arith.divf %372, %373 : vector<16x1xf32>
    %375 = vector.broadcast %374 : vector<16x1xf32> to vector<16x256xf32>
    %376 = arith.mulf %351, %375 : vector<16x256xf32>
    %c1_172 = arith.constant 1 : index
    %c0_173 = arith.constant 0 : index
    %c0_174 = arith.constant 0 : index
    %377 = vector.load %arg11[%c1_172, %c0_173, %c0_174] : memref<2x2x16xf32, #tpu.memory_space<vmem>>, vector<1x2x16xf32>
    %378 = vector.shape_cast %377 : vector<1x2x16xf32> to vector<2x16xf32>
    %cst_175 = arith.constant dense<0.000000e+00> : vector<2x256xf32>
    %379 = tpu.matmul %378, %376, %cst_175 {dimension_numbers = #tpu.dot_dimension_numbers<[1], [0], [0], [1], [0, 0, 1, 1], [], []>} : vector<2x16xf32>, vector<16x256xf32>, vector<2x256xf32> -> vector<2x256xf32>
    %c1_176 = arith.constant 1 : index
    %c0_177 = arith.constant 0 : index
    %c0_178 = arith.constant 0 : index
    %380 = vector.load %arg12[%c1_176, %c0_177, %c0_178] : memref<2x2x1xf32, #tpu.memory_space<vmem>>, vector<1x2x1xf32>
    %381 = vector.shape_cast %380 : vector<1x2x1xf32> to vector<2x1xf32>
    %382 = vector.broadcast %381 : vector<2x1xf32> to vector<2x256xf32>
    %383 = arith.addf %379, %382 : vector<2x256xf32>
    %cst_179 = arith.constant 0.000000e+00 : f32
    %384 = vector.broadcast %cst_179 : f32 to vector<2x256xf32>
    %385 = arith.maximumf %383, %384 : vector<2x256xf32>
    %c1_180 = arith.constant 1 : index
    %c0_181 = arith.constant 0 : index
    %c0_182 = arith.constant 0 : index
    %386 = vector.load %arg13[%c1_180, %c0_181, %c0_182] : memref<2x2x1xf32, #tpu.memory_space<vmem>>, vector<1x2x1xf32>
    %387 = vector.shape_cast %386 : vector<1x2x1xf32> to vector<2x1xf32>
    %388 = vector.broadcast %387 : vector<2x1xf32> to vector<2x256xf32>
    %389 = arith.mulf %385, %388 : vector<2x256xf32>
    %cst_183 = arith.constant dense<0.000000e+00> : vector<256xf32>
    %390 = vector.multi_reduction <add>, %389, %cst_183 [0] : vector<2x256xf32> to vector<256xf32>
    %391 = vector.shape_cast %390 : vector<256xf32> to vector<1x256xf32>
    %c1_184 = arith.constant 1 : index
    %c0_185 = arith.constant 0 : index
    %c0_186 = arith.constant 0 : index
    %392 = vector.load %arg14[%c1_184, %c0_185, %c0_186] : memref<2x1x1xf32, #tpu.memory_space<vmem>>, vector<1x1x1xf32>
    %393 = vector.shape_cast %392 : vector<1x1x1xf32> to vector<1x1xf32>
    %394 = vector.broadcast %393 : vector<1x1xf32> to vector<1x256xf32>
    %395 = arith.addf %391, %394 : vector<1x256xf32>
    %396 = arith.negf %395 : vector<1x256xf32>
    %397 = math.exp %396 : vector<1x256xf32>
    %cst_187 = arith.constant 1.000000e+00 : f32
    %398 = vector.broadcast %cst_187 : f32 to vector<1x256xf32>
    %399 = arith.addf %398, %397 : vector<1x256xf32>
    %400 = arith.divf %398, %399 : vector<1x256xf32>
    %401 = vector.broadcast %400 : vector<1x256xf32> to vector<16x256xf32>
    %402 = arith.mulf %376, %401 : vector<16x256xf32>
    %403 = arith.addf %402, %202 : vector<16x256xf32>
    %c0_188 = arith.constant 0 : index
    %c0_189 = arith.constant 0 : index
    %404 = vector.load %arg15[%c0_188, %c0_189] : memref<16x144xbf16, #tpu.memory_space<vmem>>, vector<16x144xbf16>
    %c0_190 = arith.constant 0 : index
    %c0_191 = arith.constant 0 : index
    %405 = vector.load %arg16[%c0_190, %c0_191] : memref<16x1xf32, #tpu.memory_space<vmem>>, vector<16x1xf32>
    %406 = vector.extract_strided_slice %403 {offsets = [0, 239], sizes = [16, 17], strides = [1, 1]} : vector<16x256xf32> to vector<16x17xf32>
    %407 = vector.extract_strided_slice %403 {offsets = [0, 0], sizes = [16, 239], strides = [1, 1]} : vector<16x256xf32> to vector<16x239xf32>
    %408 = tpu.concatenate %406, %407 in 1 : vector<16x17xf32>, vector<16x239xf32> -> vector<16x256xf32>
    %c0_192 = arith.constant 0 : index
    %c0_193 = arith.constant 0 : index
    %c0_194 = arith.constant 0 : index
    %409 = vector.load %arg2[%c0_192, %c0_193, %c0_194] : memref<9x1x256xf32, #tpu.memory_space<vmem>>, vector<1x1x256xf32>
    %410 = vector.shape_cast %409 : vector<1x1x256xf32> to vector<1x256xf32>
    %411 = vector.broadcast %410 : vector<1x256xf32> to vector<16x256xf32>
    %412 = arith.mulf %408, %411 : vector<16x256xf32>
    %413 = arith.truncf %412 : vector<16x256xf32> to vector<16x256xbf16>
    %414 = vector.extract_strided_slice %403 {offsets = [0, 240], sizes = [16, 16], strides = [1, 1]} : vector<16x256xf32> to vector<16x16xf32>
    %415 = vector.extract_strided_slice %403 {offsets = [0, 0], sizes = [16, 240], strides = [1, 1]} : vector<16x256xf32> to vector<16x240xf32>
    %416 = tpu.concatenate %414, %415 in 1 : vector<16x16xf32>, vector<16x240xf32> -> vector<16x256xf32>
    %c1_195 = arith.constant 1 : index
    %c0_196 = arith.constant 0 : index
    %c0_197 = arith.constant 0 : index
    %417 = vector.load %arg2[%c1_195, %c0_196, %c0_197] : memref<9x1x256xf32, #tpu.memory_space<vmem>>, vector<1x1x256xf32>
    %418 = vector.shape_cast %417 : vector<1x1x256xf32> to vector<1x256xf32>
    %419 = vector.broadcast %418 : vector<1x256xf32> to vector<16x256xf32>
    %420 = arith.mulf %416, %419 : vector<16x256xf32>
    %421 = arith.truncf %420 : vector<16x256xf32> to vector<16x256xbf16>
    %422 = vector.extract_strided_slice %403 {offsets = [0, 241], sizes = [16, 15], strides = [1, 1]} : vector<16x256xf32> to vector<16x15xf32>
    %423 = vector.extract_strided_slice %403 {offsets = [0, 0], sizes = [16, 241], strides = [1, 1]} : vector<16x256xf32> to vector<16x241xf32>
    %424 = tpu.concatenate %422, %423 in 1 : vector<16x15xf32>, vector<16x241xf32> -> vector<16x256xf32>
    %c2_198 = arith.constant 2 : index
    %c0_199 = arith.constant 0 : index
    %c0_200 = arith.constant 0 : index
    %425 = vector.load %arg2[%c2_198, %c0_199, %c0_200] : memref<9x1x256xf32, #tpu.memory_space<vmem>>, vector<1x1x256xf32>
    %426 = vector.shape_cast %425 : vector<1x1x256xf32> to vector<1x256xf32>
    %427 = vector.broadcast %426 : vector<1x256xf32> to vector<16x256xf32>
    %428 = arith.mulf %424, %427 : vector<16x256xf32>
    %429 = arith.truncf %428 : vector<16x256xf32> to vector<16x256xbf16>
    %430 = vector.extract_strided_slice %403 {offsets = [0, 255], sizes = [16, 1], strides = [1, 1]} : vector<16x256xf32> to vector<16x1xf32>
    %431 = vector.extract_strided_slice %403 {offsets = [0, 0], sizes = [16, 255], strides = [1, 1]} : vector<16x256xf32> to vector<16x255xf32>
    %432 = tpu.concatenate %430, %431 in 1 : vector<16x1xf32>, vector<16x255xf32> -> vector<16x256xf32>
    %c3_201 = arith.constant 3 : index
    %c0_202 = arith.constant 0 : index
    %c0_203 = arith.constant 0 : index
    %433 = vector.load %arg2[%c3_201, %c0_202, %c0_203] : memref<9x1x256xf32, #tpu.memory_space<vmem>>, vector<1x1x256xf32>
    %434 = vector.shape_cast %433 : vector<1x1x256xf32> to vector<1x256xf32>
    %435 = vector.broadcast %434 : vector<1x256xf32> to vector<16x256xf32>
    %436 = arith.mulf %432, %435 : vector<16x256xf32>
    %437 = arith.truncf %436 : vector<16x256xf32> to vector<16x256xbf16>
    %438 = arith.truncf %403 : vector<16x256xf32> to vector<16x256xbf16>
    %439 = vector.extract_strided_slice %403 {offsets = [0, 1], sizes = [16, 255], strides = [1, 1]} : vector<16x256xf32> to vector<16x255xf32>
    %440 = vector.extract_strided_slice %403 {offsets = [0, 0], sizes = [16, 1], strides = [1, 1]} : vector<16x256xf32> to vector<16x1xf32>
    %441 = tpu.concatenate %439, %440 in 1 : vector<16x255xf32>, vector<16x1xf32> -> vector<16x256xf32>
    %c5_204 = arith.constant 5 : index
    %c0_205 = arith.constant 0 : index
    %c0_206 = arith.constant 0 : index
    %442 = vector.load %arg2[%c5_204, %c0_205, %c0_206] : memref<9x1x256xf32, #tpu.memory_space<vmem>>, vector<1x1x256xf32>
    %443 = vector.shape_cast %442 : vector<1x1x256xf32> to vector<1x256xf32>
    %444 = vector.broadcast %443 : vector<1x256xf32> to vector<16x256xf32>
    %445 = arith.mulf %441, %444 : vector<16x256xf32>
    %446 = arith.truncf %445 : vector<16x256xf32> to vector<16x256xbf16>
    %447 = vector.extract_strided_slice %403 {offsets = [0, 15], sizes = [16, 241], strides = [1, 1]} : vector<16x256xf32> to vector<16x241xf32>
    %448 = vector.extract_strided_slice %403 {offsets = [0, 0], sizes = [16, 15], strides = [1, 1]} : vector<16x256xf32> to vector<16x15xf32>
    %449 = tpu.concatenate %447, %448 in 1 : vector<16x241xf32>, vector<16x15xf32> -> vector<16x256xf32>
    %c6_207 = arith.constant 6 : index
    %c0_208 = arith.constant 0 : index
    %c0_209 = arith.constant 0 : index
    %450 = vector.load %arg2[%c6_207, %c0_208, %c0_209] : memref<9x1x256xf32, #tpu.memory_space<vmem>>, vector<1x1x256xf32>
    %451 = vector.shape_cast %450 : vector<1x1x256xf32> to vector<1x256xf32>
    %452 = vector.broadcast %451 : vector<1x256xf32> to vector<16x256xf32>
    %453 = arith.mulf %449, %452 : vector<16x256xf32>
    %454 = arith.truncf %453 : vector<16x256xf32> to vector<16x256xbf16>
    %455 = vector.extract_strided_slice %403 {offsets = [0, 16], sizes = [16, 240], strides = [1, 1]} : vector<16x256xf32> to vector<16x240xf32>
    %456 = vector.extract_strided_slice %403 {offsets = [0, 0], sizes = [16, 16], strides = [1, 1]} : vector<16x256xf32> to vector<16x16xf32>
    %457 = tpu.concatenate %455, %456 in 1 : vector<16x240xf32>, vector<16x16xf32> -> vector<16x256xf32>
    %c7_210 = arith.constant 7 : index
    %c0_211 = arith.constant 0 : index
    %c0_212 = arith.constant 0 : index
    %458 = vector.load %arg2[%c7_210, %c0_211, %c0_212] : memref<9x1x256xf32, #tpu.memory_space<vmem>>, vector<1x1x256xf32>
    %459 = vector.shape_cast %458 : vector<1x1x256xf32> to vector<1x256xf32>
    %460 = vector.broadcast %459 : vector<1x256xf32> to vector<16x256xf32>
    %461 = arith.mulf %457, %460 : vector<16x256xf32>
    %462 = arith.truncf %461 : vector<16x256xf32> to vector<16x256xbf16>
    %463 = vector.extract_strided_slice %403 {offsets = [0, 17], sizes = [16, 239], strides = [1, 1]} : vector<16x256xf32> to vector<16x239xf32>
    %464 = vector.extract_strided_slice %403 {offsets = [0, 0], sizes = [16, 17], strides = [1, 1]} : vector<16x256xf32> to vector<16x17xf32>
    %465 = tpu.concatenate %463, %464 in 1 : vector<16x239xf32>, vector<16x17xf32> -> vector<16x256xf32>
    %c8_213 = arith.constant 8 : index
    %c0_214 = arith.constant 0 : index
    %c0_215 = arith.constant 0 : index
    %466 = vector.load %arg2[%c8_213, %c0_214, %c0_215] : memref<9x1x256xf32, #tpu.memory_space<vmem>>, vector<1x1x256xf32>
    %467 = vector.shape_cast %466 : vector<1x1x256xf32> to vector<1x256xf32>
    %468 = vector.broadcast %467 : vector<1x256xf32> to vector<16x256xf32>
    %469 = arith.mulf %465, %468 : vector<16x256xf32>
    %470 = arith.truncf %469 : vector<16x256xf32> to vector<16x256xbf16>
    %471 = tpu.concatenate %413, %421, %429, %437, %438, %446, %454, %462, %470 in 0 : vector<16x256xbf16>, vector<16x256xbf16>, vector<16x256xbf16>, vector<16x256xbf16>, vector<16x256xbf16>, vector<16x256xbf16>, vector<16x256xbf16>, vector<16x256xbf16>, vector<16x256xbf16> -> vector<144x256xbf16>
    %cst_216 = arith.constant dense<0.000000e+00> : vector<16x256xf32>
    %472 = tpu.matmul %404, %471, %cst_216 {dimension_numbers = #tpu.dot_dimension_numbers<[1], [0], [0], [1], [0, 0, 1, 1], [], []>} : vector<16x144xbf16>, vector<144x256xbf16>, vector<16x256xf32> -> vector<16x256xf32>
    %473 = vector.broadcast %405 : vector<16x1xf32> to vector<16x256xf32>
    %474 = arith.addf %472, %473 : vector<16x256xf32>
    %475 = arith.addf %474, %1 : vector<16x256xf32>
    %c0_217 = arith.constant 0 : index
    %c0_218 = arith.constant 0 : index
    %c0_219 = arith.constant 0 : index
    %476 = vector.load %arg17[%c0_217, %c0_218, %c0_219] : memref<1x16x256xf32, #tpu.memory_space<vmem>>, vector<1x16x256xf32>
    %477 = vector.shape_cast %476 : vector<1x16x256xf32> to vector<16x256xf32>
    %478 = vector.shape_cast %475 : vector<16x256xf32> to vector<1x16x256xf32>
    tpu.vector_store %arg17[%c0_217, %c0_218, %c0_219], %478 {strides = array<i32>} : memref<1x16x256xf32, #tpu.memory_space<vmem>>, vector<1x16x256xf32>,
    return
  }
  func.func @transform_0(%arg0: i32) -> (i32, i32, i32) {
    %c0_i32 = arith.constant 0 : i32
    %c0_i32_0 = arith.constant 0 : i32
    %c0_i32_1 = arith.constant 0 : i32
    return %arg0, %c0_i32, %c0_i32_0 : i32, i32, i32
  }
  func.func @transform_1(%arg0: i32) -> (i32, i32, i32) {
    %c0_i32 = arith.constant 0 : i32
    %c0_i32_0 = arith.constant 0 : i32
    %c0_i32_1 = arith.constant 0 : i32
    %c0_i32_2 = arith.constant 0 : i32
    return %c0_i32, %c0_i32_0, %c0_i32_1 : i32, i32, i32
  }
  func.func @transform_2(%arg0: i32) -> (i32, i32, i32) {
    %c0_i32 = arith.constant 0 : i32
    %c0_i32_0 = arith.constant 0 : i32
    %c0_i32_1 = arith.constant 0 : i32
    %c0_i32_2 = arith.constant 0 : i32
    return %c0_i32, %c0_i32_0, %c0_i32_1 : i32, i32, i32
  }
  func.func @transform_3(%arg0: i32) -> (i32, i32, i32) {
    %c0_i32 = arith.constant 0 : i32
    %c0_i32_0 = arith.constant 0 : i32
    %c0_i32_1 = arith.constant 0 : i32
    %c0_i32_2 = arith.constant 0 : i32
    return %c0_i32, %c0_i32_0, %c0_i32_1 : i32, i32, i32
  }
  func.func @transform_4(%arg0: i32) -> (i32, i32, i32) {
    %c0_i32 = arith.constant 0 : i32
    %c0_i32_0 = arith.constant 0 : i32
    %c0_i32_1 = arith.constant 0 : i32
    %c0_i32_2 = arith.constant 0 : i32
    return %c0_i32, %c0_i32_0, %c0_i32_1 : i32, i32, i32
  }
  func.func @transform_5(%arg0: i32) -> (i32, i32, i32) {
    %c0_i32 = arith.constant 0 : i32
    %c0_i32_0 = arith.constant 0 : i32
    %c0_i32_1 = arith.constant 0 : i32
    %c0_i32_2 = arith.constant 0 : i32
    return %c0_i32, %c0_i32_0, %c0_i32_1 : i32, i32, i32
  }
  func.func @transform_6(%arg0: i32) -> (i32, i32, i32) {
    %c0_i32 = arith.constant 0 : i32
    %c0_i32_0 = arith.constant 0 : i32
    %c0_i32_1 = arith.constant 0 : i32
    %c0_i32_2 = arith.constant 0 : i32
    return %c0_i32, %c0_i32_0, %c0_i32_1 : i32, i32, i32
  }
  func.func @transform_7(%arg0: i32) -> (i32, i32, i32) {
    %c0_i32 = arith.constant 0 : i32
    %c0_i32_0 = arith.constant 0 : i32
    %c0_i32_1 = arith.constant 0 : i32
    %c0_i32_2 = arith.constant 0 : i32
    return %c0_i32, %c0_i32_0, %c0_i32_1 : i32, i32, i32
  }
  func.func @transform_8(%arg0: i32) -> (i32, i32, i32) {
    %c0_i32 = arith.constant 0 : i32
    %c0_i32_0 = arith.constant 0 : i32
    %c0_i32_1 = arith.constant 0 : i32
    %c0_i32_2 = arith.constant 0 : i32
    return %c0_i32, %c0_i32_0, %c0_i32_1 : i32, i32, i32
  }
  func.func @transform_9(%arg0: i32) -> (i32, i32, i32) {
    %c0_i32 = arith.constant 0 : i32
    %c0_i32_0 = arith.constant 0 : i32
    %c0_i32_1 = arith.constant 0 : i32
    %c0_i32_2 = arith.constant 0 : i32
    return %c0_i32, %c0_i32_0, %c0_i32_1 : i32, i32, i32
  }
  func.func @transform_10(%arg0: i32) -> (i32, i32, i32) {
    %c0_i32 = arith.constant 0 : i32
    %c0_i32_0 = arith.constant 0 : i32
    %c0_i32_1 = arith.constant 0 : i32
    %c0_i32_2 = arith.constant 0 : i32
    return %c0_i32, %c0_i32_0, %c0_i32_1 : i32, i32, i32
  }
  func.func @transform_11(%arg0: i32) -> (i32, i32, i32) {
    %c0_i32 = arith.constant 0 : i32
    %c0_i32_0 = arith.constant 0 : i32
    %c0_i32_1 = arith.constant 0 : i32
    %c0_i32_2 = arith.constant 0 : i32
    return %c0_i32, %c0_i32_0, %c0_i32_1 : i32, i32, i32
  }
  func.func @transform_12(%arg0: i32) -> (i32, i32, i32) {
    %c0_i32 = arith.constant 0 : i32
    %c0_i32_0 = arith.constant 0 : i32
    %c0_i32_1 = arith.constant 0 : i32
    %c0_i32_2 = arith.constant 0 : i32
    return %c0_i32, %c0_i32_0, %c0_i32_1 : i32, i32, i32
  }
  func.func @transform_13(%arg0: i32) -> (i32, i32, i32) {
    %c0_i32 = arith.constant 0 : i32
    %c0_i32_0 = arith.constant 0 : i32
    %c0_i32_1 = arith.constant 0 : i32
    %c0_i32_2 = arith.constant 0 : i32
    return %c0_i32, %c0_i32_0, %c0_i32_1 : i32, i32, i32
  }
  func.func @transform_14(%arg0: i32) -> (i32, i32) {
    %c0_i32 = arith.constant 0 : i32
    %c0_i32_0 = arith.constant 0 : i32
    %c0_i32_1 = arith.constant 0 : i32
    return %c0_i32, %c0_i32_0 : i32, i32
  }
  func.func @transform_15(%arg0: i32) -> (i32, i32) {
    %c0_i32 = arith.constant 0 : i32
    %c0_i32_0 = arith.constant 0 : i32
    %c0_i32_1 = arith.constant 0 : i32
    return %c0_i32, %c0_i32_0 : i32, i32
  }
  func.func @transform_16(%arg0: i32) -> (i32, i32, i32) {
    %c0_i32 = arith.constant 0 : i32
    %c0_i32_0 = arith.constant 0 : i32
    %c0_i32_1 = arith.constant 0 : i32
    return %arg0, %c0_i32, %c0_i32_0 : i32, i32, i32
  }
}

</mosaic_0001>

<llo_original>
// kernel: tpu_custom_call.1
$region0: #{tpu_custom_call.1}
  #allocation0 [shape = 'u32[]', space=smem, size = 0x4, offset = 0x4, fixed_abs, tag = 'smem constant byte address 0x4 - core index']
  #allocation1 [shape = 'u32[144,128]{1,0:T(1,128)}', space=vmem, size = 0x12000, scoped, tag = 'internal scratch']
  %s0 = inlined_call_operand.vmem [shape: f32[2,16,256], index: 0, kind: input, shape index: {}]
  %s1 = inlined_call_operand.vmem [shape: f32[9,1,256], index: 1, kind: input, shape index: {}]
  %s2 = inlined_call_operand.vmem [shape: bf16[2,16,144], index: 2, kind: input, shape index: {}]
  %s3 = inlined_call_operand.vmem [shape: f32[2,16,1], index: 3, kind: input, shape index: {}]
  %s4 = inlined_call_operand.vmem [shape: bf16[2,16,144], index: 4, kind: input, shape index: {}]
  %s5 = inlined_call_operand.vmem [shape: f32[2,16,1], index: 5, kind: input, shape index: {}]
  %s6 = inlined_call_operand.vmem [shape: f32[2,2,16], index: 6, kind: input, shape index: {}]
  %s7 = inlined_call_operand.vmem [shape: f32[2,2,1], index: 7, kind: input, shape index: {}]
  %s8 = inlined_call_operand.vmem [shape: f32[2,16,2], index: 8, kind: input, shape index: {}]
  %s9 = inlined_call_operand.vmem [shape: f32[2,16,1], index: 9, kind: input, shape index: {}]
  %s10 = inlined_call_operand.vmem [shape: f32[2,2,16], index: 10, kind: input, shape index: {}]
  %s11 = inlined_call_operand.vmem [shape: f32[2,2,1], index: 11, kind: input, shape index: {}]
  %s12 = inlined_call_operand.vmem [shape: f32[2,2,1], index: 12, kind: input, shape index: {}]
  %s13 = inlined_call_operand.vmem [shape: f32[2,1,1], index: 13, kind: input, shape index: {}]
  %s14 = inlined_call_operand.vmem [shape: bf16[16,144], index: 14, kind: input, shape index: {}]
  %s15 = inlined_call_operand.vmem [shape: f32[16,1], index: 15, kind: input, shape index: {}]
  %s16 = inlined_call_operand.hbm [shape: f32[2,16,256], index: 16, kind: output, shape index: {}]
  %s17 = sld [smem:[#allocation0]]
  $region97: #{tpu_custom_call.1} parent=0
    _
  %s19 = ssub.s32 1, %s17
  %s20 = scalar_select 0, %s19, %s17
  $region1: #{tpu_custom_call.1} parent=0
    #allocation2 [shape = 'u8[32768]{0}', space=vmem, size = 0x8000, scoped, tag = 'output window, operand 0']
    #allocation3 [shape = 's32[2]{0}', space=sflag, size = 0x8, scoped, tag = 'scoped memory for tpu_custom_call.1']
    %21 = vsyncpa [#allocation3], 0
    %s22 = scalar_lea.sflag [#allocation3], 1
    %23 = vsyncpa %s22, 0
    loop: start=0, step=1, limit=4
    $region2: #{tpu_custom_call.1} parent=1 // loop_pre_header
      _
    $region3: #{tpu_custom_call.1} parent=1 // loop_header
      %s25 = sphi 0, %s29
      %p26 = scmp.ge.s32.totalorder %s25, 4
      %s35 = sphi 0, %s37
      %s38 = sphi 0, %s35
      %s39 = sphi 0, %s38
      %s55 = sphi 0, %s39
      %s59 = sphi 0, %s59
      %s61 = sphi 0, %s59
      %s62 = sphi 0, %s61
      %s76 = sphi 0, %s62
      %s80 = sphi 0, %s80
      %s82 = sphi 0, %s80
      %s83 = sphi 0, %s82
      %s97 = sphi 0, %s83
      %s101 = sphi 0, %s101
      %s103 = sphi 0, %s101
      %s104 = sphi 0, %s103
      %s118 = sphi 0, %s104
      %s122 = sphi 0, %s122
      %s124 = sphi 0, %s122
      %s125 = sphi 0, %s124
      %s139 = sphi 0, %s125
      %s143 = sphi 0, %s143
      %s145 = sphi 0, %s143
      %s146 = sphi 0, %s145
      %s160 = sphi 0, %s146
      %s164 = sphi 0, %s164
      %s166 = sphi 0, %s164
      %s167 = sphi 0, %s166
      %s181 = sphi 0, %s167
      %s185 = sphi 0, %s185
      %s187 = sphi 0, %s185
      %s188 = sphi 0, %s187
      %s202 = sphi 0, %s188
      %s206 = sphi 0, %s206
      %s208 = sphi 0, %s206
      %s209 = sphi 0, %s208
      %s223 = sphi 0, %s209
      %s227 = sphi 0, %s227
      %s229 = sphi 0, %s227
      %s230 = sphi 0, %s229
      %s244 = sphi 0, %s230
      %s248 = sphi 0, %s248
      %s250 = sphi 0, %s248
      %s251 = sphi 0, %s250
      %s265 = sphi 0, %s251
      %s269 = sphi 0, %s269
      %s271 = sphi 0, %s269
      %s272 = sphi 0, %s271
      %s286 = sphi 0, %s272
      %s290 = sphi 0, %s290
      %s292 = sphi 0, %s290
      %s293 = sphi 0, %s292
      %s307 = sphi 0, %s293
      %s311 = sphi 0, %s311
      %s313 = sphi 0, %s311
      %s314 = sphi 0, %s313
      %s328 = sphi 0, %s314
      %s332 = sphi 0, %s332
      %s334 = sphi 0, %s332
      %s335 = sphi 0, %s334
      %s349 = sphi 0, %s335
      %s353 = sphi 0, %s353
      %s355 = sphi 0, %s353
      %s356 = sphi 0, %s355
      %s370 = sphi 0, %s356
      %s376 = sphi 0, %s378
      %s379 = sphi 0, %s376
      %s380 = sphi 0, %s379
      %s396 = sphi 0, %s380
    $region4: #{tpu_custom_call.1} parent=1 // loop_header_branch
      %28 = sbr.rel (%p26) target = $region8
    $region5: #{tpu_custom_call.1} parent=1 // loop_body
      %s30 = ssub.s32 %s25, 1
      %s31 = ssub.s32 %s25, 2
      %s32 = sadd.s32 %s25, 1
      %s33 = ssub.s32 %s25, %s32
      %p34 = scmp.eq.s32.totalorder %s33, 0
      %s36 = sadd.s32 %s35, 1
      %s37 = scalar_select %p34, %s35, %s36
      %p40 = pneg %p34
      %p41 = scmp.eq.s32.totalorder %s25, 1
      %p42 = por %p40, %p41
      %p43 = scmp.ne.s32.totalorder %s35, %s38
      %p44 = scmp.eq.s32.totalorder %s25, 0
      %p45 = por %p43, %p44
      %p46 = scmp.ne.s32.totalorder %s35, %s38
      %p47 = scmp.eq.s32.totalorder %s30, 1
      %p48 = por %p46, %p47
      %p49 = scmp.ne.s32.totalorder %s38, %s39
      %p50 = scmp.eq.s32.totalorder %s30, 0
      %p51 = por %p49, %p50
      %p52 = scmp.ne.s32.totalorder %s38, %s39
      %p53 = scmp.eq.s32.totalorder %s31, 1
      %p54 = por %p52, %p53
      %p56 = scmp.ne.s32.totalorder %s39, %s55
      %p57 = scmp.eq.s32.totalorder %s31, 0
      %p58 = por %p56, %p57
      %s60 = sadd.s32 %s59, 1
      %p63 = scmp.eq.s32.totalorder %s25, 1
      %p64 = scmp.ne.s32.totalorder %s59, %s61
      %p65 = scmp.eq.s32.totalorder %s25, 0
      %p66 = por %p64, %p65
      %p67 = scmp.ne.s32.totalorder %s59, %s61
      %p68 = scmp.eq.s32.totalorder %s30, 1
      %p69 = por %p67, %p68
      %p70 = scmp.ne.s32.totalorder %s61, %s62
      %p71 = scmp.eq.s32.totalorder %s30, 0
      %p72 = por %p70, %p71
      %p73 = scmp.ne.s32.totalorder %s61, %s62
      %p74 = scmp.eq.s32.totalorder %s31, 1
      %p75 = por %p73, %p74
      %p77 = scmp.ne.s32.totalorder %s62, %s76
      %p78 = scmp.eq.s32.totalorder %s31, 0
      %p79 = por %p77, %p78
      %s81 = sadd.s32 %s80, 1
      %p84 = scmp.eq.s32.totalorder %s25, 1
      %p85 = scmp.ne.s32.totalorder %s80, %s82
      %p86 = scmp.eq.s32.totalorder %s25, 0
      %p87 = por %p85, %p86
      %p88 = scmp.ne.s32.totalorder %s80, %s82
      %p89 = scmp.eq.s32.totalorder %s30, 1
      %p90 = por %p88, %p89
      %p91 = scmp.ne.s32.totalorder %s82, %s83
      %p92 = scmp.eq.s32.totalorder %s30, 0
      %p93 = por %p91, %p92
      %p94 = scmp.ne.s32.totalorder %s82, %s83
      %p95 = scmp.eq.s32.totalorder %s31, 1
      %p96 = por %p94, %p95
      %p98 = scmp.ne.s32.totalorder %s83, %s97
      %p99 = scmp.eq.s32.totalorder %s31, 0
      %p100 = por %p98, %p99
      %s102 = sadd.s32 %s101, 1
      %p105 = scmp.eq.s32.totalorder %s25, 1
      %p106 = scmp.ne.s32.totalorder %s101, %s103
      %p107 = scmp.eq.s32.totalorder %s25, 0
      %p108 = por %p106, %p107
      %p109 = scmp.ne.s32.totalorder %s101, %s103
      %p110 = scmp.eq.s32.totalorder %s30, 1
      %p111 = por %p109, %p110
      %p112 = scmp.ne.s32.totalorder %s103, %s104
      %p113 = scmp.eq.s32.totalorder %s30, 0
      %p114 = por %p112, %p113
      %p115 = scmp.ne.s32.totalorder %s103, %s104
      %p116 = scmp.eq.s32.totalorder %s31, 1
      %p117 = por %p115, %p116
      %p119 = scmp.ne.s32.totalorder %s104, %s118
      %p120 = scmp.eq.s32.totalorder %s31, 0
      %p121 = por %p119, %p120
      %s123 = sadd.s32 %s122, 1
      %p126 = scmp.eq.s32.totalorder %s25, 1
      %p127 = scmp.ne.s32.totalorder %s122, %s124
      %p128 = scmp.eq.s32.totalorder %s25, 0
      %p129 = por %p127, %p128
      %p130 = scmp.ne.s32.totalorder %s122, %s124
      %p131 = scmp.eq.s32.totalorder %s30, 1
      %p132 = por %p130, %p131
      %p133 = scmp.ne.s32.totalorder %s124, %s125
      %p134 = scmp.eq.s32.totalorder %s30, 0
      %p135 = por %p133, %p134
      %p136 = scmp.ne.s32.totalorder %s124, %s125
      %p137 = scmp.eq.s32.totalorder %s31, 1
      %p138 = por %p136, %p137
      %p140 = scmp.ne.s32.totalorder %s125, %s139
      %p141 = scmp.eq.s32.totalorder %s31, 0
      %p142 = por %p140, %p141
      %s144 = sadd.s32 %s143, 1
      %p147 = scmp.eq.s32.totalorder %s25, 1
      %p148 = scmp.ne.s32.totalorder %s143, %s145
      %p149 = scmp.eq.s32.totalorder %s25, 0
      %p150 = por %p148, %p149
      %p151 = scmp.ne.s32.totalorder %s143, %s145
      %p152 = scmp.eq.s32.totalorder %s30, 1
      %p153 = por %p151, %p152
      %p154 = scmp.ne.s32.totalorder %s145, %s146
      %p155 = scmp.eq.s32.totalorder %s30, 0
      %p156 = por %p154, %p155
      %p157 = scmp.ne.s32.totalorder %s145, %s146
      %p158 = scmp.eq.s32.totalorder %s31, 1
      %p159 = por %p157, %p158
      %p161 = scmp.ne.s32.totalorder %s146, %s160
      %p162 = scmp.eq.s32.totalorder %s31, 0
      %p163 = por %p161, %p162
      %s165 = sadd.s32 %s164, 1
      %p168 = scmp.eq.s32.totalorder %s25, 1
      %p169 = scmp.ne.s32.totalorder %s164, %s166
      %p170 = scmp.eq.s32.totalorder %s25, 0
      %p171 = por %p169, %p170
      %p172 = scmp.ne.s32.totalorder %s164, %s166
      %p173 = scmp.eq.s32.totalorder %s30, 1
      %p174 = por %p172, %p173
      %p175 = scmp.ne.s32.totalorder %s166, %s167
      %p176 = scmp.eq.s32.totalorder %s30, 0
      %p177 = por %p175, %p176
      %p178 = scmp.ne.s32.totalorder %s166, %s167
      %p179 = scmp.eq.s32.totalorder %s31, 1
      %p180 = por %p178, %p179
      %p182 = scmp.ne.s32.totalorder %s167, %s181
      %p183 = scmp.eq.s32.totalorder %s31, 0
      %p184 = por %p182, %p183
      %s186 = sadd.s32 %s185, 1
      %p189 = scmp.eq.s32.totalorder %s25, 1
      %p190 = scmp.ne.s32.totalorder %s185, %s187
      %p191 = scmp.eq.s32.totalorder %s25, 0
      %p192 = por %p190, %p191
      %p193 = scmp.ne.s32.totalorder %s185, %s187
      %p194 = scmp.eq.s32.totalorder %s30, 1
      %p195 = por %p193, %p194
      %p196 = scmp.ne.s32.totalorder %s187, %s188
      %p197 = scmp.eq.s32.totalorder %s30, 0
      %p198 = por %p196, %p197
      %p199 = scmp.ne.s32.totalorder %s187, %s188
      %p200 = scmp.eq.s32.totalorder %s31, 1
      %p201 = por %p199, %p200
      %p203 = scmp.ne.s32.totalorder %s188, %s202
      %p204 = scmp.eq.s32.totalorder %s31, 0
      %p205 = por %p203, %p204
      %s207 = sadd.s32 %s206, 1
      %p210 = scmp.eq.s32.totalorder %s25, 1
      %p211 = scmp.ne.s32.totalorder %s206, %s208
      %p212 = scmp.eq.s32.totalorder %s25, 0
      %p213 = por %p211, %p212
      %p214 = scmp.ne.s32.totalorder %s206, %s208
      %p215 = scmp.eq.s32.totalorder %s30, 1
      %p216 = por %p214, %p215
      %p217 = scmp.ne.s32.totalorder %s208, %s209
      %p218 = scmp.eq.s32.totalorder %s30, 0
      %p219 = por %p217, %p218
      %p220 = scmp.ne.s32.totalorder %s208, %s209
      %p221 = scmp.eq.s32.totalorder %s31, 1
      %p222 = por %p220, %p221
      %p224 = scmp.ne.s32.totalorder %s209, %s223
      %p225 = scmp.eq.s32.totalorder %s31, 0
      %p226 = por %p224, %p225
      %s228 = sadd.s32 %s227, 1
      %p231 = scmp.eq.s32.totalorder %s25, 1
      %p232 = scmp.ne.s32.totalorder %s227, %s229
      %p233 = scmp.eq.s32.totalorder %s25, 0
      %p234 = por %p232, %p233
      %p235 = scmp.ne.s32.totalorder %s227, %s229
      %p236 = scmp.eq.s32.totalorder %s30, 1
      %p237 = por %p235, %p236
      %p238 = scmp.ne.s32.totalorder %s229, %s230
      %p239 = scmp.eq.s32.totalorder %s30, 0
      %p240 = por %p238, %p239
      %p241 = scmp.ne.s32.totalorder %s229, %s230
      %p242 = scmp.eq.s32.totalorder %s31, 1
      %p243 = por %p241, %p242
      %p245 = scmp.ne.s32.totalorder %s230, %s244
      %p246 = scmp.eq.s32.totalorder %s31, 0
      %p247 = por %p245, %p246
      %s249 = sadd.s32 %s248, 1
      %p252 = scmp.eq.s32.totalorder %s25, 1
      %p253 = scmp.ne.s32.totalorder %s248, %s250
      %p254 = scmp.eq.s32.totalorder %s25, 0
      %p255 = por %p253, %p254
      %p256 = scmp.ne.s32.totalorder %s248, %s250
      %p257 = scmp.eq.s32.totalorder %s30, 1
      %p258 = por %p256, %p257
      %p259 = scmp.ne.s32.totalorder %s250, %s251
      %p260 = scmp.eq.s32.totalorder %s30, 0
      %p261 = por %p259, %p260
      %p262 = scmp.ne.s32.totalorder %s250, %s251
      %p263 = scmp.eq.s32.totalorder %s31, 1
      %p264 = por %p262, %p263
      %p266 = scmp.ne.s32.totalorder %s251, %s265
      %p267 = scmp.eq.s32.totalorder %s31, 0
      %p268 = por %p266, %p267
      %s270 = sadd.s32 %s269, 1
      %p273 = scmp.eq.s32.totalorder %s25, 1
      %p274 = scmp.ne.s32.totalorder %s269, %s271
      %p275 = scmp.eq.s32.totalorder %s25, 0
      %p276 = por %p274, %p275
      %p277 = scmp.ne.s32.totalorder %s269, %s271
      %p278 = scmp.eq.s32.totalorder %s30, 1
      %p279 = por %p277, %p278
      %p280 = scmp.ne.s32.totalorder %s271, %s272
      %p281 = scmp.eq.s32.totalorder %s30, 0
      %p282 = por %p280, %p281
      %p283 = scmp.ne.s32.totalorder %s271, %s272
      %p284 = scmp.eq.s32.totalorder %s31, 1
      %p285 = por %p283, %p284
      %p287 = scmp.ne.s32.totalorder %s272, %s286
      %p288 = scmp.eq.s32.totalorder %s31, 0
      %p289 = por %p287, %p288
      %s291 = sadd.s32 %s290, 1
      %p294 = scmp.eq.s32.totalorder %s25, 1
      %p295 = scmp.ne.s32.totalorder %s290, %s292
      %p296 = scmp.eq.s32.totalorder %s25, 0
      %p297 = por %p295, %p296
      %p298 = scmp.ne.s32.totalorder %s290, %s292
      %p299 = scmp.eq.s32.totalorder %s30, 1
      %p300 = por %p298, %p299
      %p301 = scmp.ne.s32.totalorder %s292, %s293
      %p302 = scmp.eq.s32.totalorder %s30, 0
      %p303 = por %p301, %p302
      %p304 = scmp.ne.s32.totalorder %s292, %s293
      %p305 = scmp.eq.s32.totalorder %s31, 1
      %p306 = por %p304, %p305
      %p308 = scmp.ne.s32.totalorder %s293, %s307
      %p309 = scmp.eq.s32.totalorder %s31, 0
      %p310 = por %p308, %p309
      %s312 = sadd.s32 %s311, 1
      %p315 = scmp.eq.s32.totalorder %s25, 1
      %p316 = scmp.ne.s32.totalorder %s311, %s313
      %p317 = scmp.eq.s32.totalorder %s25, 0
      %p318 = por %p316, %p317
      %p319 = scmp.ne.s32.totalorder %s311, %s313
      %p320 = scmp.eq.s32.totalorder %s30, 1
      %p321 = por %p319, %p320
      %p322 = scmp.ne.s32.totalorder %s313, %s314
      %p323 = scmp.eq.s32.totalorder %s30, 0
      %p324 = por %p322, %p323
      %p325 = scmp.ne.s32.totalorder %s313, %s314
      %p326 = scmp.eq.s32.totalorder %s31, 1
      %p327 = por %p325, %p326
      %p329 = scmp.ne.s32.totalorder %s314, %s328
      %p330 = scmp.eq.s32.totalorder %s31, 0
      %p331 = por %p329, %p330
      %s333 = sadd.s32 %s332, 1
      %p336 = scmp.eq.s32.totalorder %s25, 1
      %p337 = scmp.ne.s32.totalorder %s332, %s334
      %p338 = scmp.eq.s32.totalorder %s25, 0
      %p339 = por %p337, %p338
      %p340 = scmp.ne.s32.totalorder %s332, %s334
      %p341 = scmp.eq.s32.totalorder %s30, 1
      %p342 = por %p340, %p341
      %p343 = scmp.ne.s32.totalorder %s334, %s335
      %p344 = scmp.eq.s32.totalorder %s30, 0
      %p345 = por %p343, %p344
      %p346 = scmp.ne.s32.totalorder %s334, %s335
      %p347 = scmp.eq.s32.totalorder %s31, 1
      %p348 = por %p346, %p347
      %p350 = scmp.ne.s32.totalorder %s335, %s349
      %p351 = scmp.eq.s32.totalorder %s31, 0
      %p352 = por %p350, %p351
      %s354 = sadd.s32 %s353, 1
      %p357 = scmp.eq.s32.totalorder %s25, 1
      %p358 = scmp.ne.s32.totalorder %s353, %s355
      %p359 = scmp.eq.s32.totalorder %s25, 0
      %p360 = por %p358, %p359
      %p361 = scmp.ne.s32.totalorder %s353, %s355
      %p362 = scmp.eq.s32.totalorder %s30, 1
      %p363 = por %p361, %p362
      %p364 = scmp.ne.s32.totalorder %s355, %s356
      %p365 = scmp.eq.s32.totalorder %s30, 0
      %p366 = por %p364, %p365
      %p367 = scmp.ne.s32.totalorder %s355, %s356
      %p368 = scmp.eq.s32.totalorder %s31, 1
      %p369 = por %p367, %p368
      %p371 = scmp.ne.s32.totalorder %s356, %s370
      %p372 = scmp.eq.s32.totalorder %s31, 0
      %p373 = por %p371, %p372
      %s374 = ssub.s32 %s25, %s32
      %p375 = scmp.eq.s32.totalorder %s374, 0
      %s377 = sadd.s32 %s376, 1
      %s378 = scalar_select %p375, %s376, %s377
      %p381 = pneg %p375
      %p382 = scmp.eq.s32.totalorder %s25, 1
      %p383 = por %p381, %p382
      %p384 = scmp.ne.s32.totalorder %s376, %s379
      %p385 = scmp.eq.s32.totalorder %s25, 0
      %p386 = por %p384, %p385
      %p387 = scmp.ne.s32.totalorder %s376, %s379
      %p388 = scmp.eq.s32.totalorder %s30, 1
      %p389 = por %p387, %p388
      %p390 = scmp.ne.s32.totalorder %s379, %s380
      %p391 = scmp.eq.s32.totalorder %s30, 0
      %p392 = por %p390, %p391
      %p393 = scmp.ne.s32.totalorder %s379, %s380
      %p394 = scmp.eq.s32.totalorder %s31, 1
      %p395 = por %p393, %p394
      %p397 = scmp.ne.s32.totalorder %s380, %s396
      %p398 = scmp.eq.s32.totalorder %s31, 0
      %p399 = por %p397, %p398
      %p400 = scmp.le.s32.totalorder 1, %s25
      %p401 = scmp.lt.s32.totalorder %s25, 3
      %p402 = pnand %p400, %p401
      %p403 = pneg %p402
      // Predicated region
      $region9: #{tpu_custom_call.1} parent=5 // pred_check
        _
      $region10: #{tpu_custom_call.1} parent=5 // pred_check_branch
        %405 = sbr.rel (%p402) target = $region12
      $region11: #{tpu_custom_call.1} parent=5 // pred_region
        %s406 = ssub.s32 %s25, 1
        // Predicated region
        $region13: #{tpu_custom_call.1} parent=11 // pred_check
          %p407 = pneg %p72
        $region14: #{tpu_custom_call.1} parent=11 // pred_check_branch
          %409 = sbr.rel (%p407) target = $region16
        $region15: #{tpu_custom_call.1} parent=11 // pred_region
          _
        $region16: #{tpu_custom_call.1} parent=11 // pred_fallthru
          _
        // Predicated region
        $region17: #{tpu_custom_call.1} parent=11 // pred_check
          %p410 = pneg %p93
        $region18: #{tpu_custom_call.1} parent=11 // pred_check_branch
          %412 = sbr.rel (%p410) target = $region20
        $region19: #{tpu_custom_call.1} parent=11 // pred_region
          _
        $region20: #{tpu_custom_call.1} parent=11 // pred_fallthru
          _
        // Predicated region
        $region21: #{tpu_custom_call.1} parent=11 // pred_check
          %p413 = pneg %p114
        $region22: #{tpu_custom_call.1} parent=11 // pred_check_branch
          %415 = sbr.rel (%p413) target = $region24
        $region23: #{tpu_custom_call.1} parent=11 // pred_region
          _
        $region24: #{tpu_custom_call.1} parent=11 // pred_fallthru
          _
        // Predicated region
        $region25: #{tpu_custom_call.1} parent=11 // pred_check
          %p416 = pneg %p135
        $region26: #{tpu_custom_call.1} parent=11 // pred_check_branch
          %418 = sbr.rel (%p416) target = $region28
        $region27: #{tpu_custom_call.1} parent=11 // pred_region
          _
        $region28: #{tpu_custom_call.1} parent=11 // pred_fallthru
          _
        // Predicated region
        $region29: #{tpu_custom_call.1} parent=11 // pred_check
          %p419 = pneg %p156
        $region30: #{tpu_custom_call.1} parent=11 // pred_check_branch
          %421 = sbr.rel (%p419) target = $region32
        $region31: #{tpu_custom_call.1} parent=11 // pred_region
          _
        $region32: #{tpu_custom_call.1} parent=11 // pred_fallthru
          _
        // Predicated region
        $region33: #{tpu_custom_call.1} parent=11 // pred_check
          %p422 = pneg %p177
        $region34: #{tpu_custom_call.1} parent=11 // pred_check_branch
          %424 = sbr.rel (%p422) target = $region36
        $region35: #{tpu_custom_call.1} parent=11 // pred_region
          _
        $region36: #{tpu_custom_call.1} parent=11 // pred_fallthru
          _
        // Predicated region
        $region37: #{tpu_custom_call.1} parent=11 // pred_check
          %p425 = pneg %p198
        $region38: #{tpu_custom_call.1} parent=11 // pred_check_branch
          %427 = sbr.rel (%p425) target = $region40
        $region39: #{tpu_custom_call.1} parent=11 // pred_region
          _
        $region40: #{tpu_custom_call.1} parent=11 // pred_fallthru
          _
        // Predicated region
        $region41: #{tpu_custom_call.1} parent=11 // pred_check
          %p428 = pneg %p219
        $region42: #{tpu_custom_call.1} parent=11 // pred_check_branch
          %430 = sbr.rel (%p428) target = $region44
        $region43: #{tpu_custom_call.1} parent=11 // pred_region
          _
        $region44: #{tpu_custom_call.1} parent=11 // pred_fallthru
          _
        // Predicated region
        $region45: #{tpu_custom_call.1} parent=11 // pred_check
          %p431 = pneg %p240
        $region46: #{tpu_custom_call.1} parent=11 // pred_check_branch
          %433 = sbr.rel (%p431) target = $region48
        $region47: #{tpu_custom_call.1} parent=11 // pred_region
          _
        $region48: #{tpu_custom_call.1} parent=11 // pred_fallthru
          _
        // Predicated region
        $region49: #{tpu_custom_call.1} parent=11 // pred_check
          %p434 = pneg %p261
        $region50: #{tpu_custom_call.1} parent=11 // pred_check_branch
          %436 = sbr.rel (%p434) target = $region52
        $region51: #{tpu_custom_call.1} parent=11 // pred_region
          _
        $region52: #{tpu_custom_call.1} parent=11 // pred_fallthru
          _
        // Predicated region
        $region53: #{tpu_custom_call.1} parent=11 // pred_check
          %p437 = pneg %p282
        $region54: #{tpu_custom_call.1} parent=11 // pred_check_branch
          %439 = sbr.rel (%p437) target = $region56
        $region55: #{tpu_custom_call.1} parent=11 // pred_region
          _
        $region56: #{tpu_custom_call.1} parent=11 // pred_fallthru
          _
        // Predicated region
        $region57: #{tpu_custom_call.1} parent=11 // pred_check
          %p440 = pneg %p303
        $region58: #{tpu_custom_call.1} parent=11 // pred_check_branch
          %442 = sbr.rel (%p440) target = $region60
        $region59: #{tpu_custom_call.1} parent=11 // pred_region
          _
        $region60: #{tpu_custom_call.1} parent=11 // pred_fallthru
          _
        // Predicated region
        $region61: #{tpu_custom_call.1} parent=11 // pred_check
          %p443 = pneg %p324
        $region62: #{tpu_custom_call.1} parent=11 // pred_check_branch
          %445 = sbr.rel (%p443) target = $region64
        $region63: #{tpu_custom_call.1} parent=11 // pred_region
          _
        $region64: #{tpu_custom_call.1} parent=11 // pred_fallthru
          _
        // Predicated region
        $region65: #{tpu_custom_call.1} parent=11 // pred_check
          %p446 = pneg %p345
        $region66: #{tpu_custom_call.1} parent=11 // pred_check_branch
          %448 = sbr.rel (%p446) target = $region68
        $region67: #{tpu_custom_call.1} parent=11 // pred_region
          _
        $region68: #{tpu_custom_call.1} parent=11 // pred_fallthru
          _
        // Predicated region
        $region69: #{tpu_custom_call.1} parent=11 // pred_check
          %p449 = pneg %p366
        $region70: #{tpu_custom_call.1} parent=11 // pred_check_branch
          %451 = sbr.rel (%p449) target = $region72
        $region71: #{tpu_custom_call.1} parent=11 // pred_region
          _
        $region72: #{tpu_custom_call.1} parent=11 // pred_fallthru
          _
      $region12: #{tpu_custom_call.1} parent=5 // pred_fallthru
        _
      %p452 = scmp.lt.s32.totalorder %s25, 2
      // Predicated region
      $region73: #{tpu_custom_call.1} parent=5 // pred_check
        %p453 = pneg %p452
      $region74: #{tpu_custom_call.1} parent=5 // pred_check_branch
        %455 = sbr.rel (%p453) target = $region76
      $region75: #{tpu_custom_call.1} parent=5 // pred_region
        // Predicated region
        $region77: #{tpu_custom_call.1} parent=75 // pred_check
          %p456 = pneg %p45
        $region78: #{tpu_custom_call.1} parent=75 // pred_check_branch
          %458 = sbr.rel (%p456) target = $region80
        $region79: #{tpu_custom_call.1} parent=75 // pred_region
          %p459 = scmp.lt.s32.totalorder %s25, 1
          %s460 = scalar_select %p459, %s25, 1
          %s461 = smul.addr %s460, 4
          %s462 = smul.addr %s461, 8
          %s463 = scalar_lea.vmem %s0, %s462
        $region80: #{tpu_custom_call.1} parent=75 // pred_fallthru
          _
      $region76: #{tpu_custom_call.1} parent=5 // pred_fallthru
        _
      %p464 = scmp.le.s32.totalorder 1, %s25
      %p465 = scmp.lt.s32.totalorder %s25, 3
      %p466 = pnand %p464, %p465
      %p467 = pneg %p466
      // Predicated region
      $region81: #{tpu_custom_call.1} parent=5 // pred_check
        _
      $region82: #{tpu_custom_call.1} parent=5 // pred_check_branch
        %469 = sbr.rel (%p466) target = $region84
      $region83: #{tpu_custom_call.1} parent=5 // pred_region
        %s470 = ssub.s32 %s25, 1
        %p471 = scmp.lt.s32.totalorder %s30, 1
        %s472 = scalar_select %p471, %s30, 1
        %s473 = smul.addr %s472, 4
        %s474 = smul.addr %s473, 8
        %s475 = scalar_lea.vmem %s0, %s474
        %p476 = pneg %p51
        %p477 = pneg %p48
        %p478 = pneg %p72
        %p479 = pneg %p69
        %p480 = pneg %p93
        %p481 = pneg %p90
        %p482 = pneg %p114
        %p483 = pneg %p111
        %p484 = pneg %p135
        %p485 = pneg %p132
        %p486 = pneg %p156
        %p487 = pneg %p153
        %p488 = pneg %p177
        %p489 = pneg %p174
        %p490 = pneg %p198
        %p491 = pneg %p195
        %p492 = pneg %p219
        %p493 = pneg %p216
        %p494 = pneg %p240
        %p495 = pneg %p237
        %p496 = pneg %p261
        %p497 = pneg %p258
        %p498 = pneg %p282
        %p499 = pneg %p279
        %p500 = pneg %p303
        %p501 = pneg %p300
        %p502 = pneg %p324
        %p503 = pneg %p321
        %p504 = pneg %p345
        %p505 = pneg %p342
        %p506 = pneg %p366
        %p507 = pneg %p363
        %p508 = pneg %p392
        %p509 = pneg %p389
        %s510 = sand.u32 %s379, 1
        %s511 = scalar_lea.sflag [#allocation3], %s510
        %s512 = sand.u32 %s379, 1
        %s513 = smul.addr %s512, 32
        %s514 = scalar_lea.vmem [#allocation2], %s513
        %p515 = scmp.lt.s32.totalorder %s30, 1
        %s516 = scalar_select %p515, %s30, 1
        %s517 = smul.addr %s516, 4
        %s518 = smul.addr %s517, 8
        %s519 = scalar_lea.vmem %s0, %s518
        %v521 = vld [vmem:[%s519] sm:$0xff]
        %v522 = vld [vmem:[%s519 + $0x8] sm:$0xff]
        %v523 = vld [vmem:[%s519 + $0x10] sm:$0xff]
        %v524 = vld [vmem:[%s519 + $0x18] sm:$0xff]
        %v525 = vld [vmem:[%s2] sm:$0xff]
        %v526 = vld [vmem:[%s2 + $0x8] sm:$0xff]
        %v527 = vld [vmem:[%s3] sm:$0xff]
        %v528 = vld [vmem:[%s3 + $0x8] sm:$0xff]
        %531 = vrot.lane.b32.xlu0 %v522, 17
        %v532 = vpop.permute.xlu0 %531
        %533 = vrot.lane.b32.xlu0 %v524, 17
        %v534 = vpop.permute.xlu0 %533
        %539 = vrot.lane.b32.xlu0 %v521, 17
        %v540 = vpop.permute.xlu0 %539
        %541 = vrot.lane.b32.xlu0 %v523, 17
        %v542 = vpop.permute.xlu0 %541
        %vm543 = vcmask 138240
        %v544 = vsel %vm543, %v540, %v532
        %v545 = vsel %vm543, %v542, %v534
        %v550 = vsel %vm543, %v532, %v540
        %v551 = vsel %vm543, %v534, %v542
        %v552 = vld [vmem:[%s1] sm:$0x3]
        %v554 = vlaneseq
        %v555 = vshrl.u32 %v554, 7
        %v556 = vsub.s32 0, %v555
        %v557 = vrot.slane %v552, %v556
        %v558 = vlaneseq
        %v559 = vshrl.u32 %v558, 7
        %v560 = vsub.s32 1, %v559
        %v561 = vrot.slane %v552, %v560
        %v564 = vmul.f32 %v550, %v557
        %v565 = vmul.f32 %v544, %v561
        %v566 = vmul.f32 %v551, %v557
        %v567 = vmul.f32 %v545, %v561
        %v568 = vpack.c.bf16 %v566, %v564
        %v569 = vpack.c.bf16 %v567, %v565
        %570 = vrot.lane.b32.xlu0 %v522, 16
        %v571 = vpop.permute.xlu0 %570
        %572 = vrot.lane.b32.xlu0 %v524, 16
        %v573 = vpop.permute.xlu0 %572
        %576 = vrot.lane.b32.xlu0 %v521, 16
        %v577 = vpop.permute.xlu0 %576
        %578 = vrot.lane.b32.xlu0 %v523, 16
        %v579 = vpop.permute.xlu0 %578
        %vm580 = vcmask 130048
        %v581 = vsel %vm580, %v577, %v571
        %v582 = vsel %vm580, %v579, %v573
        %v587 = vsel %vm580, %v571, %v577
        %v588 = vsel %vm580, %v573, %v579
        %s589 = scalar_lea.vmem %s1, 2
        %v590 = vld [vmem:[%s589] sm:$0x3]
        %v592 = vlaneseq
        %v593 = vshrl.u32 %v592, 7
        %v594 = vsub.s32 0, %v593
        %v595 = vrot.slane %v590, %v594
        %v596 = vlaneseq
        %v597 = vshrl.u32 %v596, 7
        %v598 = vsub.s32 1, %v597
        %v599 = vrot.slane %v590, %v598
        %v602 = vmul.f32 %v587, %v595
        %v603 = vmul.f32 %v581, %v599
        %v604 = vmul.f32 %v588, %v595
        %v605 = vmul.f32 %v582, %v599
        %v606 = vpack.c.bf16 %v604, %v602
        %v607 = vpack.c.bf16 %v605, %v603
        %608 = vrot.lane.b32.xlu0 %v522, 15
        %v609 = vpop.permute.xlu0 %608
        %610 = vrot.lane.b32.xlu0 %v524, 15
        %v611 = vpop.permute.xlu0 %610
        %614 = vrot.lane.b32.xlu0 %v521, 15
        %v615 = vpop.permute.xlu0 %614
        %616 = vrot.lane.b32.xlu0 %v523, 15
        %v617 = vpop.permute.xlu0 %616
        %vm618 = vcmask 121856
        %v619 = vsel %vm618, %v615, %v609
        %v620 = vsel %vm618, %v617, %v611
        %v625 = vsel %vm618, %v609, %v615
        %v626 = vsel %vm618, %v611, %v617
        %s627 = scalar_lea.vmem %s1, 4
        %v628 = vld [vmem:[%s627] sm:$0x3]
        %v630 = vlaneseq
        %v631 = vshrl.u32 %v630, 7
        %v632 = vsub.s32 0, %v631
        %v633 = vrot.slane %v628, %v632
        %v634 = vlaneseq
        %v635 = vshrl.u32 %v634, 7
        %v636 = vsub.s32 1, %v635
        %v637 = vrot.slane %v628, %v636
        %v640 = vmul.f32 %v625, %v633
        %v641 = vmul.f32 %v619, %v637
        %v642 = vmul.f32 %v626, %v633
        %v643 = vmul.f32 %v620, %v637
        %v644 = vpack.c.bf16 %v642, %v640
        %v645 = vpack.c.bf16 %v643, %v641
        %646 = vrot.lane.b32.xlu0 %v522, 1
        %v647 = vpop.permute.xlu0 %646
        %648 = vrot.lane.b32.xlu0 %v524, 1
        %v649 = vpop.permute.xlu0 %648
        %652 = vrot.lane.b32.xlu0 %v521, 1
        %v653 = vpop.permute.xlu0 %652
        %654 = vrot.lane.b32.xlu0 %v523, 1
        %v655 = vpop.permute.xlu0 %654
        %vm656 = vcmask 7168
        %v657 = vsel %vm656, %v653, %v647
        %v658 = vsel %vm656, %v655, %v649
        %v663 = vsel %vm656, %v647, %v653
        %v664 = vsel %vm656, %v649, %v655
        %s665 = scalar_lea.vmem %s1, 6
        %v666 = vld [vmem:[%s665] sm:$0x3]
        %v668 = vlaneseq
        %v669 = vshrl.u32 %v668, 7
        %v670 = vsub.s32 0, %v669
        %v671 = vrot.slane %v666, %v670
        %v672 = vlaneseq
        %v673 = vshrl.u32 %v672, 7
        %v674 = vsub.s32 1, %v673
        %v675 = vrot.slane %v666, %v674
        %v678 = vmul.f32 %v663, %v671
        %v679 = vmul.f32 %v657, %v675
        %v680 = vmul.f32 %v664, %v671
        %v681 = vmul.f32 %v658, %v675
        %v682 = vpack.c.bf16 %v680, %v678
        %v683 = vpack.c.bf16 %v681, %v679
        %v684 = vpack.c.bf16 %v523, %v521
        %v685 = vpack.c.bf16 %v524, %v522
        %686 = vrot.lane.b32.xlu0 %v521, 127
        %v687 = vpop.permute.xlu0 %686
        %688 = vrot.lane.b32.xlu0 %v522, 127
        %v689 = vpop.permute.xlu0 %688
        %690 = vrot.lane.b32.xlu0 %v523, 127
        %v691 = vpop.permute.xlu0 %690
        %692 = vrot.lane.b32.xlu0 %v524, 127
        %v693 = vpop.permute.xlu0 %692
        %vm694 = vcmask 1039360
        %v695 = vsel %vm694, %v687, %v689
        %v696 = vsel %vm694, %v691, %v693
        %v703 = vsel %vm694, %v689, %v687
        %v704 = vsel %vm694, %v693, %v691
        %s705 = scalar_lea.vmem %s1, 10
        %v706 = vld [vmem:[%s705] sm:$0x3]
        %v708 = vlaneseq
        %v709 = vshrl.u32 %v708, 7
        %v710 = vsub.s32 0, %v709
        %v711 = vrot.slane %v706, %v710
        %v712 = vlaneseq
        %v713 = vshrl.u32 %v712, 7
        %v714 = vsub.s32 1, %v713
        %v715 = vrot.slane %v706, %v714
        %v718 = vmul.f32 %v695, %v711
        %v719 = vmul.f32 %v703, %v715
        %v720 = vmul.f32 %v696, %v711
        %v721 = vmul.f32 %v704, %v715
        %v722 = vpack.c.bf16 %v720, %v718
        %v723 = vpack.c.bf16 %v721, %v719
        %724 = vrot.lane.b32.xlu0 %v521, 113
        %v725 = vpop.permute.xlu0 %724
        %726 = vrot.lane.b32.xlu0 %v522, 113
        %v727 = vpop.permute.xlu0 %726
        %728 = vrot.lane.b32.xlu0 %v523, 113
        %v729 = vpop.permute.xlu0 %728
        %730 = vrot.lane.b32.xlu0 %v524, 113
        %v731 = vpop.permute.xlu0 %730
        %vm732 = vcmask 924672
        %v733 = vsel %vm732, %v725, %v727
        %v734 = vsel %vm732, %v729, %v731
        %v741 = vsel %vm732, %v727, %v725
        %v742 = vsel %vm732, %v731, %v729
        %s743 = scalar_lea.vmem %s1, 12
        %v744 = vld [vmem:[%s743] sm:$0x3]
        %v746 = vlaneseq
        %v747 = vshrl.u32 %v746, 7
        %v748 = vsub.s32 0, %v747
        %v749 = vrot.slane %v744, %v748
        %v750 = vlaneseq
        %v751 = vshrl.u32 %v750, 7
        %v752 = vsub.s32 1, %v751
        %v753 = vrot.slane %v744, %v752
        %v756 = vmul.f32 %v733, %v749
        %v757 = vmul.f32 %v741, %v753
        %v758 = vmul.f32 %v734, %v749
        %v759 = vmul.f32 %v742, %v753
        %v760 = vpack.c.bf16 %v758, %v756
        %v761 = vpack.c.bf16 %v759, %v757
        %762 = vrot.lane.b32.xlu0 %v521, 112
        %v763 = vpop.permute.xlu0 %762
        %764 = vrot.lane.b32.xlu0 %v522, 112
        %v765 = vpop.permute.xlu0 %764
        %766 = vrot.lane.b32.xlu0 %v523, 112
        %v767 = vpop.permute.xlu0 %766
        %768 = vrot.lane.b32.xlu0 %v524, 112
        %v769 = vpop.permute.xlu0 %768
        %vm770 = vcmask 916480
        %v771 = vsel %vm770, %v763, %v765
        %v772 = vsel %vm770, %v767, %v769
        %v779 = vsel %vm770, %v765, %v763
        %v780 = vsel %vm770, %v769, %v767
        %s781 = scalar_lea.vmem %s1, 14
        %v782 = vld [vmem:[%s781] sm:$0x3]
        %v784 = vlaneseq
        %v785 = vshrl.u32 %v784, 7
        %v786 = vsub.s32 0, %v785
        %v787 = vrot.slane %v782, %v786
        %v788 = vlaneseq
        %v789 = vshrl.u32 %v788, 7
        %v790 = vsub.s32 1, %v789
        %v791 = vrot.slane %v782, %v790
        %v794 = vmul.f32 %v771, %v787
        %v795 = vmul.f32 %v779, %v791
        %v796 = vmul.f32 %v772, %v787
        %v797 = vmul.f32 %v780, %v791
        %v798 = vpack.c.bf16 %v796, %v794
        %v799 = vpack.c.bf16 %v797, %v795
        %800 = vrot.lane.b32.xlu0 %v521, 111
        %v801 = vpop.permute.xlu0 %800
        %802 = vrot.lane.b32.xlu0 %v522, 111
        %v803 = vpop.permute.xlu0 %802
        %804 = vrot.lane.b32.xlu0 %v523, 111
        %v805 = vpop.permute.xlu0 %804
        %806 = vrot.lane.b32.xlu0 %v524, 111
        %v807 = vpop.permute.xlu0 %806
        %vm808 = vcmask 908288
        %v809 = vsel %vm808, %v801, %v803
        %v810 = vsel %vm808, %v805, %v807
        %v817 = vsel %vm808, %v803, %v801
        %v818 = vsel %vm808, %v807, %v805
        %s819 = scalar_lea.vmem %s1, 16
        %v820 = vld [vmem:[%s819] sm:$0x3]
        %v822 = vlaneseq
        %v823 = vshrl.u32 %v822, 7
        %v824 = vsub.s32 0, %v823
        %v825 = vrot.slane %v820, %v824
        %v826 = vlaneseq
        %v827 = vshrl.u32 %v826, 7
        %v828 = vsub.s32 1, %v827
        %v829 = vrot.slane %v820, %v828
        %v832 = vmul.f32 %v809, %v825
        %v833 = vmul.f32 %v817, %v829
        %v834 = vmul.f32 %v810, %v825
        %v835 = vmul.f32 %v818, %v829
        %v836 = vpack.c.bf16 %v834, %v832
        %v837 = vpack.c.bf16 %v835, %v833
        %839 = vset.pattern.permute.xlu0 0
        %840 = vperm.xlu0 %839, %v527
        %v841 = vpop.permute.xlu0 %840
        %844 = vset.pattern.permute.xlu0 0
        %845 = vperm.xlu0 %844, %v528
        %v846 = vpop.permute.xlu0 %845
        %v850 = vunpack.c.l.b16 %v525
        %v851 = vunpack.c.h.b16 %v525
        %v852 = vunpack.c.l.b16 %v526
        %v853 = vunpack.c.h.b16 %v526
        %v854 = vpack.c.b16 %v852, %v850
        %v855 = vpack.c.b16 %v853, %v851
        %v858 = vsel %vm580, %v855, 0
        %860 = vmatprep.subr.bf16.mxu0 %v569
        %861 = vmatpush1.bf16.msra.mxu0 %v568
        %862 = vmatprep.subr.bf16.mxu0 %v607
        %863 = vmatpush1.bf16.msra.mxu0 %v606
        %864 = vmatprep.subr.bf16.mxu0 %v645
        %865 = vmatpush1.bf16.msra.mxu0 %v644
        %866 = vmatprep.subr.bf16.mxu0 %v683
        %867 = vmatpush1.bf16.msra.mxu0 %v682
        %868 = vmatprep.subr.bf16.mxu0 %v685
        %869 = vmatpush1.bf16.msra.mxu0 %v684
        %870 = vmatprep.subr.bf16.mxu0 %v723
        %871 = vmatpush1.bf16.msra.mxu0 %v722
        %872 = vmatprep.subr.bf16.mxu0 %v761
        %873 = vmatpush1.bf16.msra.mxu0 %v760
        %874 = vmatprep.subr.bf16.mxu0 %v799
        %875 = vmatpush1.bf16.msra.mxu0 %v798
        %876 = vmatprep.subr.bf16.mxu0 %v837
        %877 = vmatpush1.bf16.msra.mxu0 %v836
        %878 = vmatprep.subr.bf16.mxu0 0
        %879 = vmatpush1.bf16.msra.mxu0 0
        %880 = vmatprep.subr.bf16.mxu0 0
        %881 = vmatpush1.bf16.msra.mxu0 0
        %882 = vmatprep.subr.bf16.mxu0 0
        %883 = vmatpush1.bf16.msra.mxu0 0
        %884 = vmatprep.subr.bf16.mxu0 0
        %885 = vmatpush1.bf16.msra.mxu0 0
        %886 = vmatprep.subr.bf16.mxu0 0
        %887 = vmatpush1.bf16.msra.mxu0 0
        %888 = vmatprep.subr.bf16.mxu0 0
        %889 = vmatpush1.bf16.msra.mxu0 0
        %890 = vmatprep.subr.bf16.mxu0 0
        %891 = vmatpush1.bf16.msra.mxu0 0
        %892 = vmatprep.mubr.bf16.mxu0 %v858
        %893 = vmatmul.mubr.bf16.gmra.mrb[0].mxu0 %v854
        %v894 = vpop.f32.mrb[0].mxu0
        %v895 = vadd.f32 %v841, %v894
        %v896 = vpop.f32.mrb[0].mxu0
        %v897 = vadd.f32 %v841, %v896
        %v898 = vpop.f32.mrb[0].mxu0
        %v899 = vadd.f32 %v846, %v898
        %v900 = vpop.f32.mrb[0].mxu0
        %v901 = vadd.f32 %v846, %v900
        %902 = vdwg.mxu0
        %v903 = vmax.f32 %v895, 0.0
        %v904 = vmax.f32 %v897, 0.0
        %v905 = vmax.f32 %v899, 0.0
        %v906 = vmax.f32 %v901, 0.0
        %v907 = vadd.f32 %v903, %v521
        %v908 = vadd.f32 %v904, %v522
        %v909 = vadd.f32 %v905, %v523
        %v910 = vadd.f32 %v906, %v524
        %v911 = vld [vmem:[%s4] sm:$0xff]
        %v912 = vld [vmem:[%s4 + $0x8] sm:$0xff]
        %v913 = vld [vmem:[%s5] sm:$0xff]
        %v914 = vld [vmem:[%s5 + $0x8] sm:$0xff]
        %917 = vrot.lane.b32.xlu0 %v908, 17
        %v918 = vpop.permute.xlu0 %917
        %919 = vrot.lane.b32.xlu0 %v910, 17
        %v920 = vpop.permute.xlu0 %919
        %925 = vrot.lane.b32.xlu0 %v907, 17
        %v926 = vpop.permute.xlu0 %925
        %927 = vrot.lane.b32.xlu0 %v909, 17
        %v928 = vpop.permute.xlu0 %927
        %v929 = vsel %vm543, %v926, %v918
        %v930 = vsel %vm543, %v928, %v920
        %v935 = vsel %vm543, %v918, %v926
        %v936 = vsel %vm543, %v920, %v928
        %v937 = vmul.f32 %v935, %v557
        %v938 = vmul.f32 %v929, %v561
        %v939 = vmul.f32 %v936, %v557
        %v940 = vmul.f32 %v930, %v561
        %v941 = vpack.c.bf16 %v939, %v937
        %v942 = vpack.c.bf16 %v940, %v938
        %943 = vrot.lane.b32.xlu0 %v908, 16
        %v944 = vpop.permute.xlu0 %943
        %945 = vrot.lane.b32.xlu0 %v910, 16
        %v946 = vpop.permute.xlu0 %945
        %949 = vrot.lane.b32.xlu0 %v907, 16
        %v950 = vpop.permute.xlu0 %949
        %951 = vrot.lane.b32.xlu0 %v909, 16
        %v952 = vpop.permute.xlu0 %951
        %v953 = vsel %vm580, %v950, %v944
        %v954 = vsel %vm580, %v952, %v946
        %v959 = vsel %vm580, %v944, %v950
        %v960 = vsel %vm580, %v946, %v952
        %v961 = vmul.f32 %v959, %v595
        %v962 = vmul.f32 %v953, %v599
        %v963 = vmul.f32 %v960, %v595
        %v964 = vmul.f32 %v954, %v599
        %v965 = vpack.c.bf16 %v963, %v961
        %v966 = vpack.c.bf16 %v964, %v962
        %967 = vrot.lane.b32.xlu0 %v908, 15
        %v968 = vpop.permute.xlu0 %967
        %969 = vrot.lane.b32.xlu0 %v910, 15
        %v970 = vpop.permute.xlu0 %969
        %973 = vrot.lane.b32.xlu0 %v907, 15
        %v974 = vpop.permute.xlu0 %973
        %975 = vrot.lane.b32.xlu0 %v909, 15
        %v976 = vpop.permute.xlu0 %975
        %v977 = vsel %vm618, %v974, %v968
        %v978 = vsel %vm618, %v976, %v970
        %v983 = vsel %vm618, %v968, %v974
        %v984 = vsel %vm618, %v970, %v976
        %v985 = vmul.f32 %v983, %v633
        %v986 = vmul.f32 %v977, %v637
        %v987 = vmul.f32 %v984, %v633
        %v988 = vmul.f32 %v978, %v637
        %v989 = vpack.c.bf16 %v987, %v985
        %v990 = vpack.c.bf16 %v988, %v986
        %991 = vrot.lane.b32.xlu0 %v908, 1
        %v992 = vpop.permute.xlu0 %991
        %993 = vrot.lane.b32.xlu0 %v910, 1
        %v994 = vpop.permute.xlu0 %993
        %997 = vrot.lane.b32.xlu0 %v907, 1
        %v998 = vpop.permute.xlu0 %997
        %999 = vrot.lane.b32.xlu0 %v909, 1
        %v1000 = vpop.permute.xlu0 %999
        %v1001 = vsel %vm656, %v998, %v992
        %v1002 = vsel %vm656, %v1000, %v994
        %v1007 = vsel %vm656, %v992, %v998
        %v1008 = vsel %vm656, %v994, %v1000
        %v1009 = vmul.f32 %v1007, %v671
        %v1010 = vmul.f32 %v1001, %v675
        %v1011 = vmul.f32 %v1008, %v671
        %v1012 = vmul.f32 %v1002, %v675
        %v1013 = vpack.c.bf16 %v1011, %v1009
        %v1014 = vpack.c.bf16 %v1012, %v1010
        %v1015 = vpack.c.bf16 %v909, %v907
        %v1016 = vpack.c.bf16 %v910, %v908
        %1017 = vrot.lane.b32.xlu0 %v907, 127
        %v1018 = vpop.permute.xlu0 %1017
        %1019 = vrot.lane.b32.xlu0 %v908, 127
        %v1020 = vpop.permute.xlu0 %1019
        %1021 = vrot.lane.b32.xlu0 %v909, 127
        %v1022 = vpop.permute.xlu0 %1021
        %1023 = vrot.lane.b32.xlu0 %v910, 127
        %v1024 = vpop.permute.xlu0 %1023
        %v1025 = vsel %vm694, %v1018, %v1020
        %v1026 = vsel %vm694, %v1022, %v1024
        %v1033 = vsel %vm694, %v1020, %v1018
        %v1034 = vsel %vm694, %v1024, %v1022
        %v1035 = vmul.f32 %v1025, %v711
        %v1036 = vmul.f32 %v1033, %v715
        %v1037 = vmul.f32 %v1026, %v711
        %v1038 = vmul.f32 %v1034, %v715
        %v1039 = vpack.c.bf16 %v1037, %v1035
        %v1040 = vpack.c.bf16 %v1038, %v1036
        %1041 = vrot.lane.b32.xlu0 %v907, 113
        %v1042 = vpop.permute.xlu0 %1041
        %1043 = vrot.lane.b32.xlu0 %v908, 113
        %v1044 = vpop.permute.xlu0 %1043
        %1045 = vrot.lane.b32.xlu0 %v909, 113
        %v1046 = vpop.permute.xlu0 %1045
        %1047 = vrot.lane.b32.xlu0 %v910, 113
        %v1048 = vpop.permute.xlu0 %1047
        %v1049 = vsel %vm732, %v1042, %v1044
        %v1050 = vsel %vm732, %v1046, %v1048
        %v1057 = vsel %vm732, %v1044, %v1042
        %v1058 = vsel %vm732, %v1048, %v1046
        %v1059 = vmul.f32 %v1049, %v749
        %v1060 = vmul.f32 %v1057, %v753
        %v1061 = vmul.f32 %v1050, %v749
        %v1062 = vmul.f32 %v1058, %v753
        %v1063 = vpack.c.bf16 %v1061, %v1059
        %v1064 = vpack.c.bf16 %v1062, %v1060
        %1065 = vrot.lane.b32.xlu0 %v907, 112
        %v1066 = vpop.permute.xlu0 %1065
        %1067 = vrot.lane.b32.xlu0 %v908, 112
        %v1068 = vpop.permute.xlu0 %1067
        %1069 = vrot.lane.b32.xlu0 %v909, 112
        %v1070 = vpop.permute.xlu0 %1069
        %1071 = vrot.lane.b32.xlu0 %v910, 112
        %v1072 = vpop.permute.xlu0 %1071
        %v1073 = vsel %vm770, %v1066, %v1068
        %v1074 = vsel %vm770, %v1070, %v1072
        %v1081 = vsel %vm770, %v1068, %v1066
        %v1082 = vsel %vm770, %v1072, %v1070
        %v1083 = vmul.f32 %v1073, %v787
        %v1084 = vmul.f32 %v1081, %v791
        %v1085 = vmul.f32 %v1074, %v787
        %v1086 = vmul.f32 %v1082, %v791
        %v1087 = vpack.c.bf16 %v1085, %v1083
        %v1088 = vpack.c.bf16 %v1086, %v1084
        %1089 = vrot.lane.b32.xlu0 %v907, 111
        %v1090 = vpop.permute.xlu0 %1089
        %1091 = vrot.lane.b32.xlu0 %v908, 111
        %v1092 = vpop.permute.xlu0 %1091
        %1093 = vrot.lane.b32.xlu0 %v909, 111
        %v1094 = vpop.permute.xlu0 %1093
        %1095 = vrot.lane.b32.xlu0 %v910, 111
        %v1096 = vpop.permute.xlu0 %1095
        %v1097 = vsel %vm808, %v1090, %v1092
        %v1098 = vsel %vm808, %v1094, %v1096
        %v1105 = vsel %vm808, %v1092, %v1090
        %v1106 = vsel %vm808, %v1096, %v1094
        %v1107 = vmul.f32 %v1097, %v825
        %v1108 = vmul.f32 %v1105, %v829
        %v1109 = vmul.f32 %v1098, %v825
        %v1110 = vmul.f32 %v1106, %v829
        %v1111 = vpack.c.bf16 %v1109, %v1107
        %v1112 = vpack.c.bf16 %v1110, %v1108
        %1114 = vset.pattern.permute.xlu0 0
        %1115 = vperm.xlu0 %1114, %v913
        %v1116 = vpop.permute.xlu0 %1115
        %1119 = vset.pattern.permute.xlu0 0
        %1120 = vperm.xlu0 %1119, %v914
        %v1121 = vpop.permute.xlu0 %1120
        %v1125 = vunpack.c.l.b16 %v911
        %v1126 = vunpack.c.h.b16 %v911
        %v1127 = vunpack.c.l.b16 %v912
        %v1128 = vunpack.c.h.b16 %v912
        %v1129 = vpack.c.b16 %v1127, %v1125
        %v1130 = vpack.c.b16 %v1128, %v1126
        %v1133 = vsel %vm580, %v1130, 0
        %1135 = vmatprep.subr.bf16.mxu0 %v942
        %1136 = vmatpush1.bf16.msra.mxu0 %v941
        %1137 = vmatprep.subr.bf16.mxu0 %v966
        %1138 = vmatpush1.bf16.msra.mxu0 %v965
        %1139 = vmatprep.subr.bf16.mxu0 %v990
        %1140 = vmatpush1.bf16.msra.mxu0 %v989
        %1141 = vmatprep.subr.bf16.mxu0 %v1014
        %1142 = vmatpush1.bf16.msra.mxu0 %v1013
        %1143 = vmatprep.subr.bf16.mxu0 %v1016
        %1144 = vmatpush1.bf16.msra.mxu0 %v1015
        %1145 = vmatprep.subr.bf16.mxu0 %v1040
        %1146 = vmatpush1.bf16.msra.mxu0 %v1039
        %1147 = vmatprep.subr.bf16.mxu0 %v1064
        %1148 = vmatpush1.bf16.msra.mxu0 %v1063
        %1149 = vmatprep.subr.bf16.mxu0 %v1088
        %1150 = vmatpush1.bf16.msra.mxu0 %v1087
        %1151 = vmatprep.subr.bf16.mxu0 %v1112
        %1152 = vmatpush1.bf16.msra.mxu0 %v1111
        %1153 = vmatprep.subr.bf16.mxu0 0
        %1154 = vmatpush1.bf16.msra.mxu0 0
        %1155 = vmatprep.subr.bf16.mxu0 0
        %1156 = vmatpush1.bf16.msra.mxu0 0
        %1157 = vmatprep.subr.bf16.mxu0 0
        %1158 = vmatpush1.bf16.msra.mxu0 0
        %1159 = vmatprep.subr.bf16.mxu0 0
        %1160 = vmatpush1.bf16.msra.mxu0 0
        %1161 = vmatprep.subr.bf16.mxu0 0
        %1162 = vmatpush1.bf16.msra.mxu0 0
        %1163 = vmatprep.subr.bf16.mxu0 0
        %1164 = vmatpush1.bf16.msra.mxu0 0
        %1165 = vmatprep.subr.bf16.mxu0 0
        %1166 = vmatpush1.bf16.msra.mxu0 0
        %1167 = vmatprep.mubr.bf16.mxu0 %v1133
        %1168 = vmatmul.mubr.bf16.gmra.mrb[0].mxu0 %v1129
        %v1169 = vpop.f32.mrb[0].mxu0
        %v1170 = vadd.f32 %v1116, %v1169
        %v1171 = vpop.f32.mrb[0].mxu0
        %v1172 = vadd.f32 %v1116, %v1171
        %v1173 = vpop.f32.mrb[0].mxu0
        %v1174 = vadd.f32 %v1121, %v1173
        %v1175 = vpop.f32.mrb[0].mxu0
        %v1176 = vadd.f32 %v1121, %v1175
        %1177 = vdwg.mxu0
        %v1178 = vadd.f32 %v1170, %v1172
        %1179 = vadd.xlane.f32.xlu0 %v1178
        %v1180 = vpop.xlane.xlu0 %1179
        %v1181 = vadd.f32 %v1174, %v1176
        %1182 = vadd.xlane.f32.xlu0 %v1181
        %v1183 = vpop.xlane.xlu0 %1182
        %v1184 = vrcp.pop 256.0
        %v1185 = vmul.f32 %v1180, %v1184
        %v1186 = vmul.f32 %v1183, %v1184
        %v1187 = vld [vmem:[%s6] sm:$0x3]
        %v1188 = vld [vmem:[%s7] sm:$0x3]
        %v1190 = vsel %vm580, %v1187, 0
        %1192 = vmatprep.subr.mxu0 0.0
        %1193 = vmatpush1.msra.mxu0 %v1185
        %1194 = vmatprep.subr.mxu0 0.0
        %1195 = vmatpush1.msra.mxu0 %v1186
        %1196 = vmatprep.subr.mxu0 0.0
        %1197 = vmatpush1.msra.mxu0 0.0
        %1198 = vmatprep.subr.mxu0 0.0
        %1199 = vmatpush1.msra.mxu0 0.0
        %1200 = vmatprep.subr.mxu0 0.0
        %1201 = vmatpush1.msra.mxu0 0.0
        %1202 = vmatprep.subr.mxu0 0.0
        %1203 = vmatpush1.msra.mxu0 0.0
        %1204 = vmatprep.subr.mxu0 0.0
        %1205 = vmatpush1.msra.mxu0 0.0
        %1206 = vmatprep.subr.mxu0 0.0
        %1207 = vmatpush1.msra.mxu0 0.0
        %1208 = vmatprep.subr.mxu0 0.0
        %1209 = vmatpush1.msra.mxu0 0.0
        %1210 = vmatprep.subr.mxu0 0.0
        %1211 = vmatpush1.msra.mxu0 0.0
        %1212 = vmatprep.subr.mxu0 0.0
        %1213 = vmatpush1.msra.mxu0 0.0
        %1214 = vmatprep.subr.mxu0 0.0
        %1215 = vmatpush1.msra.mxu0 0.0
        %1216 = vmatprep.subr.mxu0 0.0
        %1217 = vmatpush1.msra.mxu0 0.0
        %1218 = vmatprep.subr.mxu0 0.0
        %1219 = vmatpush1.msra.mxu0 0.0
        %1220 = vmatprep.subr.mxu0 0.0
        %1221 = vmatpush1.msra.mxu0 0.0
        %1222 = vmatprep.subr.mxu0 0.0
        %1223 = vmatpush1.msra.mxu0 0.0
        %1224 = vmatprep.subr.mxu0 0.0
        %1225 = vmatpush1.msra.mxu0 0.0
        %1226 = vmatprep.subr.mxu0 0.0
        %1227 = vmatpush1.msra.mxu0 0.0
        %1228 = vmatprep.subr.mxu0 0.0
        %1229 = vmatpush1.msra.mxu0 0.0
        %1230 = vmatprep.subr.mxu0 0.0
        %1231 = vmatpush1.msra.mxu0 0.0
        %1232 = vmatprep.subr.mxu0 0.0
        %1233 = vmatpush1.msra.mxu0 0.0
        %1234 = vmatprep.subr.mxu0 0.0
        %1235 = vmatpush1.msra.mxu0 0.0
        %1236 = vmatprep.subr.mxu0 0.0
        %1237 = vmatpush1.msra.mxu0 0.0
        %1238 = vmatprep.subr.mxu0 0.0
        %1239 = vmatpush1.msra.mxu0 0.0
        %1240 = vmatprep.subr.mxu0 0.0
        %1241 = vmatpush1.msra.mxu0 0.0
        %1242 = vmatprep.subr.mxu0 0.0
        %1243 = vmatpush1.msra.mxu0 0.0
        %1244 = vmatprep.subr.mxu0 0.0
        %1245 = vmatpush1.msra.mxu0 0.0
        %1246 = vmatprep.subr.mxu0 0.0
        %1247 = vmatpush1.msra.mxu0 0.0
        %1248 = vmatprep.subr.mxu0 0.0
        %1249 = vmatpush1.msra.mxu0 0.0
        %1250 = vmatprep.subr.mxu0 0.0
        %1251 = vmatpush1.msra.mxu0 0.0
        %1252 = vmatprep.subr.mxu0 0.0
        %1253 = vmatpush1.msra.mxu0 0.0
        %1254 = vmatprep.subr.mxu0 0.0
        %1255 = vmatpush1.msra.mxu0 0.0
        %1256 = vmatprep.mubr.f32.mxu0 0.0
        %1257 = vmatmul.mubr.f32.gmra.mrb[0].mxu0 %v1190
        %v1258 = vpop.f32.mrb[0].mxu0
        %v1259 = vadd.f32 %v1188, %v1258
        %v1260 = vpop.f32.mrb[0].mxu0
        %1261 = vdwg.mxu0
        %v1262 = vmax.f32 %v1259, 0.0
        %v1263 = vld [vmem:[%s8] sm:$0xff]
        %v1264 = vld [vmem:[%s8 + $0x8] sm:$0xff]
        %v1265 = vld [vmem:[%s9] sm:$0xff]
        %v1266 = vld [vmem:[%s9 + $0x8] sm:$0xff]
        %vm1267 = vcmask 15360
        %v1269 = vsel %vm1267, %v1263, 0
        %v1272 = vsel %vm1267, %v1264, 0
        %vm1274 = vcmask 1041408
        %v1276 = vsel %vm1274, %v1262, 0
        %1278 = vmatprep.subr.mxu0 0.0
        %1279 = vmatpush1.msra.mxu0 %v1276
        %1280 = vmatprep.subr.mxu0 0.0
        %1281 = vmatpush1.msra.mxu0 0.0
        %1282 = vmatprep.subr.mxu0 0.0
        %1283 = vmatpush1.msra.mxu0 0.0
        %1284 = vmatprep.subr.mxu0 0.0
        %1285 = vmatpush1.msra.mxu0 0.0
        %1286 = vmatprep.subr.mxu0 0.0
        %1287 = vmatpush1.msra.mxu0 0.0
        %1288 = vmatprep.subr.mxu0 0.0
        %1289 = vmatpush1.msra.mxu0 0.0
        %1290 = vmatprep.subr.mxu0 0.0
        %1291 = vmatpush1.msra.mxu0 0.0
        %1292 = vmatprep.subr.mxu0 0.0
        %1293 = vmatpush1.msra.mxu0 0.0
        %1294 = vmatprep.subr.mxu0 0.0
        %1295 = vmatpush1.msra.mxu0 0.0
        %1296 = vmatprep.subr.mxu0 0.0
        %1297 = vmatpush1.msra.mxu0 0.0
        %1298 = vmatprep.subr.mxu0 0.0
        %1299 = vmatpush1.msra.mxu0 0.0
        %1300 = vmatprep.subr.mxu0 0.0
        %1301 = vmatpush1.msra.mxu0 0.0
        %1302 = vmatprep.subr.mxu0 0.0
        %1303 = vmatpush1.msra.mxu0 0.0
        %1304 = vmatprep.subr.mxu0 0.0
        %1305 = vmatpush1.msra.mxu0 0.0
        %1306 = vmatprep.subr.mxu0 0.0
        %1307 = vmatpush1.msra.mxu0 0.0
        %1308 = vmatprep.subr.mxu0 0.0
        %1309 = vmatpush1.msra.mxu0 0.0
        %1310 = vmatprep.subr.mxu0 0.0
        %1311 = vmatpush1.msra.mxu0 0.0
        %1312 = vmatprep.subr.mxu0 0.0
        %1313 = vmatpush1.msra.mxu0 0.0
        %1314 = vmatprep.subr.mxu0 0.0
        %1315 = vmatpush1.msra.mxu0 0.0
        %1316 = vmatprep.subr.mxu0 0.0
        %1317 = vmatpush1.msra.mxu0 0.0
        %1318 = vmatprep.subr.mxu0 0.0
        %1319 = vmatpush1.msra.mxu0 0.0
        %1320 = vmatprep.subr.mxu0 0.0
        %1321 = vmatpush1.msra.mxu0 0.0
        %1322 = vmatprep.subr.mxu0 0.0
        %1323 = vmatpush1.msra.mxu0 0.0
        %1324 = vmatprep.subr.mxu0 0.0
        %1325 = vmatpush1.msra.mxu0 0.0
        %1326 = vmatprep.subr.mxu0 0.0
        %1327 = vmatpush1.msra.mxu0 0.0
        %1328 = vmatprep.subr.mxu0 0.0
        %1329 = vmatpush1.msra.mxu0 0.0
        %1330 = vmatprep.subr.mxu0 0.0
        %1331 = vmatpush1.msra.mxu0 0.0
        %1332 = vmatprep.subr.mxu0 0.0
        %1333 = vmatpush1.msra.mxu0 0.0
        %1334 = vmatprep.subr.mxu0 0.0
        %1335 = vmatpush1.msra.mxu0 0.0
        %1336 = vmatprep.subr.mxu0 0.0
        %1337 = vmatpush1.msra.mxu0 0.0
        %1338 = vmatprep.subr.mxu0 0.0
        %1339 = vmatpush1.msra.mxu0 0.0
        %1340 = vmatprep.subr.mxu0 0.0
        %1341 = vmatpush1.msra.mxu0 0.0
        %1342 = vmatprep.mubr.f32.mxu0 0.0
        %1343 = vmatmul.mubr.f32.gmra.mrb[0].mxu0 %v1269
        %v1344 = vpop.f32.mrb[0].mxu0
        %v1345 = vadd.f32 %v1265, %v1344
        %v1346 = vpop.f32.mrb[0].mxu0
        %1347 = vmatprep.mubr.f32.mxu0 0.0
        %1348 = vmatmul.mubr.f32.gmra.mrb[0].mxu0 %v1272
        %v1349 = vpop.f32.mrb[0].mxu0
        %v1350 = vadd.f32 %v1266, %v1349
        %v1351 = vpop.f32.mrb[0].mxu0
        %1352 = vdwg.mxu0
        %v1353 = vxor.u32 %v1345, 2147483648
        %v1354 = vxor.u32 %v1350, 2147483648
        %v1355 = vmul.f32 %v1353, 1.442695
        %v1356 = vpow.pop %v1355
        %v1357 = vmul.f32 %v1354, 1.442695
        %v1358 = vpow.pop %v1357
        %v1359 = vadd.f32 %v1356, 1.0
        %v1360 = vadd.f32 %v1358, 1.0
        %v1361 = vrcp.pop %v1359
        %v1362 = vmul.f32 1.0, %v1361
        %v1363 = vrcp.pop %v1360
        %v1364 = vmul.f32 1.0, %v1363
        %1366 = vset.pattern.permute.xlu0 0
        %1367 = vperm.xlu0 %1366, %v1362
        %v1368 = vpop.permute.xlu0 %1367
        %1371 = vset.pattern.permute.xlu0 0
        %1372 = vperm.xlu0 %1371, %v1364
        %v1373 = vpop.permute.xlu0 %1372
        %v1375 = vmul.f32 %v1170, %v1368
        %v1376 = vmul.f32 %v1172, %v1368
        %v1377 = vmul.f32 %v1174, %v1373
        %v1378 = vmul.f32 %v1176, %v1373
        %v1379 = vld [vmem:[%s10] sm:$0x3]
        %v1380 = vld [vmem:[%s11] sm:$0x3]
        %1382 = vset.pattern.permute.xlu0 0
        %1383 = vperm.xlu0 %1382, %v1380
        %v1384 = vpop.permute.xlu0 %1383
        %v1387 = vsel %vm580, %v1379, 0
        %1389 = vmatprep.subr.mxu0 %v1376
        %1390 = vmatpush1.msra.mxu0 %v1375
        %1391 = vmatprep.subr.mxu0 %v1378
        %1392 = vmatpush1.msra.mxu0 %v1377
        %1393 = vmatprep.subr.mxu0 0.0
        %1394 = vmatpush1.msra.mxu0 0.0
        %1395 = vmatprep.subr.mxu0 0.0
        %1396 = vmatpush1.msra.mxu0 0.0
        %1397 = vmatprep.subr.mxu0 0.0
        %1398 = vmatpush1.msra.mxu0 0.0
        %1399 = vmatprep.subr.mxu0 0.0
        %1400 = vmatpush1.msra.mxu0 0.0
        %1401 = vmatprep.subr.mxu0 0.0
        %1402 = vmatpush1.msra.mxu0 0.0
        %1403 = vmatprep.subr.mxu0 0.0
        %1404 = vmatpush1.msra.mxu0 0.0
        %1405 = vmatprep.subr.mxu0 0.0
        %1406 = vmatpush1.msra.mxu0 0.0
        %1407 = vmatprep.subr.mxu0 0.0
        %1408 = vmatpush1.msra.mxu0 0.0
        %1409 = vmatprep.subr.mxu0 0.0
        %1410 = vmatpush1.msra.mxu0 0.0
        %1411 = vmatprep.subr.mxu0 0.0
        %1412 = vmatpush1.msra.mxu0 0.0
        %1413 = vmatprep.subr.mxu0 0.0
        %1414 = vmatpush1.msra.mxu0 0.0
        %1415 = vmatprep.subr.mxu0 0.0
        %1416 = vmatpush1.msra.mxu0 0.0
        %1417 = vmatprep.subr.mxu0 0.0
        %1418 = vmatpush1.msra.mxu0 0.0
        %1419 = vmatprep.subr.mxu0 0.0
        %1420 = vmatpush1.msra.mxu0 0.0
        %1421 = vmatprep.subr.mxu0 0.0
        %1422 = vmatpush1.msra.mxu0 0.0
        %1423 = vmatprep.subr.mxu0 0.0
        %1424 = vmatpush1.msra.mxu0 0.0
        %1425 = vmatprep.subr.mxu0 0.0
        %1426 = vmatpush1.msra.mxu0 0.0
        %1427 = vmatprep.subr.mxu0 0.0
        %1428 = vmatpush1.msra.mxu0 0.0
        %1429 = vmatprep.subr.mxu0 0.0
        %1430 = vmatpush1.msra.mxu0 0.0
        %1431 = vmatprep.subr.mxu0 0.0
        %1432 = vmatpush1.msra.mxu0 0.0
        %1433 = vmatprep.subr.mxu0 0.0
        %1434 = vmatpush1.msra.mxu0 0.0
        %1435 = vmatprep.subr.mxu0 0.0
        %1436 = vmatpush1.msra.mxu0 0.0
        %1437 = vmatprep.subr.mxu0 0.0
        %1438 = vmatpush1.msra.mxu0 0.0
        %1439 = vmatprep.subr.mxu0 0.0
        %1440 = vmatpush1.msra.mxu0 0.0
        %1441 = vmatprep.subr.mxu0 0.0
        %1442 = vmatpush1.msra.mxu0 0.0
        %1443 = vmatprep.subr.mxu0 0.0
        %1444 = vmatpush1.msra.mxu0 0.0
        %1445 = vmatprep.subr.mxu0 0.0
        %1446 = vmatpush1.msra.mxu0 0.0
        %1447 = vmatprep.subr.mxu0 0.0
        %1448 = vmatpush1.msra.mxu0 0.0
        %1449 = vmatprep.subr.mxu0 0.0
        %1450 = vmatpush1.msra.mxu0 0.0
        %1451 = vmatprep.subr.mxu0 0.0
        %1452 = vmatpush1.msra.mxu0 0.0
        %1453 = vmatprep.mubr.f32.mxu0 0.0
        %1454 = vmatmul.mubr.f32.gmra.mrb[0].mxu0 %v1387
        %v1455 = vpop.f32.mrb[0].mxu0
        %v1456 = vadd.f32 %v1384, %v1455
        %v1457 = vpop.f32.mrb[0].mxu0
        %v1458 = vadd.f32 %v1384, %v1457
        %1459 = vdwg.mxu0
        %v1460 = vmax.f32 %v1456, 0.0
        %v1461 = vmax.f32 %v1458, 0.0
        %v1462 = vld [vmem:[%s12] sm:$0x3]
        %1464 = vset.pattern.permute.xlu0 0
        %1465 = vperm.xlu0 %1464, %v1462
        %v1466 = vpop.permute.xlu0 %1465
        %v1468 = vmul.f32 %v1460, %v1466
        %v1469 = vmul.f32 %v1461, %v1466
        %v1470 = vsel %vm1274, %v1468, 0.0
        %v1471 = vrot.slane %v1470, 4
        %v1472 = vadd.f32 %v1470, %v1471
        %v1473 = vrot.slane %v1472, 2
        %v1474 = vadd.f32 %v1472, %v1473
        %v1475 = vrot.slane %v1474, 1
        %v1476 = vadd.f32 %v1474, %v1475
        %v1477 = vsel %vm1274, %v1469, 0.0
        %v1478 = vrot.slane %v1477, 4
        %v1479 = vadd.f32 %v1477, %v1478
        %v1480 = vrot.slane %v1479, 2
        %v1481 = vadd.f32 %v1479, %v1480
        %v1482 = vrot.slane %v1481, 1
        %v1483 = vadd.f32 %v1481, %v1482
        %v1484 = vld [vmem:[%s13] sm:$0x1]
        %1486 = vset.pattern.permute.xlu0 0
        %1487 = vperm.xlu0 %1486, %v1484
        %v1488 = vpop.permute.xlu0 %1487
        %v1490 = vlaneseq
        %v1491 = vshrl.u32 %v1490, 7
        %v1492 = vsub.s32 0, %v1491
        %v1493 = vrot.slane %v1488, %v1492
        %v1494 = vadd.f32 %v1476, %v1493
        %v1495 = vadd.f32 %v1483, %v1493
        %v1496 = vxor.u32 %v1494, 2147483648
        %v1497 = vxor.u32 %v1495, 2147483648
        %v1498 = vmul.f32 %v1496, 1.442695
        %v1499 = vpow.pop %v1498
        %v1500 = vmul.f32 %v1497, 1.442695
        %v1501 = vpow.pop %v1500
        %v1502 = vadd.f32 %v1499, 1.0
        %v1503 = vadd.f32 %v1501, 1.0
        %v1504 = vrcp.pop %v1502
        %v1505 = vmul.f32 1.0, %v1504
        %v1506 = vrcp.pop %v1503
        %v1507 = vmul.f32 1.0, %v1506
        %v1508 = vmul.f32 %v1375, %v1505
        %v1509 = vmul.f32 %v1376, %v1507
        %v1510 = vmul.f32 %v1377, %v1505
        %v1511 = vmul.f32 %v1378, %v1507
        %v1512 = vadd.f32 %v1508, %v521
        %v1513 = vadd.f32 %v1509, %v522
        %v1514 = vadd.f32 %v1510, %v523
        %v1515 = vadd.f32 %v1511, %v524
        %s1516 = scalar_lea.vmem %s2, 16
        %v1517 = vld [vmem:[%s1516] sm:$0xff]
        %v1518 = vld [vmem:[%s1516 + $0x8] sm:$0xff]
        %s1519 = scalar_lea.vmem %s3, 16
        %v1520 = vld [vmem:[%s1519] sm:$0xff]
        %v1521 = vld [vmem:[%s1519 + $0x8] sm:$0xff]
        %1524 = vrot.lane.b32.xlu0 %v1513, 17
        %v1525 = vpop.permute.xlu0 %1524
        %1526 = vrot.lane.b32.xlu0 %v1515, 17
        %v1527 = vpop.permute.xlu0 %1526
        %1532 = vrot.lane.b32.xlu0 %v1512, 17
        %v1533 = vpop.permute.xlu0 %1532
        %1534 = vrot.lane.b32.xlu0 %v1514, 17
        %v1535 = vpop.permute.xlu0 %1534
        %v1536 = vsel %vm543, %v1533, %v1525
        %v1537 = vsel %vm543, %v1535, %v1527
        %v1542 = vsel %vm543, %v1525, %v1533
        %v1543 = vsel %vm543, %v1527, %v1535
        %v1544 = vmul.f32 %v1542, %v557
        %v1545 = vmul.f32 %v1536, %v561
        %v1546 = vmul.f32 %v1543, %v557
        %v1547 = vmul.f32 %v1537, %v561
        %v1548 = vpack.c.bf16 %v1546, %v1544
        %v1549 = vpack.c.bf16 %v1547, %v1545
        %1550 = vrot.lane.b32.xlu0 %v1513, 16
        %v1551 = vpop.permute.xlu0 %1550
        %1552 = vrot.lane.b32.xlu0 %v1515, 16
        %v1553 = vpop.permute.xlu0 %1552
        %1556 = vrot.lane.b32.xlu0 %v1512, 16
        %v1557 = vpop.permute.xlu0 %1556
        %1558 = vrot.lane.b32.xlu0 %v1514, 16
        %v1559 = vpop.permute.xlu0 %1558
        %v1560 = vsel %vm580, %v1557, %v1551
        %v1561 = vsel %vm580, %v1559, %v1553
        %v1566 = vsel %vm580, %v1551, %v1557
        %v1567 = vsel %vm580, %v1553, %v1559
        %v1568 = vmul.f32 %v1566, %v595
        %v1569 = vmul.f32 %v1560, %v599
        %v1570 = vmul.f32 %v1567, %v595
        %v1571 = vmul.f32 %v1561, %v599
        %v1572 = vpack.c.bf16 %v1570, %v1568
        %v1573 = vpack.c.bf16 %v1571, %v1569
        %1574 = vrot.lane.b32.xlu0 %v1513, 15
        %v1575 = vpop.permute.xlu0 %1574
        %1576 = vrot.lane.b32.xlu0 %v1515, 15
        %v1577 = vpop.permute.xlu0 %1576
        %1580 = vrot.lane.b32.xlu0 %v1512, 15
        %v1581 = vpop.permute.xlu0 %1580
        %1582 = vrot.lane.b32.xlu0 %v1514, 15
        %v1583 = vpop.permute.xlu0 %1582
        %v1584 = vsel %vm618, %v1581, %v1575
        %v1585 = vsel %vm618, %v1583, %v1577
        %v1590 = vsel %vm618, %v1575, %v1581
        %v1591 = vsel %vm618, %v1577, %v1583
        %v1592 = vmul.f32 %v1590, %v633
        %v1593 = vmul.f32 %v1584, %v637
        %v1594 = vmul.f32 %v1591, %v633
        %v1595 = vmul.f32 %v1585, %v637
        %v1596 = vpack.c.bf16 %v1594, %v1592
        %v1597 = vpack.c.bf16 %v1595, %v1593
        %1598 = vrot.lane.b32.xlu0 %v1513, 1
        %v1599 = vpop.permute.xlu0 %1598
        %1600 = vrot.lane.b32.xlu0 %v1515, 1
        %v1601 = vpop.permute.xlu0 %1600
        %1604 = vrot.lane.b32.xlu0 %v1512, 1
        %v1605 = vpop.permute.xlu0 %1604
        %1606 = vrot.lane.b32.xlu0 %v1514, 1
        %v1607 = vpop.permute.xlu0 %1606
        %v1608 = vsel %vm656, %v1605, %v1599
        %v1609 = vsel %vm656, %v1607, %v1601
        %v1614 = vsel %vm656, %v1599, %v1605
        %v1615 = vsel %vm656, %v1601, %v1607
        %v1616 = vmul.f32 %v1614, %v671
        %v1617 = vmul.f32 %v1608, %v675
        %v1618 = vmul.f32 %v1615, %v671
        %v1619 = vmul.f32 %v1609, %v675
        %v1620 = vpack.c.bf16 %v1618, %v1616
        %v1621 = vpack.c.bf16 %v1619, %v1617
        %v1622 = vpack.c.bf16 %v1514, %v1512
        %v1623 = vpack.c.bf16 %v1515, %v1513
        %1624 = vrot.lane.b32.xlu0 %v1512, 127
        %v1625 = vpop.permute.xlu0 %1624
        %1626 = vrot.lane.b32.xlu0 %v1513, 127
        %v1627 = vpop.permute.xlu0 %1626
        %1628 = vrot.lane.b32.xlu0 %v1514, 127
        %v1629 = vpop.permute.xlu0 %1628
        %1630 = vrot.lane.b32.xlu0 %v1515, 127
        %v1631 = vpop.permute.xlu0 %1630
        %v1632 = vsel %vm694, %v1625, %v1627
        %v1633 = vsel %vm694, %v1629, %v1631
        %v1640 = vsel %vm694, %v1627, %v1625
        %v1641 = vsel %vm694, %v1631, %v1629
        %v1642 = vmul.f32 %v1632, %v711
        %v1643 = vmul.f32 %v1640, %v715
        %v1644 = vmul.f32 %v1633, %v711
        %v1645 = vmul.f32 %v1641, %v715
        %v1646 = vpack.c.bf16 %v1644, %v1642
        %v1647 = vpack.c.bf16 %v1645, %v1643
        %1648 = vrot.lane.b32.xlu0 %v1512, 113
        %v1649 = vpop.permute.xlu0 %1648
        %1650 = vrot.lane.b32.xlu0 %v1513, 113
        %v1651 = vpop.permute.xlu0 %1650
        %1652 = vrot.lane.b32.xlu0 %v1514, 113
        %v1653 = vpop.permute.xlu0 %1652
        %1654 = vrot.lane.b32.xlu0 %v1515, 113
        %v1655 = vpop.permute.xlu0 %1654
        %v1656 = vsel %vm732, %v1649, %v1651
        %v1657 = vsel %vm732, %v1653, %v1655
        %v1664 = vsel %vm732, %v1651, %v1649
        %v1665 = vsel %vm732, %v1655, %v1653
        %v1666 = vmul.f32 %v1656, %v749
        %v1667 = vmul.f32 %v1664, %v753
        %v1668 = vmul.f32 %v1657, %v749
        %v1669 = vmul.f32 %v1665, %v753
        %v1670 = vpack.c.bf16 %v1668, %v1666
        %v1671 = vpack.c.bf16 %v1669, %v1667
        %1672 = vrot.lane.b32.xlu0 %v1512, 112
        %v1673 = vpop.permute.xlu0 %1672
        %1674 = vrot.lane.b32.xlu0 %v1513, 112
        %v1675 = vpop.permute.xlu0 %1674
        %1676 = vrot.lane.b32.xlu0 %v1514, 112
        %v1677 = vpop.permute.xlu0 %1676
        %1678 = vrot.lane.b32.xlu0 %v1515, 112
        %v1679 = vpop.permute.xlu0 %1678
        %v1680 = vsel %vm770, %v1673, %v1675
        %v1681 = vsel %vm770, %v1677, %v1679
        %v1688 = vsel %vm770, %v1675, %v1673
        %v1689 = vsel %vm770, %v1679, %v1677
        %v1690 = vmul.f32 %v1680, %v787
        %v1691 = vmul.f32 %v1688, %v791
        %v1692 = vmul.f32 %v1681, %v787
        %v1693 = vmul.f32 %v1689, %v791
        %v1694 = vpack.c.bf16 %v1692, %v1690
        %v1695 = vpack.c.bf16 %v1693, %v1691
        %1696 = vrot.lane.b32.xlu0 %v1512, 111
        %v1697 = vpop.permute.xlu0 %1696
        %1698 = vrot.lane.b32.xlu0 %v1513, 111
        %v1699 = vpop.permute.xlu0 %1698
        %1700 = vrot.lane.b32.xlu0 %v1514, 111
        %v1701 = vpop.permute.xlu0 %1700
        %1702 = vrot.lane.b32.xlu0 %v1515, 111
        %v1703 = vpop.permute.xlu0 %1702
        %v1704 = vsel %vm808, %v1697, %v1699
        %v1705 = vsel %vm808, %v1701, %v1703
        %v1712 = vsel %vm808, %v1699, %v1697
        %v1713 = vsel %vm808, %v1703, %v1701
        %v1714 = vmul.f32 %v1704, %v825
        %v1715 = vmul.f32 %v1712, %v829
        %v1716 = vmul.f32 %v1705, %v825
        %v1717 = vmul.f32 %v1713, %v829
        %v1718 = vpack.c.bf16 %v1716, %v1714
        %v1719 = vpack.c.bf16 %v1717, %v1715
        %1721 = vset.pattern.permute.xlu0 0
        %1722 = vperm.xlu0 %1721, %v1520
        %v1723 = vpop.permute.xlu0 %1722
        %1726 = vset.pattern.permute.xlu0 0
        %1727 = vperm.xlu0 %1726, %v1521
        %v1728 = vpop.permute.xlu0 %1727
        %v1732 = vunpack.c.l.b16 %v1517
        %v1733 = vunpack.c.h.b16 %v1517
        %v1734 = vunpack.c.l.b16 %v1518
        %v1735 = vunpack.c.h.b16 %v1518
        %v1736 = vpack.c.b16 %v1734, %v1732
        %v1737 = vpack.c.b16 %v1735, %v1733
        %v1740 = vsel %vm580, %v1737, 0
        %1742 = vmatprep.subr.bf16.mxu0 %v1549
        %1743 = vmatpush1.bf16.msra.mxu0 %v1548
        %1744 = vmatprep.subr.bf16.mxu0 %v1573
        %1745 = vmatpush1.bf16.msra.mxu0 %v1572
        %1746 = vmatprep.subr.bf16.mxu0 %v1597
        %1747 = vmatpush1.bf16.msra.mxu0 %v1596
        %1748 = vmatprep.subr.bf16.mxu0 %v1621
        %1749 = vmatpush1.bf16.msra.mxu0 %v1620
        %1750 = vmatprep.subr.bf16.mxu0 %v1623
        %1751 = vmatpush1.bf16.msra.mxu0 %v1622
        %1752 = vmatprep.subr.bf16.mxu0 %v1647
        %1753 = vmatpush1.bf16.msra.mxu0 %v1646
        %1754 = vmatprep.subr.bf16.mxu0 %v1671
        %1755 = vmatpush1.bf16.msra.mxu0 %v1670
        %1756 = vmatprep.subr.bf16.mxu0 %v1695
        %1757 = vmatpush1.bf16.msra.mxu0 %v1694
        %1758 = vmatprep.subr.bf16.mxu0 %v1719
        %1759 = vmatpush1.bf16.msra.mxu0 %v1718
        %1760 = vmatprep.subr.bf16.mxu0 0
        %1761 = vmatpush1.bf16.msra.mxu0 0
        %1762 = vmatprep.subr.bf16.mxu0 0
        %1763 = vmatpush1.bf16.msra.mxu0 0
        %1764 = vmatprep.subr.bf16.mxu0 0
        %1765 = vmatpush1.bf16.msra.mxu0 0
        %1766 = vmatprep.subr.bf16.mxu0 0
        %1767 = vmatpush1.bf16.msra.mxu0 0
        %1768 = vmatprep.subr.bf16.mxu0 0
        %1769 = vmatpush1.bf16.msra.mxu0 0
        %1770 = vmatprep.subr.bf16.mxu0 0
        %1771 = vmatpush1.bf16.msra.mxu0 0
        %1772 = vmatprep.subr.bf16.mxu0 0
        %1773 = vmatpush1.bf16.msra.mxu0 0
        %1774 = vmatprep.mubr.bf16.mxu0 %v1740
        %1775 = vmatmul.mubr.bf16.gmra.mrb[0].mxu0 %v1736
        %v1776 = vpop.f32.mrb[0].mxu0
        %v1777 = vadd.f32 %v1723, %v1776
        %v1778 = vpop.f32.mrb[0].mxu0
        %v1779 = vadd.f32 %v1723, %v1778
        %v1780 = vpop.f32.mrb[0].mxu0
        %v1781 = vadd.f32 %v1728, %v1780
        %v1782 = vpop.f32.mrb[0].mxu0
        %v1783 = vadd.f32 %v1728, %v1782
        %1784 = vdwg.mxu0
        %v1785 = vmax.f32 %v1777, 0.0
        %v1786 = vmax.f32 %v1779, 0.0
        %v1787 = vmax.f32 %v1781, 0.0
        %v1788 = vmax.f32 %v1783, 0.0
        %v1789 = vadd.f32 %v1785, %v1512
        %v1790 = vadd.f32 %v1786, %v1513
        %v1791 = vadd.f32 %v1787, %v1514
        %v1792 = vadd.f32 %v1788, %v1515
        %s1793 = scalar_lea.vmem %s4, 16
        %v1794 = vld [vmem:[%s1793] sm:$0xff]
        %v1795 = vld [vmem:[%s1793 + $0x8] sm:$0xff]
        %s1796 = scalar_lea.vmem %s5, 16
        %v1797 = vld [vmem:[%s1796] sm:$0xff]
        %v1798 = vld [vmem:[%s1796 + $0x8] sm:$0xff]
        %1801 = vrot.lane.b32.xlu0 %v1790, 17
        %v1802 = vpop.permute.xlu0 %1801
        %1803 = vrot.lane.b32.xlu0 %v1792, 17
        %v1804 = vpop.permute.xlu0 %1803
        %1809 = vrot.lane.b32.xlu0 %v1789, 17
        %v1810 = vpop.permute.xlu0 %1809
        %1811 = vrot.lane.b32.xlu0 %v1791, 17
        %v1812 = vpop.permute.xlu0 %1811
        %v1813 = vsel %vm543, %v1810, %v1802
        %v1814 = vsel %vm543, %v1812, %v1804
        %v1819 = vsel %vm543, %v1802, %v1810
        %v1820 = vsel %vm543, %v1804, %v1812
        %v1821 = vmul.f32 %v1819, %v557
        %v1822 = vmul.f32 %v1813, %v561
        %v1823 = vmul.f32 %v1820, %v557
        %v1824 = vmul.f32 %v1814, %v561
        %v1825 = vpack.c.bf16 %v1823, %v1821
        %v1826 = vpack.c.bf16 %v1824, %v1822
        %1827 = vrot.lane.b32.xlu0 %v1790, 16
        %v1828 = vpop.permute.xlu0 %1827
        %1829 = vrot.lane.b32.xlu0 %v1792, 16
        %v1830 = vpop.permute.xlu0 %1829
        %1833 = vrot.lane.b32.xlu0 %v1789, 16
        %v1834 = vpop.permute.xlu0 %1833
        %1835 = vrot.lane.b32.xlu0 %v1791, 16
        %v1836 = vpop.permute.xlu0 %1835
        %v1837 = vsel %vm580, %v1834, %v1828
        %v1838 = vsel %vm580, %v1836, %v1830
        %v1843 = vsel %vm580, %v1828, %v1834
        %v1844 = vsel %vm580, %v1830, %v1836
        %v1845 = vmul.f32 %v1843, %v595
        %v1846 = vmul.f32 %v1837, %v599
        %v1847 = vmul.f32 %v1844, %v595
        %v1848 = vmul.f32 %v1838, %v599
        %v1849 = vpack.c.bf16 %v1847, %v1845
        %v1850 = vpack.c.bf16 %v1848, %v1846
        %1851 = vrot.lane.b32.xlu0 %v1790, 15
        %v1852 = vpop.permute.xlu0 %1851
        %1853 = vrot.lane.b32.xlu0 %v1792, 15
        %v1854 = vpop.permute.xlu0 %1853
        %1857 = vrot.lane.b32.xlu0 %v1789, 15
        %v1858 = vpop.permute.xlu0 %1857
        %1859 = vrot.lane.b32.xlu0 %v1791, 15
        %v1860 = vpop.permute.xlu0 %1859
        %v1861 = vsel %vm618, %v1858, %v1852
        %v1862 = vsel %vm618, %v1860, %v1854
        %v1867 = vsel %vm618, %v1852, %v1858
        %v1868 = vsel %vm618, %v1854, %v1860
        %v1869 = vmul.f32 %v1867, %v633
        %v1870 = vmul.f32 %v1861, %v637
        %v1871 = vmul.f32 %v1868, %v633
        %v1872 = vmul.f32 %v1862, %v637
        %v1873 = vpack.c.bf16 %v1871, %v1869
        %v1874 = vpack.c.bf16 %v1872, %v1870
        %1875 = vrot.lane.b32.xlu0 %v1790, 1
        %v1876 = vpop.permute.xlu0 %1875
        %1877 = vrot.lane.b32.xlu0 %v1792, 1
        %v1878 = vpop.permute.xlu0 %1877
        %1881 = vrot.lane.b32.xlu0 %v1789, 1
        %v1882 = vpop.permute.xlu0 %1881
        %1883 = vrot.lane.b32.xlu0 %v1791, 1
        %v1884 = vpop.permute.xlu0 %1883
        %v1885 = vsel %vm656, %v1882, %v1876
        %v1886 = vsel %vm656, %v1884, %v1878
        %v1891 = vsel %vm656, %v1876, %v1882
        %v1892 = vsel %vm656, %v1878, %v1884
        %v1893 = vmul.f32 %v1891, %v671
        %v1894 = vmul.f32 %v1885, %v675
        %v1895 = vmul.f32 %v1892, %v671
        %v1896 = vmul.f32 %v1886, %v675
        %v1897 = vpack.c.bf16 %v1895, %v1893
        %v1898 = vpack.c.bf16 %v1896, %v1894
        %v1899 = vpack.c.bf16 %v1791, %v1789
        %v1900 = vpack.c.bf16 %v1792, %v1790
        %1901 = vrot.lane.b32.xlu0 %v1789, 127
        %v1902 = vpop.permute.xlu0 %1901
        %1903 = vrot.lane.b32.xlu0 %v1790, 127
        %v1904 = vpop.permute.xlu0 %1903
        %1905 = vrot.lane.b32.xlu0 %v1791, 127
        %v1906 = vpop.permute.xlu0 %1905
        %1907 = vrot.lane.b32.xlu0 %v1792, 127
        %v1908 = vpop.permute.xlu0 %1907
        %v1909 = vsel %vm694, %v1902, %v1904
        %v1910 = vsel %vm694, %v1906, %v1908
        %v1917 = vsel %vm694, %v1904, %v1902
        %v1918 = vsel %vm694, %v1908, %v1906
        %v1919 = vmul.f32 %v1909, %v711
        %v1920 = vmul.f32 %v1917, %v715
        %v1921 = vmul.f32 %v1910, %v711
        %v1922 = vmul.f32 %v1918, %v715
        %v1923 = vpack.c.bf16 %v1921, %v1919
        %v1924 = vpack.c.bf16 %v1922, %v1920
        %1925 = vrot.lane.b32.xlu0 %v1789, 113
        %v1926 = vpop.permute.xlu0 %1925
        %1927 = vrot.lane.b32.xlu0 %v1790, 113
        %v1928 = vpop.permute.xlu0 %1927
        %1929 = vrot.lane.b32.xlu0 %v1791, 113
        %v1930 = vpop.permute.xlu0 %1929
        %1931 = vrot.lane.b32.xlu0 %v1792, 113
        %v1932 = vpop.permute.xlu0 %1931
        %v1933 = vsel %vm732, %v1926, %v1928
        %v1934 = vsel %vm732, %v1930, %v1932
        %v1941 = vsel %vm732, %v1928, %v1926
        %v1942 = vsel %vm732, %v1932, %v1930
        %v1943 = vmul.f32 %v1933, %v749
        %v1944 = vmul.f32 %v1941, %v753
        %v1945 = vmul.f32 %v1934, %v749
        %v1946 = vmul.f32 %v1942, %v753
        %v1947 = vpack.c.bf16 %v1945, %v1943
        %v1948 = vpack.c.bf16 %v1946, %v1944
        %1949 = vrot.lane.b32.xlu0 %v1789, 112
        %v1950 = vpop.permute.xlu0 %1949
        %1951 = vrot.lane.b32.xlu0 %v1790, 112
        %v1952 = vpop.permute.xlu0 %1951
        %1953 = vrot.lane.b32.xlu0 %v1791, 112
        %v1954 = vpop.permute.xlu0 %1953
        %1955 = vrot.lane.b32.xlu0 %v1792, 112
        %v1956 = vpop.permute.xlu0 %1955
        %v1957 = vsel %vm770, %v1950, %v1952
        %v1958 = vsel %vm770, %v1954, %v1956
        %v1965 = vsel %vm770, %v1952, %v1950
        %v1966 = vsel %vm770, %v1956, %v1954
        %v1967 = vmul.f32 %v1957, %v787
        %v1968 = vmul.f32 %v1965, %v791
        %v1969 = vmul.f32 %v1958, %v787
        %v1970 = vmul.f32 %v1966, %v791
        %v1971 = vpack.c.bf16 %v1969, %v1967
        %v1972 = vpack.c.bf16 %v1970, %v1968
        %1973 = vrot.lane.b32.xlu0 %v1789, 111
        %v1974 = vpop.permute.xlu0 %1973
        %1975 = vrot.lane.b32.xlu0 %v1790, 111
        %v1976 = vpop.permute.xlu0 %1975
        %1977 = vrot.lane.b32.xlu0 %v1791, 111
        %v1978 = vpop.permute.xlu0 %1977
        %1979 = vrot.lane.b32.xlu0 %v1792, 111
        %v1980 = vpop.permute.xlu0 %1979
        %v1981 = vsel %vm808, %v1974, %v1976
        %v1982 = vsel %vm808, %v1978, %v1980
        %v1989 = vsel %vm808, %v1976, %v1974
        %v1990 = vsel %vm808, %v1980, %v1978
        %v1991 = vmul.f32 %v1981, %v825
        %v1992 = vmul.f32 %v1989, %v829
        %v1993 = vmul.f32 %v1982, %v825
        %v1994 = vmul.f32 %v1990, %v829
        %v1995 = vpack.c.bf16 %v1993, %v1991
        %v1996 = vpack.c.bf16 %v1994, %v1992
        %1998 = vset.pattern.permute.xlu0 0
        %1999 = vperm.xlu0 %1998, %v1797
        %v2000 = vpop.permute.xlu0 %1999
        %2003 = vset.pattern.permute.xlu0 0
        %2004 = vperm.xlu0 %2003, %v1798
        %v2005 = vpop.permute.xlu0 %2004
        %v2009 = vunpack.c.l.b16 %v1794
        %v2010 = vunpack.c.h.b16 %v1794
        %v2011 = vunpack.c.l.b16 %v1795
        %v2012 = vunpack.c.h.b16 %v1795
        %v2013 = vpack.c.b16 %v2011, %v2009
        %v2014 = vpack.c.b16 %v2012, %v2010
        %v2017 = vsel %vm580, %v2014, 0
        %2019 = vmatprep.subr.bf16.mxu0 %v1826
        %2020 = vmatpush1.bf16.msra.mxu0 %v1825
        %2021 = vmatprep.subr.bf16.mxu0 %v1850
        %2022 = vmatpush1.bf16.msra.mxu0 %v1849
        %2023 = vmatprep.subr.bf16.mxu0 %v1874
        %2024 = vmatpush1.bf16.msra.mxu0 %v1873
        %2025 = vmatprep.subr.bf16.mxu0 %v1898
        %2026 = vmatpush1.bf16.msra.mxu0 %v1897
        %2027 = vmatprep.subr.bf16.mxu0 %v1900
        %2028 = vmatpush1.bf16.msra.mxu0 %v1899
        %2029 = vmatprep.subr.bf16.mxu0 %v1924
        %2030 = vmatpush1.bf16.msra.mxu0 %v1923
        %2031 = vmatprep.subr.bf16.mxu0 %v1948
        %2032 = vmatpush1.bf16.msra.mxu0 %v1947
        %2033 = vmatprep.subr.bf16.mxu0 %v1972
        %2034 = vmatpush1.bf16.msra.mxu0 %v1971
        %2035 = vmatprep.subr.bf16.mxu0 %v1996
        %2036 = vmatpush1.bf16.msra.mxu0 %v1995
        %2037 = vmatprep.subr.bf16.mxu0 0
        %2038 = vmatpush1.bf16.msra.mxu0 0
        %2039 = vmatprep.subr.bf16.mxu0 0
        %2040 = vmatpush1.bf16.msra.mxu0 0
        %2041 = vmatprep.subr.bf16.mxu0 0
        %2042 = vmatpush1.bf16.msra.mxu0 0
        %2043 = vmatprep.subr.bf16.mxu0 0
        %2044 = vmatpush1.bf16.msra.mxu0 0
        %2045 = vmatprep.subr.bf16.mxu0 0
        %2046 = vmatpush1.bf16.msra.mxu0 0
        %2047 = vmatprep.subr.bf16.mxu0 0
        %2048 = vmatpush1.bf16.msra.mxu0 0
        %2049 = vmatprep.subr.bf16.mxu0 0
        %2050 = vmatpush1.bf16.msra.mxu0 0
        %2051 = vmatprep.mubr.bf16.mxu0 %v2017
        %2052 = vmatmul.mubr.bf16.gmra.mrb[0].mxu0 %v2013
        %v2053 = vpop.f32.mrb[0].mxu0
        %v2054 = vadd.f32 %v2000, %v2053
        %v2055 = vpop.f32.mrb[0].mxu0
        %v2056 = vadd.f32 %v2000, %v2055
        %v2057 = vpop.f32.mrb[0].mxu0
        %v2058 = vadd.f32 %v2005, %v2057
        %v2059 = vpop.f32.mrb[0].mxu0
        %v2060 = vadd.f32 %v2005, %v2059
        %2061 = vdwg.mxu0
        %v2062 = vadd.f32 %v2054, %v2056
        %2063 = vadd.xlane.f32.xlu0 %v2062
        %v2064 = vpop.xlane.xlu0 %2063
        %v2065 = vadd.f32 %v2058, %v2060
        %2066 = vadd.xlane.f32.xlu0 %v2065
        %v2067 = vpop.xlane.xlu0 %2066
        %v2068 = vmul.f32 %v2064, %v1184
        %v2069 = vmul.f32 %v2067, %v1184
        %s2070 = scalar_lea.vmem %s6, 2
        %v2071 = vld [vmem:[%s2070] sm:$0x3]
        %s2072 = scalar_lea.vmem %s7, 2
        %v2073 = vld [vmem:[%s2072] sm:$0x3]
        %v2075 = vsel %vm580, %v2071, 0
        %2077 = vmatprep.subr.mxu0 0.0
        %2078 = vmatpush1.msra.mxu0 %v2068
        %2079 = vmatprep.subr.mxu0 0.0
        %2080 = vmatpush1.msra.mxu0 %v2069
        %2081 = vmatprep.subr.mxu0 0.0
        %2082 = vmatpush1.msra.mxu0 0.0
        %2083 = vmatprep.subr.mxu0 0.0
        %2084 = vmatpush1.msra.mxu0 0.0
        %2085 = vmatprep.subr.mxu0 0.0
        %2086 = vmatpush1.msra.mxu0 0.0
        %2087 = vmatprep.subr.mxu0 0.0
        %2088 = vmatpush1.msra.mxu0 0.0
        %2089 = vmatprep.subr.mxu0 0.0
        %2090 = vmatpush1.msra.mxu0 0.0
        %2091 = vmatprep.subr.mxu0 0.0
        %2092 = vmatpush1.msra.mxu0 0.0
        %2093 = vmatprep.subr.mxu0 0.0
        %2094 = vmatpush1.msra.mxu0 0.0
        %2095 = vmatprep.subr.mxu0 0.0
        %2096 = vmatpush1.msra.mxu0 0.0
        %2097 = vmatprep.subr.mxu0 0.0
        %2098 = vmatpush1.msra.mxu0 0.0
        %2099 = vmatprep.subr.mxu0 0.0
        %2100 = vmatpush1.msra.mxu0 0.0
        %2101 = vmatprep.subr.mxu0 0.0
        %2102 = vmatpush1.msra.mxu0 0.0
        %2103 = vmatprep.subr.mxu0 0.0
        %2104 = vmatpush1.msra.mxu0 0.0
        %2105 = vmatprep.subr.mxu0 0.0
        %2106 = vmatpush1.msra.mxu0 0.0
        %2107 = vmatprep.subr.mxu0 0.0
        %2108 = vmatpush1.msra.mxu0 0.0
        %2109 = vmatprep.subr.mxu0 0.0
        %2110 = vmatpush1.msra.mxu0 0.0
        %2111 = vmatprep.subr.mxu0 0.0
        %2112 = vmatpush1.msra.mxu0 0.0
        %2113 = vmatprep.subr.mxu0 0.0
        %2114 = vmatpush1.msra.mxu0 0.0
        %2115 = vmatprep.subr.mxu0 0.0
        %2116 = vmatpush1.msra.mxu0 0.0
        %2117 = vmatprep.subr.mxu0 0.0
        %2118 = vmatpush1.msra.mxu0 0.0
        %2119 = vmatprep.subr.mxu0 0.0
        %2120 = vmatpush1.msra.mxu0 0.0
        %2121 = vmatprep.subr.mxu0 0.0
        %2122 = vmatpush1.msra.mxu0 0.0
        %2123 = vmatprep.subr.mxu0 0.0
        %2124 = vmatpush1.msra.mxu0 0.0
        %2125 = vmatprep.subr.mxu0 0.0
        %2126 = vmatpush1.msra.mxu0 0.0
        %2127 = vmatprep.subr.mxu0 0.0
        %2128 = vmatpush1.msra.mxu0 0.0
        %2129 = vmatprep.subr.mxu0 0.0
        %2130 = vmatpush1.msra.mxu0 0.0
        %2131 = vmatprep.subr.mxu0 0.0
        %2132 = vmatpush1.msra.mxu0 0.0
        %2133 = vmatprep.subr.mxu0 0.0
        %2134 = vmatpush1.msra.mxu0 0.0
        %2135 = vmatprep.subr.mxu0 0.0
        %2136 = vmatpush1.msra.mxu0 0.0
        %2137 = vmatprep.subr.mxu0 0.0
        %2138 = vmatpush1.msra.mxu0 0.0
        %2139 = vmatprep.subr.mxu0 0.0
        %2140 = vmatpush1.msra.mxu0 0.0
        %2141 = vmatprep.mubr.f32.mxu0 0.0
        %2142 = vmatmul.mubr.f32.gmra.mrb[0].mxu0 %v2075
        %v2143 = vpop.f32.mrb[0].mxu0
        %v2144 = vadd.f32 %v2073, %v2143
        %v2145 = vpop.f32.mrb[0].mxu0
        %2146 = vdwg.mxu0
        %v2147 = vmax.f32 %v2144, 0.0
        %s2148 = scalar_lea.vmem %s8, 16
        %v2149 = vld [vmem:[%s2148] sm:$0xff]
        %v2150 = vld [vmem:[%s2148 + $0x8] sm:$0xff]
        %s2151 = scalar_lea.vmem %s9, 16
        %v2152 = vld [vmem:[%s2151] sm:$0xff]
        %v2153 = vld [vmem:[%s2151 + $0x8] sm:$0xff]
        %v2155 = vsel %vm1267, %v2149, 0
        %v2158 = vsel %vm1267, %v2150, 0
        %v2161 = vsel %vm1274, %v2147, 0
        %2163 = vmatprep.subr.mxu0 0.0
        %2164 = vmatpush1.msra.mxu0 %v2161
        %2165 = vmatprep.subr.mxu0 0.0
        %2166 = vmatpush1.msra.mxu0 0.0
        %2167 = vmatprep.subr.mxu0 0.0
        %2168 = vmatpush1.msra.mxu0 0.0
        %2169 = vmatprep.subr.mxu0 0.0
        %2170 = vmatpush1.msra.mxu0 0.0
        %2171 = vmatprep.subr.mxu0 0.0
        %2172 = vmatpush1.msra.mxu0 0.0
        %2173 = vmatprep.subr.mxu0 0.0
        %2174 = vmatpush1.msra.mxu0 0.0
        %2175 = vmatprep.subr.mxu0 0.0
        %2176 = vmatpush1.msra.mxu0 0.0
        %2177 = vmatprep.subr.mxu0 0.0
        %2178 = vmatpush1.msra.mxu0 0.0
        %2179 = vmatprep.subr.mxu0 0.0
        %2180 = vmatpush1.msra.mxu0 0.0
        %2181 = vmatprep.subr.mxu0 0.0
        %2182 = vmatpush1.msra.mxu0 0.0
        %2183 = vmatprep.subr.mxu0 0.0
        %2184 = vmatpush1.msra.mxu0 0.0
        %2185 = vmatprep.subr.mxu0 0.0
        %2186 = vmatpush1.msra.mxu0 0.0
        %2187 = vmatprep.subr.mxu0 0.0
        %2188 = vmatpush1.msra.mxu0 0.0
        %2189 = vmatprep.subr.mxu0 0.0
        %2190 = vmatpush1.msra.mxu0 0.0
        %2191 = vmatprep.subr.mxu0 0.0
        %2192 = vmatpush1.msra.mxu0 0.0
        %2193 = vmatprep.subr.mxu0 0.0
        %2194 = vmatpush1.msra.mxu0 0.0
        %2195 = vmatprep.subr.mxu0 0.0
        %2196 = vmatpush1.msra.mxu0 0.0
        %2197 = vmatprep.subr.mxu0 0.0
        %2198 = vmatpush1.msra.mxu0 0.0
        %2199 = vmatprep.subr.mxu0 0.0
        %2200 = vmatpush1.msra.mxu0 0.0
        %2201 = vmatprep.subr.mxu0 0.0
        %2202 = vmatpush1.msra.mxu0 0.0
        %2203 = vmatprep.subr.mxu0 0.0
        %2204 = vmatpush1.msra.mxu0 0.0
        %2205 = vmatprep.subr.mxu0 0.0
        %2206 = vmatpush1.msra.mxu0 0.0
        %2207 = vmatprep.subr.mxu0 0.0
        %2208 = vmatpush1.msra.mxu0 0.0
        %2209 = vmatprep.subr.mxu0 0.0
        %2210 = vmatpush1.msra.mxu0 0.0
        %2211 = vmatprep.subr.mxu0 0.0
        %2212 = vmatpush1.msra.mxu0 0.0
        %2213 = vmatprep.subr.mxu0 0.0
        %2214 = vmatpush1.msra.mxu0 0.0
        %2215 = vmatprep.subr.mxu0 0.0
        %2216 = vmatpush1.msra.mxu0 0.0
        %2217 = vmatprep.subr.mxu0 0.0
        %2218 = vmatpush1.msra.mxu0 0.0
        %2219 = vmatprep.subr.mxu0 0.0
        %2220 = vmatpush1.msra.mxu0 0.0
        %2221 = vmatprep.subr.mxu0 0.0
        %2222 = vmatpush1.msra.mxu0 0.0
        %2223 = vmatprep.subr.mxu0 0.0
        %2224 = vmatpush1.msra.mxu0 0.0
        %2225 = vmatprep.subr.mxu0 0.0
        %2226 = vmatpush1.msra.mxu0 0.0
        %2227 = vmatprep.mubr.f32.mxu0 0.0
        %2228 = vmatmul.mubr.f32.gmra.mrb[0].mxu0 %v2155
        %v2229 = vpop.f32.mrb[0].mxu0
        %v2230 = vadd.f32 %v2152, %v2229
        %v2231 = vpop.f32.mrb[0].mxu0
        %2232 = vmatprep.mubr.f32.mxu0 0.0
        %2233 = vmatmul.mubr.f32.gmra.mrb[0].mxu0 %v2158
        %v2234 = vpop.f32.mrb[0].mxu0
        %v2235 = vadd.f32 %v2153, %v2234
        %v2236 = vpop.f32.mrb[0].mxu0
        %2237 = vdwg.mxu0
        %v2238 = vxor.u32 %v2230, 2147483648
        %v2239 = vxor.u32 %v2235, 2147483648
        %v2240 = vmul.f32 %v2238, 1.442695
        %v2241 = vpow.pop %v2240
        %v2242 = vmul.f32 %v2239, 1.442695
        %v2243 = vpow.pop %v2242
        %v2244 = vadd.f32 %v2241, 1.0
        %v2245 = vadd.f32 %v2243, 1.0
        %v2246 = vrcp.pop %v2244
        %v2247 = vmul.f32 1.0, %v2246
        %v2248 = vrcp.pop %v2245
        %v2249 = vmul.f32 1.0, %v2248
        %2251 = vset.pattern.permute.xlu0 0
        %2252 = vperm.xlu0 %2251, %v2247
        %v2253 = vpop.permute.xlu0 %2252
        %2256 = vset.pattern.permute.xlu0 0
        %2257 = vperm.xlu0 %2256, %v2249
        %v2258 = vpop.permute.xlu0 %2257
        %v2260 = vmul.f32 %v2054, %v2253
        %v2261 = vmul.f32 %v2056, %v2253
        %v2262 = vmul.f32 %v2058, %v2258
        %v2263 = vmul.f32 %v2060, %v2258
        %s2264 = scalar_lea.vmem %s10, 2
        %v2265 = vld [vmem:[%s2264] sm:$0x3]
        %s2266 = scalar_lea.vmem %s11, 2
        %v2267 = vld [vmem:[%s2266] sm:$0x3]
        %2269 = vset.pattern.permute.xlu0 0
        %2270 = vperm.xlu0 %2269, %v2267
        %v2271 = vpop.permute.xlu0 %2270
        %v2274 = vsel %vm580, %v2265, 0
        %2276 = vmatprep.subr.mxu0 %v2261
        %2277 = vmatpush1.msra.mxu0 %v2260
        %2278 = vmatprep.subr.mxu0 %v2263
        %2279 = vmatpush1.msra.mxu0 %v2262
        %2280 = vmatprep.subr.mxu0 0.0
        %2281 = vmatpush1.msra.mxu0 0.0
        %2282 = vmatprep.subr.mxu0 0.0
        %2283 = vmatpush1.msra.mxu0 0.0
        %2284 = vmatprep.subr.mxu0 0.0
        %2285 = vmatpush1.msra.mxu0 0.0
        %2286 = vmatprep.subr.mxu0 0.0
        %2287 = vmatpush1.msra.mxu0 0.0
        %2288 = vmatprep.subr.mxu0 0.0
        %2289 = vmatpush1.msra.mxu0 0.0
        %2290 = vmatprep.subr.mxu0 0.0
        %2291 = vmatpush1.msra.mxu0 0.0
        %2292 = vmatprep.subr.mxu0 0.0
        %2293 = vmatpush1.msra.mxu0 0.0
        %2294 = vmatprep.subr.mxu0 0.0
        %2295 = vmatpush1.msra.mxu0 0.0
        %2296 = vmatprep.subr.mxu0 0.0
        %2297 = vmatpush1.msra.mxu0 0.0
        %2298 = vmatprep.subr.mxu0 0.0
        %2299 = vmatpush1.msra.mxu0 0.0
        %2300 = vmatprep.subr.mxu0 0.0
        %2301 = vmatpush1.msra.mxu0 0.0
        %2302 = vmatprep.subr.mxu0 0.0
        %2303 = vmatpush1.msra.mxu0 0.0
        %2304 = vmatprep.subr.mxu0 0.0
        %2305 = vmatpush1.msra.mxu0 0.0
        %2306 = vmatprep.subr.mxu0 0.0
        %2307 = vmatpush1.msra.mxu0 0.0
        %2308 = vmatprep.subr.mxu0 0.0
        %2309 = vmatpush1.msra.mxu0 0.0
        %2310 = vmatprep.subr.mxu0 0.0
        %2311 = vmatpush1.msra.mxu0 0.0
        %2312 = vmatprep.subr.mxu0 0.0
        %2313 = vmatpush1.msra.mxu0 0.0
        %2314 = vmatprep.subr.mxu0 0.0
        %2315 = vmatpush1.msra.mxu0 0.0
        %2316 = vmatprep.subr.mxu0 0.0
        %2317 = vmatpush1.msra.mxu0 0.0
        %2318 = vmatprep.subr.mxu0 0.0
        %2319 = vmatpush1.msra.mxu0 0.0
        %2320 = vmatprep.subr.mxu0 0.0
        %2321 = vmatpush1.msra.mxu0 0.0
        %2322 = vmatprep.subr.mxu0 0.0
        %2323 = vmatpush1.msra.mxu0 0.0
        %2324 = vmatprep.subr.mxu0 0.0
        %2325 = vmatpush1.msra.mxu0 0.0
        %2326 = vmatprep.subr.mxu0 0.0
        %2327 = vmatpush1.msra.mxu0 0.0
        %2328 = vmatprep.subr.mxu0 0.0
        %2329 = vmatpush1.msra.mxu0 0.0
        %2330 = vmatprep.subr.mxu0 0.0
        %2331 = vmatpush1.msra.mxu0 0.0
        %2332 = vmatprep.subr.mxu0 0.0
        %2333 = vmatpush1.msra.mxu0 0.0
        %2334 = vmatprep.subr.mxu0 0.0
        %2335 = vmatpush1.msra.mxu0 0.0
        %2336 = vmatprep.subr.mxu0 0.0
        %2337 = vmatpush1.msra.mxu0 0.0
        %2338 = vmatprep.subr.mxu0 0.0
        %2339 = vmatpush1.msra.mxu0 0.0
        %2340 = vmatprep.mubr.f32.mxu0 0.0
        %2341 = vmatmul.mubr.f32.gmra.mrb[0].mxu0 %v2274
        %v2342 = vpop.f32.mrb[0].mxu0
        %v2343 = vadd.f32 %v2271, %v2342
        %v2344 = vpop.f32.mrb[0].mxu0
        %v2345 = vadd.f32 %v2271, %v2344
        %2346 = vdwg.mxu0
        %v2347 = vmax.f32 %v2343, 0.0
        %v2348 = vmax.f32 %v2345, 0.0
        %s2349 = scalar_lea.vmem %s12, 2
        %v2350 = vld [vmem:[%s2349] sm:$0x3]
        %2352 = vset.pattern.permute.xlu0 0
        %2353 = vperm.xlu0 %2352, %v2350
        %v2354 = vpop.permute.xlu0 %2353
        %v2356 = vmul.f32 %v2347, %v2354
        %v2357 = vmul.f32 %v2348, %v2354
        %v2358 = vsel %vm1274, %v2356, 0.0
        %v2359 = vrot.slane %v2358, 4
        %v2360 = vadd.f32 %v2358, %v2359
        %v2361 = vrot.slane %v2360, 2
        %v2362 = vadd.f32 %v2360, %v2361
        %v2363 = vrot.slane %v2362, 1
        %v2364 = vadd.f32 %v2362, %v2363
        %v2365 = vsel %vm1274, %v2357, 0.0
        %v2366 = vrot.slane %v2365, 4
        %v2367 = vadd.f32 %v2365, %v2366
        %v2368 = vrot.slane %v2367, 2
        %v2369 = vadd.f32 %v2367, %v2368
        %v2370 = vrot.slane %v2369, 1
        %v2371 = vadd.f32 %v2369, %v2370
        %s2372 = scalar_lea.vmem %s13, 1
        %v2373 = vld [vmem:[%s2372] sm:$0x1]
        %2375 = vset.pattern.permute.xlu0 0
        %2376 = vperm.xlu0 %2375, %v2373
        %v2377 = vpop.permute.xlu0 %2376
        %v2379 = vlaneseq
        %v2380 = vshrl.u32 %v2379, 7
        %v2381 = vsub.s32 0, %v2380
        %v2382 = vrot.slane %v2377, %v2381
        %v2383 = vadd.f32 %v2364, %v2382
        %v2384 = vadd.f32 %v2371, %v2382
        %v2385 = vxor.u32 %v2383, 2147483648
        %v2386 = vxor.u32 %v2384, 2147483648
        %v2387 = vmul.f32 %v2385, 1.442695
        %v2388 = vpow.pop %v2387
        %v2389 = vmul.f32 %v2386, 1.442695
        %v2390 = vpow.pop %v2389
        %v2391 = vadd.f32 %v2388, 1.0
        %v2392 = vadd.f32 %v2390, 1.0
        %v2393 = vrcp.pop %v2391
        %v2394 = vmul.f32 1.0, %v2393
        %v2395 = vrcp.pop %v2392
        %v2396 = vmul.f32 1.0, %v2395
        %v2397 = vmul.f32 %v2260, %v2394
        %v2398 = vmul.f32 %v2261, %v2396
        %v2399 = vmul.f32 %v2262, %v2394
        %v2400 = vmul.f32 %v2263, %v2396
        %v2401 = vadd.f32 %v2397, %v1512
        %v2402 = vadd.f32 %v2398, %v1513
        %v2403 = vadd.f32 %v2399, %v1514
        %v2404 = vadd.f32 %v2400, %v1515
        %v2405 = vld [vmem:[%s14] sm:$0xff]
        %v2406 = vld [vmem:[%s14 + $0x8] sm:$0xff]
        %v2407 = vld [vmem:[%s15] sm:$0xff]
        %v2408 = vld [vmem:[%s15 + $0x8] sm:$0xff]
        %2411 = vrot.lane.b32.xlu0 %v2402, 17
        %v2412 = vpop.permute.xlu0 %2411
        %2413 = vrot.lane.b32.xlu0 %v2404, 17
        %v2414 = vpop.permute.xlu0 %2413
        %2419 = vrot.lane.b32.xlu0 %v2401, 17
        %v2420 = vpop.permute.xlu0 %2419
        %2421 = vrot.lane.b32.xlu0 %v2403, 17
        %v2422 = vpop.permute.xlu0 %2421
        %v2423 = vsel %vm543, %v2420, %v2412
        %v2424 = vsel %vm543, %v2422, %v2414
        %v2429 = vsel %vm543, %v2412, %v2420
        %v2430 = vsel %vm543, %v2414, %v2422
        %v2431 = vmul.f32 %v2429, %v557
        %v2432 = vmul.f32 %v2423, %v561
        %v2433 = vmul.f32 %v2430, %v557
        %v2434 = vmul.f32 %v2424, %v561
        %v2435 = vpack.c.bf16 %v2433, %v2431
        %v2436 = vpack.c.bf16 %v2434, %v2432
        %2437 = vrot.lane.b32.xlu0 %v2402, 16
        %v2438 = vpop.permute.xlu0 %2437
        %2439 = vrot.lane.b32.xlu0 %v2404, 16
        %v2440 = vpop.permute.xlu0 %2439
        %2443 = vrot.lane.b32.xlu0 %v2401, 16
        %v2444 = vpop.permute.xlu0 %2443
        %2445 = vrot.lane.b32.xlu0 %v2403, 16
        %v2446 = vpop.permute.xlu0 %2445
        %v2447 = vsel %vm580, %v2444, %v2438
        %v2448 = vsel %vm580, %v2446, %v2440
        %v2453 = vsel %vm580, %v2438, %v2444
        %v2454 = vsel %vm580, %v2440, %v2446
        %v2455 = vmul.f32 %v2453, %v595
        %v2456 = vmul.f32 %v2447, %v599
        %v2457 = vmul.f32 %v2454, %v595
        %v2458 = vmul.f32 %v2448, %v599
        %v2459 = vpack.c.bf16 %v2457, %v2455
        %v2460 = vpack.c.bf16 %v2458, %v2456
        %2461 = vrot.lane.b32.xlu0 %v2402, 15
        %v2462 = vpop.permute.xlu0 %2461
        %2463 = vrot.lane.b32.xlu0 %v2404, 15
        %v2464 = vpop.permute.xlu0 %2463
        %2467 = vrot.lane.b32.xlu0 %v2401, 15
        %v2468 = vpop.permute.xlu0 %2467
        %2469 = vrot.lane.b32.xlu0 %v2403, 15
        %v2470 = vpop.permute.xlu0 %2469
        %v2471 = vsel %vm618, %v2468, %v2462
        %v2472 = vsel %vm618, %v2470, %v2464
        %v2477 = vsel %vm618, %v2462, %v2468
        %v2478 = vsel %vm618, %v2464, %v2470
        %v2479 = vmul.f32 %v2477, %v633
        %v2480 = vmul.f32 %v2471, %v637
        %v2481 = vmul.f32 %v2478, %v633
        %v2482 = vmul.f32 %v2472, %v637
        %v2483 = vpack.c.bf16 %v2481, %v2479
        %v2484 = vpack.c.bf16 %v2482, %v2480
        %2485 = vrot.lane.b32.xlu0 %v2402, 1
        %v2486 = vpop.permute.xlu0 %2485
        %2487 = vrot.lane.b32.xlu0 %v2404, 1
        %v2488 = vpop.permute.xlu0 %2487
        %2491 = vrot.lane.b32.xlu0 %v2401, 1
        %v2492 = vpop.permute.xlu0 %2491
        %2493 = vrot.lane.b32.xlu0 %v2403, 1
        %v2494 = vpop.permute.xlu0 %2493
        %v2495 = vsel %vm656, %v2492, %v2486
        %v2496 = vsel %vm656, %v2494, %v2488
        %v2501 = vsel %vm656, %v2486, %v2492
        %v2502 = vsel %vm656, %v2488, %v2494
        %v2503 = vmul.f32 %v2501, %v671
        %v2504 = vmul.f32 %v2495, %v675
        %v2505 = vmul.f32 %v2502, %v671
        %v2506 = vmul.f32 %v2496, %v675
        %v2507 = vpack.c.bf16 %v2505, %v2503
        %v2508 = vpack.c.bf16 %v2506, %v2504
        %v2509 = vpack.c.bf16 %v2403, %v2401
        %v2510 = vpack.c.bf16 %v2404, %v2402
        %2511 = vrot.lane.b32.xlu0 %v2401, 127
        %v2512 = vpop.permute.xlu0 %2511
        %2513 = vrot.lane.b32.xlu0 %v2402, 127
        %v2514 = vpop.permute.xlu0 %2513
        %2515 = vrot.lane.b32.xlu0 %v2403, 127
        %v2516 = vpop.permute.xlu0 %2515
        %2517 = vrot.lane.b32.xlu0 %v2404, 127
        %v2518 = vpop.permute.xlu0 %2517
        %v2519 = vsel %vm694, %v2512, %v2514
        %v2520 = vsel %vm694, %v2516, %v2518
        %v2527 = vsel %vm694, %v2514, %v2512
        %v2528 = vsel %vm694, %v2518, %v2516
        %v2529 = vmul.f32 %v2519, %v711
        %v2530 = vmul.f32 %v2527, %v715
        %v2531 = vmul.f32 %v2520, %v711
        %v2532 = vmul.f32 %v2528, %v715
        %v2533 = vpack.c.bf16 %v2531, %v2529
        %v2534 = vpack.c.bf16 %v2532, %v2530
        %2535 = vrot.lane.b32.xlu0 %v2401, 113
        %v2536 = vpop.permute.xlu0 %2535
        %2537 = vrot.lane.b32.xlu0 %v2402, 113
        %v2538 = vpop.permute.xlu0 %2537
        %2539 = vrot.lane.b32.xlu0 %v2403, 113
        %v2540 = vpop.permute.xlu0 %2539
        %2541 = vrot.lane.b32.xlu0 %v2404, 113
        %v2542 = vpop.permute.xlu0 %2541
        %v2543 = vsel %vm732, %v2536, %v2538
        %v2544 = vsel %vm732, %v2540, %v2542
        %v2551 = vsel %vm732, %v2538, %v2536
        %v2552 = vsel %vm732, %v2542, %v2540
        %v2553 = vmul.f32 %v2543, %v749
        %v2554 = vmul.f32 %v2551, %v753
        %v2555 = vmul.f32 %v2544, %v749
        %v2556 = vmul.f32 %v2552, %v753
        %v2557 = vpack.c.bf16 %v2555, %v2553
        %v2558 = vpack.c.bf16 %v2556, %v2554
        %2559 = vrot.lane.b32.xlu0 %v2401, 112
        %v2560 = vpop.permute.xlu0 %2559
        %2561 = vrot.lane.b32.xlu0 %v2402, 112
        %v2562 = vpop.permute.xlu0 %2561
        %2563 = vrot.lane.b32.xlu0 %v2403, 112
        %v2564 = vpop.permute.xlu0 %2563
        %2565 = vrot.lane.b32.xlu0 %v2404, 112
        %v2566 = vpop.permute.xlu0 %2565
        %v2567 = vsel %vm770, %v2560, %v2562
        %v2568 = vsel %vm770, %v2564, %v2566
        %v2575 = vsel %vm770, %v2562, %v2560
        %v2576 = vsel %vm770, %v2566, %v2564
        %v2577 = vmul.f32 %v2567, %v787
        %v2578 = vmul.f32 %v2575, %v791
        %v2579 = vmul.f32 %v2568, %v787
        %v2580 = vmul.f32 %v2576, %v791
        %v2581 = vpack.c.bf16 %v2579, %v2577
        %v2582 = vpack.c.bf16 %v2580, %v2578
        %2583 = vrot.lane.b32.xlu0 %v2401, 111
        %v2584 = vpop.permute.xlu0 %2583
        %2585 = vrot.lane.b32.xlu0 %v2402, 111
        %v2586 = vpop.permute.xlu0 %2585
        %2587 = vrot.lane.b32.xlu0 %v2403, 111
        %v2588 = vpop.permute.xlu0 %2587
        %2589 = vrot.lane.b32.xlu0 %v2404, 111
        %v2590 = vpop.permute.xlu0 %2589
        %v2591 = vsel %vm808, %v2584, %v2586
        %v2592 = vsel %vm808, %v2588, %v2590
        %v2599 = vsel %vm808, %v2586, %v2584
        %v2600 = vsel %vm808, %v2590, %v2588
        %v2601 = vmul.f32 %v2591, %v825
        %v2602 = vmul.f32 %v2599, %v829
        %v2603 = vmul.f32 %v2592, %v825
        %v2604 = vmul.f32 %v2600, %v829
        %v2605 = vpack.c.bf16 %v2603, %v2601
        %v2606 = vpack.c.bf16 %v2604, %v2602
        %2608 = vset.pattern.permute.xlu0 0
        %2609 = vperm.xlu0 %2608, %v2407
        %v2610 = vpop.permute.xlu0 %2609
        %2613 = vset.pattern.permute.xlu0 0
        %2614 = vperm.xlu0 %2613, %v2408
        %v2615 = vpop.permute.xlu0 %2614
        %v2619 = vunpack.c.l.b16 %v2405
        %v2620 = vunpack.c.h.b16 %v2405
        %v2621 = vunpack.c.l.b16 %v2406
        %v2622 = vunpack.c.h.b16 %v2406
        %v2623 = vpack.c.b16 %v2621, %v2619
        %v2624 = vpack.c.b16 %v2622, %v2620
        %v2627 = vsel %vm580, %v2624, 0
        %2629 = vmatprep.subr.bf16.mxu0 %v2436
        %2630 = vmatpush1.bf16.msra.mxu0 %v2435
        %2631 = vmatprep.subr.bf16.mxu0 %v2460
        %2632 = vmatpush1.bf16.msra.mxu0 %v2459
        %2633 = vmatprep.subr.bf16.mxu0 %v2484
        %2634 = vmatpush1.bf16.msra.mxu0 %v2483
        %2635 = vmatprep.subr.bf16.mxu0 %v2508
        %2636 = vmatpush1.bf16.msra.mxu0 %v2507
        %2637 = vmatprep.subr.bf16.mxu0 %v2510
        %2638 = vmatpush1.bf16.msra.mxu0 %v2509
        %2639 = vmatprep.subr.bf16.mxu0 %v2534
        %2640 = vmatpush1.bf16.msra.mxu0 %v2533
        %2641 = vmatprep.subr.bf16.mxu0 %v2558
        %2642 = vmatpush1.bf16.msra.mxu0 %v2557
        %2643 = vmatprep.subr.bf16.mxu0 %v2582
        %2644 = vmatpush1.bf16.msra.mxu0 %v2581
        %2645 = vmatprep.subr.bf16.mxu0 %v2606
        %2646 = vmatpush1.bf16.msra.mxu0 %v2605
        %2647 = vmatprep.subr.bf16.mxu0 0
        %2648 = vmatpush1.bf16.msra.mxu0 0
        %2649 = vmatprep.subr.bf16.mxu0 0
        %2650 = vmatpush1.bf16.msra.mxu0 0
        %2651 = vmatprep.subr.bf16.mxu0 0
        %2652 = vmatpush1.bf16.msra.mxu0 0
        %2653 = vmatprep.subr.bf16.mxu0 0
        %2654 = vmatpush1.bf16.msra.mxu0 0
        %2655 = vmatprep.subr.bf16.mxu0 0
        %2656 = vmatpush1.bf16.msra.mxu0 0
        %2657 = vmatprep.subr.bf16.mxu0 0
        %2658 = vmatpush1.bf16.msra.mxu0 0
        %2659 = vmatprep.subr.bf16.mxu0 0
        %2660 = vmatpush1.bf16.msra.mxu0 0
        %2661 = vmatprep.mubr.bf16.mxu0 %v2627
        %2662 = vmatmul.mubr.bf16.gmra.mrb[0].mxu0 %v2623
        %v2663 = vpop.f32.mrb[0].mxu0
        %v2664 = vadd.f32 %v2610, %v2663
        %v2665 = vpop.f32.mrb[0].mxu0
        %v2666 = vadd.f32 %v2610, %v2665
        %v2667 = vpop.f32.mrb[0].mxu0
        %v2668 = vadd.f32 %v2615, %v2667
        %v2669 = vpop.f32.mrb[0].mxu0
        %v2670 = vadd.f32 %v2615, %v2669
        %2671 = vdwg.mxu0
        %v2672 = vadd.f32 %v2664, %v521
        %v2673 = vadd.f32 %v2666, %v522
        %v2674 = vadd.f32 %v2668, %v523
        %v2675 = vadd.f32 %v2670, %v524
        %2676 = vst [vmem:[%s514] sm:$0xff] %v2672
        %2677 = vst [vmem:[%s514 + $0x8] sm:$0xff] %v2673
        %2678 = vst [vmem:[%s514 + $0x10] sm:$0xff] %v2674
        %2679 = vst [vmem:[%s514 + $0x18] sm:$0xff] %v2675
        %s2680 = sand.u32 %s379, 1
        %s2681 = scalar_lea.sflag [#allocation3], %s2680
        %s2682 = sand.u32 %s379, 1
        %s2683 = smul.addr %s2682, 32
        %s2684 = scalar_lea.vmem [#allocation2], %s2683
        // Predicated region
        $region85: #{tpu_custom_call.1} parent=83 // pred_check
          %p2685 = pneg %p389
        $region86: #{tpu_custom_call.1} parent=83 // pred_check_branch
          %2687 = sbr.rel (%p2685) target = $region88
        $region87: #{tpu_custom_call.1} parent=83 // pred_region
          %s2689 = ssub.s32 512, 512
          %2690 = vsyncadd %s2681, %s2689
          %s2691 = smul.addr %s30, 4
          %s2692 = smul.addr %s2691, 128
          %s2693 = scalar_lea.hbm %s16, %s2692
          %s2694 = sshll.u32 %s2684, 4
          %s2695 = int_to_ptr.vmem [resolvable:$true] %s2694
          %2700 = dma.vmem_to_hbm [thread:$0]  %s2695, 512, %s2693, %s2681, 256, 256, 16
        $region88: #{tpu_custom_call.1} parent=83 // pred_fallthru
          _
      $region84: #{tpu_custom_call.1} parent=5 // pred_fallthru
        _
      %p2701 = scmp.le.s32.totalorder 2, %s25
      // Predicated region
      $region89: #{tpu_custom_call.1} parent=5 // pred_check
        %p2702 = pneg %p2701
      $region90: #{tpu_custom_call.1} parent=5 // pred_check_branch
        %2704 = sbr.rel (%p2702) target = $region92
      $region91: #{tpu_custom_call.1} parent=5 // pred_region
        %s2705 = ssub.s32 %s25, 2
        // Predicated region
        $region93: #{tpu_custom_call.1} parent=91 // pred_check
          %p2706 = pneg %p395
        $region94: #{tpu_custom_call.1} parent=91 // pred_check_branch
          %2708 = sbr.rel (%p2706) target = $region96
        $region95: #{tpu_custom_call.1} parent=91 // pred_region
          %s2709 = sand.u32 %s380, 1
          %s2710 = scalar_lea.sflag [#allocation3], %s2709
          %s2711 = sand.u32 %s380, 1
          %s2712 = smul.addr %s2711, 32
          %s2713 = scalar_lea.vmem [#allocation2], %s2712
          %2714 = dma.done %s2710, 512
        $region96: #{tpu_custom_call.1} parent=91 // pred_fallthru
          _
      $region92: #{tpu_custom_call.1} parent=5 // pred_fallthru
        _
    $region6: #{tpu_custom_call.1} parent=1 // loop_footer
      %s29 = sadd.s32 1, %s25
    $region7: #{tpu_custom_call.1} parent=1 // loop_footer_branch
      %24 = sbr.rel target = $region3
    $region8: #{tpu_custom_call.1} parent=1 // loop_exit
      _
    %2715 = vsyncpa [#allocation3], 1
    %s2716 = scalar_lea.sflag [#allocation3], 1
    %2717 = vsyncpa %s2716, 1

</llo_original>
